<compile_context>
chip_gen: v6e
topology: v6e:2x2x1
jax: 0.10.0
libtpu: 0.0.40
codegen_flags: <defaults>
</compile_context>

<pallas_src>
import functools

import jax
import jax.numpy as jnp
import numpy as np
from jax import lax
from jax.experimental import pallas as pl
from jax.experimental.pallas import tpu as pltpu

MXU_DTYPE = jnp.bfloat16   # MXU input dtype (accumulation stays f32)
ACT_DTYPE = jnp.bfloat16   # inter-kernel activation dtype (halves HBM bytes)


# --------------------------------------------------------------------------
# Kernel 1: fused 3x3 conv (+bias, +ReLU), one image per grid step.
# Input is pre-flattened to (1, (H+3)*(W+2), Cin); each tap (kh, kw) is a
# contiguous row-slice of that slab, so the kernel needs no in-kernel reshapes.
# Output rows laid out as (H, W+2) flattened; the 2 junk columns per row are
# sliced off in HBM glue.
# --------------------------------------------------------------------------
def _conv3x3_kernel(h, w, cin, cout, relu, x_ref, w_ref, b_ref, o_ref):
    wp2 = w + 2
    rows = h * wp2
    xflat = x_ref[0].astype(MXU_DTYPE)                        # (Lp, cin)
    acc = None
    for kh in range(3):
        for kw in range(3):
            off = kh * wp2 + kw
            patch = xflat[off:off + rows, :]                  # (h*(w+2), cin)
            tap = jnp.dot(patch, w_ref[kh * 3 + kw],
                          preferred_element_type=jnp.float32)  # (h*(w+2), cout)
            acc = tap if acc is None else acc + tap
    acc = acc + b_ref[...]                                    # (1, cout) broadcast
    if relu:
        acc = jnp.maximum(acc, 0.0)
    o_ref[...] = acc[None].astype(o_ref.dtype)


def conv3x3(x, w, b, relu=True):
    """x: (N,H,W,Cin), w: (3,3,Cin,Cout) HWIO, b: (Cout,). padding=1, stride=1."""
    n, h, wd, cin = x.shape
    cout = w.shape[-1]
    # Pad H by (1, 2) and W by (1, 1): the extra bottom row gives the flattened
    # tap slices enough slack; flatten spatial dims so every tap is a contiguous
    # row range of the slab (no in-kernel reshape needed).
    xp = jnp.pad(x.astype(ACT_DTYPE), ((0, 0), (1, 2), (1, 1), (0, 0)))
    lp = (h + 3) * (wd + 2)
    xflat = xp.reshape(n, lp, cin)
    w9 = w.reshape(9, cin, cout).astype(MXU_DTYPE)
    b2 = b.reshape(1, cout).astype(jnp.float32)

    out_rows = h * (wd + 2)
    flops = 2 * n * h * wd * 9 * cin * cout
    bytes_acc = (xflat.size * xflat.dtype.itemsize + w9.size * 2 + b2.size * 4
                 + n * out_rows * cout * 2)

    # TODO(synk): production-scale H*W*Cin needs a second row-tile grid axis with
    # a manually DMA'd halo slab; full-image blocks are fine at these sizes.
    out = pl.pallas_call(
        functools.partial(_conv3x3_kernel, h, wd, cin, cout, relu),
        out_shape=jax.ShapeDtypeStruct((n, out_rows, cout), ACT_DTYPE),
        grid=(n,),
        in_specs=[
            pl.BlockSpec((1, lp, cin), lambda i: (i, 0, 0)),
            pl.BlockSpec((9, cin, cout), lambda i: (0, 0, 0)),
            pl.BlockSpec((1, cout), lambda i: (0, 0)),
        ],
        out_specs=pl.BlockSpec((1, out_rows, cout), lambda i: (i, 0, 0)),
        compiler_params=pltpu.CompilerParams(dimension_semantics=("parallel",)),
        cost_estimate=pl.CostEstimate(flops=int(flops), transcendentals=0,
                                      bytes_accessed=int(bytes_acc)),
    )(xflat, w9, b2)
    # drop the 2 junk columns per row
    return out.reshape(n, h, wd + 2, cout)[:, :, :wd, :]


# --------------------------------------------------------------------------
# Kernel 2: fused bilinear 2x upsample (align_corners=True), one image/step.
# --------------------------------------------------------------------------
def upsample_matrix(n_in, n_out):
    """Row-interpolation matrix matching nn.UpsamplingBilinear2d (align_corners=True)."""
    if n_in == 1:
        return jnp.ones((n_out, 1), jnp.float32)
    src = jnp.arange(n_out, dtype=jnp.float32) * (n_in - 1) / (n_out - 1)
    i0 = jnp.clip(jnp.floor(src).astype(jnp.int32), 0, n_in - 2)
    frac = src - i0.astype(jnp.float32)
    u = jnp.zeros((n_out, n_in), jnp.float32)
    u = u.at[jnp.arange(n_out), i0].add(1.0 - frac)
    u = u.at[jnp.arange(n_out), i0 + 1].add(frac)
    return u


def _upsample_kernel(x_ref, uh_ref, e_ref, o_ref):
    x = x_ref[0].astype(jnp.float32)                                   # (h, w*c)
    yh = jnp.dot(uh_ref[...], x, preferred_element_type=jnp.float32)   # (2h, w*c)
    z = jnp.dot(yh, e_ref[...], preferred_element_type=jnp.float32)    # (2h, 2w*c)
    o_ref[...] = z[None].astype(o_ref.dtype)


def upsample2x(x):
    """2x bilinear upsample; both directions fused into one kernel, no transposes."""
    n, h, w, c = x.shape
    uh = upsample_matrix(h, 2 * h)                              # (2h, h)
    uw = upsample_matrix(w, 2 * w)                              # (2w, w)
    # Width interpolation as a right-matmul with (Uw^T kron I_C): keeps the NHWC
    # flattening intact and makes the output lane dim (2*w*c) dense.
    # TODO(synk): for production-scale w*c the width pass should be a separate
    # per-row lerp kernel instead of the kron matrix.
    e = jnp.kron(uw.T, jnp.eye(c, dtype=jnp.float32))           # (w*c, 2*w*c)
    x2 = x.astype(ACT_DTYPE).reshape(n, h, w * c)

    flops = 2 * n * (2 * h * h * w * c + 2 * h * w * c * 2 * w * c)
    bytes_acc = x2.size * 2 + uh.size * 4 + e.size * 4 + n * 2 * h * 2 * w * c * 2
    out = pl.pallas_call(
        _upsample_kernel,
        out_shape=jax.ShapeDtypeStruct((n, 2 * h, 2 * w * c), ACT_DTYPE),
        grid=(n,),
        in_specs=[
            pl.BlockSpec((1, h, w * c), lambda i: (i, 0, 0)),
            pl.BlockSpec((2 * h, h), lambda i: (0, 0)),
            pl.BlockSpec((w * c, 2 * w * c), lambda i: (0, 0)),
        ],
        out_specs=pl.BlockSpec((1, 2 * h, 2 * w * c), lambda i: (i, 0, 0)),
        compiler_params=pltpu.CompilerParams(dimension_semantics=("parallel",)),
        cost_estimate=pl.CostEstimate(flops=int(flops), transcendentals=0,
                                      bytes_accessed=int(bytes_acc)),
    )(x2, uh, e)
    return out.reshape(n, 2 * h, 2 * w, c)


# --------------------------------------------------------------------------
# Kernel 3: 1x1 conv (conv_reps), computed transposed so the output last dim is
# the big M axis (lane-dense stores).  M is cdiv-tiled and zero-padded.
# --------------------------------------------------------------------------
def _conv_reps_kernel(a_ref, wt_ref, b_ref, o_ref):
    acc = lax.dot_general(wt_ref[...], a_ref[...],
                          dimension_numbers=(((1,), (1,)), ((), ())),
                          preferred_element_type=jnp.float32)          # (r, tm)
    o_ref[...] = (acc + b_ref[...]).astype(o_ref.dtype)


def conv_reps_1x1_t(x, wr, br, tm=256):
    """Returns pixel_reps^T of shape (R, N*H*W)."""
    n, h, w, c = x.shape
    r = wr.shape[-1]
    m = n * h * w
    a = x.astype(MXU_DTYPE).reshape(m, c)
    mp = pl.cdiv(m, tm) * tm
    if mp != m:
        a = jnp.pad(a, ((0, mp - m), (0, 0)))
    wt = wr.T.astype(MXU_DTYPE)                                 # (r, c)
    b2 = br.reshape(r, 1).astype(jnp.float32)

    flops = 2 * mp * c * r
    bytes_acc = a.size * 2 + wt.size * 2 + b2.size * 4 + r * mp * 2
    out = pl.pallas_call(
        _conv_reps_kernel,
        out_shape=jax.ShapeDtypeStruct((r, mp), ACT_DTYPE),
        grid=(mp // tm,),
        in_specs=[
            pl.BlockSpec((tm, c), lambda i: (i, 0)),
            pl.BlockSpec((r, c), lambda i: (0, 0)),
            pl.BlockSpec((r, 1), lambda i: (0, 0)),
        ],
        out_specs=pl.BlockSpec((r, tm), lambda i: (0, i)),
        compiler_params=pltpu.CompilerParams(dimension_semantics=("parallel",)),
        cost_estimate=pl.CostEstimate(flops=int(flops), transcendentals=0,
                                      bytes_accessed=int(bytes_acc)),
    )(a, wt, b2)
    return out[:, :m]


# --------------------------------------------------------------------------
# Kernel 4: batched mask matmul.  obj rows are zero-padded to a common count so
# every image is one grid step; output is (N, K2p, H*W) -> lane-dense.
# --------------------------------------------------------------------------
def _mask_kernel(obj_ref, pix_ref, o_ref):
    m = jnp.dot(obj_ref[0], pix_ref[...], preferred_element_type=jnp.float32)
    o_ref[...] = m[None]


def batched_mask_matmul(pixel_t, obj_all, hw):
    """pixel_t: (R, N*hw), obj_all: (N, K2p, R) -> (N, K2p, hw) float32."""
    n, k2p, r = obj_all.shape
    flops = 2 * n * k2p * r * hw
    bytes_acc = pixel_t.size * 2 + obj_all.size * 2 + n * k2p * hw * 4
    return pl.pallas_call(
        _mask_kernel,
        out_shape=jax.ShapeDtypeStruct((n, k2p, hw), jnp.float32),
        grid=(n,),
        in_specs=[
            pl.BlockSpec((1, k2p, r), lambda i: (i, 0, 0)),
            pl.BlockSpec((r, hw), lambda i: (0, i)),
        ],
        out_specs=pl.BlockSpec((1, k2p, hw), lambda i: (i, 0, 0)),
        compiler_params=pltpu.CompilerParams(dimension_semantics=("parallel",)),
        cost_estimate=pl.CostEstimate(flops=int(flops), transcendentals=0,
                                      bytes_accessed=int(bytes_acc)),
    )(obj_all, pixel_t)


# --------------------------------------------------------------------------
# Forward pass (mirrors RdsMaskHead.forward)
# --------------------------------------------------------------------------
def rds_mask_head_forward(feats, obj_reps, img_metas, params, rep_channels):
    feats = [f.astype(ACT_DTYPE) for f in feats]
    # level 0 lateral: single 3x3 conv + relu
    w0, b0 = params["lateral"][0][0]
    x = conv3x3(feats[0], w0, b0, relu=True)
    # levels 1..end_level: i * (conv3x3 + relu + 2x bilinear upsample), then sum
    for lvl in range(1, len(feats)):
        f = feats[lvl]
        for j in range(lvl):
            wj, bj = params["lateral"][lvl][j]
            f = conv3x3(f, wj, bj, relu=True)
            f = upsample2x(f)
        x = x + f
    # final convs (num_convs blocks); empty by default
    for wf, bf in params["final"]:
        x = conv3x3(x, wf, bf, relu=True)
        x = upsample2x(x)
    # conv_reps: 1x1 conv (no activation), computed transposed -> (R, N*H*W)
    wr, br = params["conv_reps"]
    n, h, w, _ = x.shape
    hw = h * w
    pixel_t = conv_reps_1x1_t(x, wr, br)

    # batched mask matmul: pad all object reps to a common (sublane-aligned) count
    k2_list = [2 * int(o.shape[0]) for o in obj_reps]
    k2p = max(8, -(-max(k2_list + [1]) // 8) * 8)
    obj_rows = []
    for o, k2 in zip(obj_reps, k2_list):
        rows = o.reshape(-1, rep_channels).astype(MXU_DTYPE)
        rows = jnp.pad(rows, ((0, k2p - k2), (0, 0)))
        obj_rows.append(rows)
    obj_all = jnp.stack(obj_rows, axis=0)                       # (N, K2p, R)
    masks_all = batched_mask_matmul(pixel_t, obj_all, hw)       # (N, K2p, H*W) f32

    pred_masks_list = []
    for i in range(n):
        meta = img_metas[i]
        if obj_reps[i].shape[0] == 0:
            # Replicates the torch code verbatim: pixel_rep.size()[:2] in NCHW is (C, H).
            pred_masks_list.append(jnp.zeros((0, rep_channels, h, 2), jnp.float32))
            continue
        k2 = k2_list[i]
        pm = masks_all[i, :k2, :].reshape(k2, h, w)             # (2K, H, W)
        assert pm.shape[1] / meta["stack_shape"][0] == pm.shape[2] / meta["stack_shape"][1]
        scale = meta["stack_shape"][0] // pm.shape[1]
        dh = meta["pad_shape"][0] // scale
        dw = meta["pad_shape"][1] // scale
        pm = pm[:, :dh, :dw]
        pm = pm.reshape(-1, 2, dh, dw).transpose(0, 2, 3, 1)    # (K, dh, dw, 2)
        pred_masks_list.append(pm)
    return pred_masks_list


# --------------------------------------------------------------------------
# Pure-JAX f32 reference (for correctness check)
# --------------------------------------------------------------------------
def ref_forward(feats, obj_reps, img_metas, params, rep_channels):
    def conv_ref(x, w, b, relu):
        y = lax.conv_general_dilated(
            x, w, (1, 1), "SAME", dimension_numbers=("NHWC", "HWIO", "NHWC"))
        y = y + b
        return jnp.maximum(y, 0.0) if relu else y

    def up_ref(x):
        nn_, h, wd, c = x.shape
        uh = upsample_matrix(h, 2 * h)
        uw = upsample_matrix(wd, 2 * wd)
        y = jnp.einsum("oh,nhwc->nowc", uh, x)
        y = jnp.einsum("pw,nowc->nopc", uw, y)
        return y

    w0, b0 = params["lateral"][0][0]
    x = conv_ref(feats[0], w0, b0, True)
    for lvl in range(1, len(feats)):
        f = feats[lvl]
        for j in range(lvl):
            wj, bj = params["lateral"][lvl][j]
            f = up_ref(conv_ref(f, wj, bj, True))
        x = x + f
    for wf, bf in params["final"]:
        x = up_ref(conv_ref(x, wf, bf, True))
    wr, br = params["conv_reps"]
    pixel_reps = jnp.einsum("nhwc,cd->nhwd", x, wr) + br
    out = []
    for i in range(x.shape[0]):
        if obj_reps[i].shape[0] == 0:
            out.append(jnp.zeros((0, rep_channels, x.shape[1], 2), jnp.float32))
            continue
        obj = obj_reps[i].reshape(-1, rep_channels)
        pm = jnp.einsum("hwr,kr->khw", pixel_reps[i], obj)
        scale = img_metas[i]["stack_shape"][0] // pm.shape[1]
        dh = img_metas[i]["pad_shape"][0] // scale
        dw = img_metas[i]["pad_shape"][1] // scale
        pm = pm[:, :dh, :dw]
        out.append(pm.reshape(-1, 2, dh, dw).transpose(0, 2, 3, 1))
    return out


# --------------------------------------------------------------------------
# Parameter init + example run
# --------------------------------------------------------------------------
def xavier_uniform(key, shape):
    if len(shape) == 4:  # HWIO
        fan_in = shape[0] * shape[1] * shape[2]
        fan_out = shape[0] * shape[1] * shape[3]
    else:
        fan_in, fan_out = shape
    bound = float(np.sqrt(6.0 / (fan_in + fan_out)))
    return jax.random.uniform(key, shape, jnp.float32, -bound, bound)


if __name__ == "__main__":
    NUM_INS = 4          # feature levels
    END_LEVEL = NUM_INS - 1
    NUM_CONVS = 0        # default: no final convs
    IN_CH = 8
    OUT_CH = 8
    REP_CH = 8
    BATCH = 2
    BASE = 16            # level-0 spatial size

    key = jax.random.PRNGKey(0)
    keys = iter(jax.random.split(key, 64))

    # ---- parameters ----
    lateral = []
    lateral.append([(xavier_uniform(next(keys), (3, 3, IN_CH, OUT_CH)),
                     jnp.zeros((OUT_CH,), jnp.float32))])
    for lvl in range(1, END_LEVEL + 1):
        convs = []
        cin = IN_CH
        for _ in range(lvl):
            convs.append((xavier_uniform(next(keys), (3, 3, cin, OUT_CH)),
                          jnp.zeros((OUT_CH,), jnp.float32)))
            cin = OUT_CH
        lateral.append(convs)
    final = []
    for _ in range(NUM_CONVS):
        final.append((xavier_uniform(next(keys), (3, 3, OUT_CH, OUT_CH)),
                      jnp.zeros((OUT_CH,), jnp.float32)))
    conv_reps_w = 0.01 * jax.random.normal(next(keys), (OUT_CH, REP_CH), jnp.float32)
    conv_reps_b = jnp.zeros((REP_CH,), jnp.float32)
    params = {"lateral": lateral, "final": final,
              "conv_reps": (conv_reps_w, conv_reps_b)}

    # ---- inputs (NHWC) ----
    feats = []
    for lvl in range(NUM_INS):
        s = BASE >> lvl
        feats.append(jax.random.normal(next(keys), (BATCH, s, s, IN_CH), jnp.float32))
    obj_reps = [
        jax.random.normal(next(keys), (3, 2 * REP_CH), jnp.float32),  # 3 objects
        jax.random.normal(next(keys), (2, 2 * REP_CH), jnp.float32),  # 2 objects
    ]
    img_metas = [
        {"stack_shape": (64, 64, 3), "pad_shape": (60, 56, 3)},
        {"stack_shape": (64, 64, 3), "pad_shape": (64, 48, 3)},
    ]

    # ---- run Pallas forward ----
    preds = rds_mask_head_forward(feats, obj_reps, img_metas, params, REP_CH)
    preds = jax.block_until_ready(preds)

    # ---- check vs pure-JAX f32 reference (tolerance accounts for bf16 MXU inputs) ----
    refs = ref_forward(feats, obj_reps, img_metas, params, REP_CH)
    for p, r in zip(preds, refs):
        assert p.shape == r.shape, (p.shape, r.shape)
        np.testing.assert_allclose(np.asarray(p), np.asarray(r), rtol=3e-2, atol=3e-2)

    # TODO(synk): loss()/crop()/get_masks() (training / test-time post-processing
    # with data-dependent sort-based OHEM) are not part of forward() and not ported.
    print("KERNEL_OK")
</pallas_src>

<mosaic_0001>
module attributes {stable_mosaic.version = 11 : i64} {
  func.func @_conv3x3_kernel(%arg0: i32, %arg1: memref<1x342x8xbf16, #tpu.memory_space<vmem>>, %arg2: memref<9x8x8xbf16, #tpu.memory_space<vmem>>, %arg3: memref<1x8xf32, #tpu.memory_space<vmem>>, %arg4: memref<1x288x8xbf16, #tpu.memory_space<vmem>>) attributes {dimension_semantics = [#tpu.dimension_semantics<parallel>], iteration_bounds = array<i64: 2>, scalar_prefetch = 0 : i64, scratch_operands = 0 : i64, tpu.core_type = #tpu.core_type<tc>, window_params = [{transform_indices = @transform_0, window_bounds = array<i64: 1, 342, 8>}, {pipeline_mode = #tpu.pipeline_mode<synchronous>, transform_indices = @transform_1, window_bounds = array<i64: 9, 8, 8>}, {pipeline_mode = #tpu.pipeline_mode<synchronous>, transform_indices = @transform_2, window_bounds = array<i64: 1, 8>}, {transform_indices = @transform_3, window_bounds = array<i64: 1, 288, 8>}]} {
    %c0 = arith.constant 0 : index
    %c0_0 = arith.constant 0 : index
    %c0_1 = arith.constant 0 : index
    %0 = vector.load %arg1[%c0, %c0_0, %c0_1] : memref<1x342x8xbf16, #tpu.memory_space<vmem>>, vector<1x342x8xbf16>
    %1 = vector.shape_cast %0 : vector<1x342x8xbf16> to vector<342x8xbf16>
    %2 = vector.extract_strided_slice %1 {offsets = [0, 0], sizes = [288, 8], strides = [1, 1]} : vector<342x8xbf16> to vector<288x8xbf16>
    %c0_2 = arith.constant 0 : index
    %c0_3 = arith.constant 0 : index
    %c0_4 = arith.constant 0 : index
    %3 = vector.load %arg2[%c0_2, %c0_3, %c0_4] : memref<9x8x8xbf16, #tpu.memory_space<vmem>>, vector<1x8x8xbf16>
    %4 = vector.shape_cast %3 : vector<1x8x8xbf16> to vector<8x8xbf16>
    %cst = arith.constant dense<0.000000e+00> : vector<288x8xf32>
    %5 = tpu.matmul %2, %4, %cst {dimension_numbers = #tpu.dot_dimension_numbers<[1], [0], [0], [1], [0, 0, 1, 1], [], []>} : vector<288x8xbf16>, vector<8x8xbf16>, vector<288x8xf32> -> vector<288x8xf32>
    %6 = vector.extract_strided_slice %1 {offsets = [1, 0], sizes = [288, 8], strides = [1, 1]} : vector<342x8xbf16> to vector<288x8xbf16>
    %c1 = arith.constant 1 : index
    %c0_5 = arith.constant 0 : index
    %c0_6 = arith.constant 0 : index
    %7 = vector.load %arg2[%c1, %c0_5, %c0_6] : memref<9x8x8xbf16, #tpu.memory_space<vmem>>, vector<1x8x8xbf16>
    %8 = vector.shape_cast %7 : vector<1x8x8xbf16> to vector<8x8xbf16>
    %cst_7 = arith.constant dense<0.000000e+00> : vector<288x8xf32>
    %9 = tpu.matmul %6, %8, %cst_7 {dimension_numbers = #tpu.dot_dimension_numbers<[1], [0], [0], [1], [0, 0, 1, 1], [], []>} : vector<288x8xbf16>, vector<8x8xbf16>, vector<288x8xf32> -> vector<288x8xf32>
    %10 = arith.addf %5, %9 : vector<288x8xf32>
    %11 = vector.extract_strided_slice %1 {offsets = [2, 0], sizes = [288, 8], strides = [1, 1]} : vector<342x8xbf16> to vector<288x8xbf16>
    %c2 = arith.constant 2 : index
    %c0_8 = arith.constant 0 : index
    %c0_9 = arith.constant 0 : index
    %12 = vector.load %arg2[%c2, %c0_8, %c0_9] : memref<9x8x8xbf16, #tpu.memory_space<vmem>>, vector<1x8x8xbf16>
    %13 = vector.shape_cast %12 : vector<1x8x8xbf16> to vector<8x8xbf16>
    %cst_10 = arith.constant dense<0.000000e+00> : vector<288x8xf32>
    %14 = tpu.matmul %11, %13, %cst_10 {dimension_numbers = #tpu.dot_dimension_numbers<[1], [0], [0], [1], [0, 0, 1, 1], [], []>} : vector<288x8xbf16>, vector<8x8xbf16>, vector<288x8xf32> -> vector<288x8xf32>
    %15 = arith.addf %10, %14 : vector<288x8xf32>
    %16 = vector.extract_strided_slice %1 {offsets = [18, 0], sizes = [288, 8], strides = [1, 1]} : vector<342x8xbf16> to vector<288x8xbf16>
    %c3 = arith.constant 3 : index
    %c0_11 = arith.constant 0 : index
    %c0_12 = arith.constant 0 : index
    %17 = vector.load %arg2[%c3, %c0_11, %c0_12] : memref<9x8x8xbf16, #tpu.memory_space<vmem>>, vector<1x8x8xbf16>
    %18 = vector.shape_cast %17 : vector<1x8x8xbf16> to vector<8x8xbf16>
    %cst_13 = arith.constant dense<0.000000e+00> : vector<288x8xf32>
    %19 = tpu.matmul %16, %18, %cst_13 {dimension_numbers = #tpu.dot_dimension_numbers<[1], [0], [0], [1], [0, 0, 1, 1], [], []>} : vector<288x8xbf16>, vector<8x8xbf16>, vector<288x8xf32> -> vector<288x8xf32>
    %20 = arith.addf %15, %19 : vector<288x8xf32>
    %21 = vector.extract_strided_slice %1 {offsets = [19, 0], sizes = [288, 8], strides = [1, 1]} : vector<342x8xbf16> to vector<288x8xbf16>
    %c4 = arith.constant 4 : index
    %c0_14 = arith.constant 0 : index
    %c0_15 = arith.constant 0 : index
    %22 = vector.load %arg2[%c4, %c0_14, %c0_15] : memref<9x8x8xbf16, #tpu.memory_space<vmem>>, vector<1x8x8xbf16>
    %23 = vector.shape_cast %22 : vector<1x8x8xbf16> to vector<8x8xbf16>
    %cst_16 = arith.constant dense<0.000000e+00> : vector<288x8xf32>
    %24 = tpu.matmul %21, %23, %cst_16 {dimension_numbers = #tpu.dot_dimension_numbers<[1], [0], [0], [1], [0, 0, 1, 1], [], []>} : vector<288x8xbf16>, vector<8x8xbf16>, vector<288x8xf32> -> vector<288x8xf32>
    %25 = arith.addf %20, %24 : vector<288x8xf32>
    %26 = vector.extract_strided_slice %1 {offsets = [20, 0], sizes = [288, 8], strides = [1, 1]} : vector<342x8xbf16> to vector<288x8xbf16>
    %c5 = arith.constant 5 : index
    %c0_17 = arith.constant 0 : index
    %c0_18 = arith.constant 0 : index
    %27 = vector.load %arg2[%c5, %c0_17, %c0_18] : memref<9x8x8xbf16, #tpu.memory_space<vmem>>, vector<1x8x8xbf16>
    %28 = vector.shape_cast %27 : vector<1x8x8xbf16> to vector<8x8xbf16>
    %cst_19 = arith.constant dense<0.000000e+00> : vector<288x8xf32>
    %29 = tpu.matmul %26, %28, %cst_19 {dimension_numbers = #tpu.dot_dimension_numbers<[1], [0], [0], [1], [0, 0, 1, 1], [], []>} : vector<288x8xbf16>, vector<8x8xbf16>, vector<288x8xf32> -> vector<288x8xf32>
    %30 = arith.addf %25, %29 : vector<288x8xf32>
    %31 = vector.extract_strided_slice %1 {offsets = [36, 0], sizes = [288, 8], strides = [1, 1]} : vector<342x8xbf16> to vector<288x8xbf16>
    %c6 = arith.constant 6 : index
    %c0_20 = arith.constant 0 : index
    %c0_21 = arith.constant 0 : index
    %32 = vector.load %arg2[%c6, %c0_20, %c0_21] : memref<9x8x8xbf16, #tpu.memory_space<vmem>>, vector<1x8x8xbf16>
    %33 = vector.shape_cast %32 : vector<1x8x8xbf16> to vector<8x8xbf16>
    %cst_22 = arith.constant dense<0.000000e+00> : vector<288x8xf32>
    %34 = tpu.matmul %31, %33, %cst_22 {dimension_numbers = #tpu.dot_dimension_numbers<[1], [0], [0], [1], [0, 0, 1, 1], [], []>} : vector<288x8xbf16>, vector<8x8xbf16>, vector<288x8xf32> -> vector<288x8xf32>
    %35 = arith.addf %30, %34 : vector<288x8xf32>
    %36 = vector.extract_strided_slice %1 {offsets = [37, 0], sizes = [288, 8], strides = [1, 1]} : vector<342x8xbf16> to vector<288x8xbf16>
    %c7 = arith.constant 7 : index
    %c0_23 = arith.constant 0 : index
    %c0_24 = arith.constant 0 : index
    %37 = vector.load %arg2[%c7, %c0_23, %c0_24] : memref<9x8x8xbf16, #tpu.memory_space<vmem>>, vector<1x8x8xbf16>
    %38 = vector.shape_cast %37 : vector<1x8x8xbf16> to vector<8x8xbf16>
    %cst_25 = arith.constant dense<0.000000e+00> : vector<288x8xf32>
    %39 = tpu.matmul %36, %38, %cst_25 {dimension_numbers = #tpu.dot_dimension_numbers<[1], [0], [0], [1], [0, 0, 1, 1], [], []>} : vector<288x8xbf16>, vector<8x8xbf16>, vector<288x8xf32> -> vector<288x8xf32>
    %40 = arith.addf %35, %39 : vector<288x8xf32>
    %41 = vector.extract_strided_slice %1 {offsets = [38, 0], sizes = [288, 8], strides = [1, 1]} : vector<342x8xbf16> to vector<288x8xbf16>
    %c8 = arith.constant 8 : index
    %c0_26 = arith.constant 0 : index
    %c0_27 = arith.constant 0 : index
    %42 = vector.load %arg2[%c8, %c0_26, %c0_27] : memref<9x8x8xbf16, #tpu.memory_space<vmem>>, vector<1x8x8xbf16>
    %43 = vector.shape_cast %42 : vector<1x8x8xbf16> to vector<8x8xbf16>
    %cst_28 = arith.constant dense<0.000000e+00> : vector<288x8xf32>
    %44 = tpu.matmul %41, %43, %cst_28 {dimension_numbers = #tpu.dot_dimension_numbers<[1], [0], [0], [1], [0, 0, 1, 1], [], []>} : vector<288x8xbf16>, vector<8x8xbf16>, vector<288x8xf32> -> vector<288x8xf32>
    %45 = arith.addf %40, %44 : vector<288x8xf32>
    %c0_29 = arith.constant 0 : index
    %c0_30 = arith.constant 0 : index
    %46 = vector.load %arg3[%c0_29, %c0_30] : memref<1x8xf32, #tpu.memory_space<vmem>>, vector<1x8xf32>
    %47 = vector.broadcast %46 : vector<1x8xf32> to vector<288x8xf32>
    %48 = arith.addf %45, %47 : vector<288x8xf32>
    %cst_31 = arith.constant 0.000000e+00 : f32
    %49 = vector.broadcast %cst_31 : f32 to vector<288x8xf32>
    %50 = arith.maximumf %48, %49 : vector<288x8xf32>
    %51 = vector.shape_cast %50 : vector<288x8xf32> to vector<1x288x8xf32>
    %52 = arith.truncf %51 : vector<1x288x8xf32> to vector<1x288x8xbf16>
    %c0_32 = arith.constant 0 : index
    %c0_33 = arith.constant 0 : index
    %c0_34 = arith.constant 0 : index
    %53 = vector.load %arg4[%c0_32, %c0_33, %c0_34] : memref<1x288x8xbf16, #tpu.memory_space<vmem>>, vector<1x288x8xbf16>
    tpu.vector_store %arg4[%c0_32, %c0_33, %c0_34], %52 {strides = array<i32>} : memref<1x288x8xbf16, #tpu.memory_space<vmem>>, vector<1x288x8xbf16>,
    return
  }
  func.func @transform_0(%arg0: i32) -> (i32, i32, i32) {
    %c0_i32 = arith.constant 0 : i32
    %c0_i32_0 = arith.constant 0 : i32
    %c0_i32_1 = arith.constant 0 : i32
    return %arg0, %c0_i32, %c0_i32_0 : i32, i32, i32
  }
  func.func @transform_1(%arg0: i32) -> (i32, i32, i32) {
    %c0_i32 = arith.constant 0 : i32
    %c0_i32_0 = arith.constant 0 : i32
    %c0_i32_1 = arith.constant 0 : i32
    %c0_i32_2 = arith.constant 0 : i32
    return %c0_i32, %c0_i32_0, %c0_i32_1 : i32, i32, i32
  }
  func.func @transform_2(%arg0: i32) -> (i32, i32) {
    %c0_i32 = arith.constant 0 : i32
    %c0_i32_0 = arith.constant 0 : i32
    %c0_i32_1 = arith.constant 0 : i32
    return %c0_i32, %c0_i32_0 : i32, i32
  }
  func.func @transform_3(%arg0: i32) -> (i32, i32, i32) {
    %c0_i32 = arith.constant 0 : i32
    %c0_i32_0 = arith.constant 0 : i32
    %c0_i32_1 = arith.constant 0 : i32
    return %arg0, %c0_i32, %c0_i32_0 : i32, i32, i32
  }
}

</mosaic_0001>

<llo_original>
// kernel: tpu_custom_call.1
$region0: #{tpu_custom_call.1}
  #allocation0 [shape = 'u32[]', space=smem, size = 0x4, offset = 0x4, fixed_abs, tag = 'smem constant byte address 0x4 - core index']
  #allocation1 [shape = 'u32[144,128]{1,0:T(1,128)}', space=vmem, size = 0x12000, scoped, tag = 'internal scratch']
  %s0 = inlined_call_operand.vmem [shape: bf16[2,342,8], index: 0, kind: input, shape index: {}]
  %s1 = inlined_call_operand.vmem [shape: bf16[9,8,8], index: 1, kind: input, shape index: {}]
  %s2 = inlined_call_operand.vmem [shape: f32[1,8], index: 2, kind: input, shape index: {}]
  %s3 = inlined_call_operand.vmem [shape: bf16[2,288,8], index: 3, kind: output, shape index: {}]
  %s4 = sld [smem:[#allocation0]]
  $region45: #{tpu_custom_call.1} parent=0
    _
  %s6 = ssub.s32 1, %s4
  %s7 = scalar_select 0, %s6, %s4
  loop: start=0, step=1, limit=4
  $region2: #{tpu_custom_call.1} parent=0 // loop_pre_header
    _
  $region3: #{tpu_custom_call.1} parent=0 // loop_header
    %s9 = sphi 0, %s13
    %p10 = scmp.ge.s32.totalorder %s9, 4
    %s19 = sphi 0, %s21
    %s22 = sphi 0, %s19
    %s23 = sphi 0, %s22
    %s39 = sphi 0, %s23
    %s43 = sphi 0, %s43
    %s45 = sphi 0, %s43
    %s46 = sphi 0, %s45
    %s60 = sphi 0, %s46
    %s64 = sphi 0, %s64
    %s66 = sphi 0, %s64
    %s67 = sphi 0, %s66
    %s81 = sphi 0, %s67
    %s87 = sphi 0, %s89
    %s90 = sphi 0, %s87
    %s91 = sphi 0, %s90
    %s107 = sphi 0, %s91
  $region4: #{tpu_custom_call.1} parent=0 // loop_header_branch
    %12 = sbr.rel (%p10) target = $region8
  $region5: #{tpu_custom_call.1} parent=0 // loop_body
    %s14 = ssub.s32 %s9, 1
    %s15 = ssub.s32 %s9, 2
    %s16 = sadd.s32 %s9, 1
    %s17 = ssub.s32 %s9, %s16
    %p18 = scmp.eq.s32.totalorder %s17, 0
    %s20 = sadd.s32 %s19, 1
    %s21 = scalar_select %p18, %s19, %s20
    %p24 = pneg %p18
    %p25 = scmp.eq.s32.totalorder %s9, 1
    %p26 = por %p24, %p25
    %p27 = scmp.ne.s32.totalorder %s19, %s22
    %p28 = scmp.eq.s32.totalorder %s9, 0
    %p29 = por %p27, %p28
    %p30 = scmp.ne.s32.totalorder %s19, %s22
    %p31 = scmp.eq.s32.totalorder %s14, 1
    %p32 = por %p30, %p31
    %p33 = scmp.ne.s32.totalorder %s22, %s23
    %p34 = scmp.eq.s32.totalorder %s14, 0
    %p35 = por %p33, %p34
    %p36 = scmp.ne.s32.totalorder %s22, %s23
    %p37 = scmp.eq.s32.totalorder %s15, 1
    %p38 = por %p36, %p37
    %p40 = scmp.ne.s32.totalorder %s23, %s39
    %p41 = scmp.eq.s32.totalorder %s15, 0
    %p42 = por %p40, %p41
    %s44 = sadd.s32 %s43, 1
    %p47 = scmp.eq.s32.totalorder %s9, 1
    %p48 = scmp.ne.s32.totalorder %s43, %s45
    %p49 = scmp.eq.s32.totalorder %s9, 0
    %p50 = por %p48, %p49
    %p51 = scmp.ne.s32.totalorder %s43, %s45
    %p52 = scmp.eq.s32.totalorder %s14, 1
    %p53 = por %p51, %p52
    %p54 = scmp.ne.s32.totalorder %s45, %s46
    %p55 = scmp.eq.s32.totalorder %s14, 0
    %p56 = por %p54, %p55
    %p57 = scmp.ne.s32.totalorder %s45, %s46
    %p58 = scmp.eq.s32.totalorder %s15, 1
    %p59 = por %p57, %p58
    %p61 = scmp.ne.s32.totalorder %s46, %s60
    %p62 = scmp.eq.s32.totalorder %s15, 0
    %p63 = por %p61, %p62
    %s65 = sadd.s32 %s64, 1
    %p68 = scmp.eq.s32.totalorder %s9, 1
    %p69 = scmp.ne.s32.totalorder %s64, %s66
    %p70 = scmp.eq.s32.totalorder %s9, 0
    %p71 = por %p69, %p70
    %p72 = scmp.ne.s32.totalorder %s64, %s66
    %p73 = scmp.eq.s32.totalorder %s14, 1
    %p74 = por %p72, %p73
    %p75 = scmp.ne.s32.totalorder %s66, %s67
    %p76 = scmp.eq.s32.totalorder %s14, 0
    %p77 = por %p75, %p76
    %p78 = scmp.ne.s32.totalorder %s66, %s67
    %p79 = scmp.eq.s32.totalorder %s15, 1
    %p80 = por %p78, %p79
    %p82 = scmp.ne.s32.totalorder %s67, %s81
    %p83 = scmp.eq.s32.totalorder %s15, 0
    %p84 = por %p82, %p83
    %s85 = ssub.s32 %s9, %s16
    %p86 = scmp.eq.s32.totalorder %s85, 0
    %s88 = sadd.s32 %s87, 1
    %s89 = scalar_select %p86, %s87, %s88
    %p92 = pneg %p86
    %p93 = scmp.eq.s32.totalorder %s9, 1
    %p94 = por %p92, %p93
    %p95 = scmp.ne.s32.totalorder %s87, %s90
    %p96 = scmp.eq.s32.totalorder %s9, 0
    %p97 = por %p95, %p96
    %p98 = scmp.ne.s32.totalorder %s87, %s90
    %p99 = scmp.eq.s32.totalorder %s14, 1
    %p100 = por %p98, %p99
    %p101 = scmp.ne.s32.totalorder %s90, %s91
    %p102 = scmp.eq.s32.totalorder %s14, 0
    %p103 = por %p101, %p102
    %p104 = scmp.ne.s32.totalorder %s90, %s91
    %p105 = scmp.eq.s32.totalorder %s15, 1
    %p106 = por %p104, %p105
    %p108 = scmp.ne.s32.totalorder %s91, %s107
    %p109 = scmp.eq.s32.totalorder %s15, 0
    %p110 = por %p108, %p109
    %p111 = scmp.le.s32.totalorder 1, %s9
    %p112 = scmp.lt.s32.totalorder %s9, 3
    %p113 = pnand %p111, %p112
    %p114 = pneg %p113
    // Predicated region
    $region9: #{tpu_custom_call.1} parent=5 // pred_check
      _
    $region10: #{tpu_custom_call.1} parent=5 // pred_check_branch
      %116 = sbr.rel (%p113) target = $region12
    $region11: #{tpu_custom_call.1} parent=5 // pred_region
      %s117 = ssub.s32 %s9, 1
      // Predicated region
      $region13: #{tpu_custom_call.1} parent=11 // pred_check
        %p118 = pneg %p56
      $region14: #{tpu_custom_call.1} parent=11 // pred_check_branch
        %120 = sbr.rel (%p118) target = $region16
      $region15: #{tpu_custom_call.1} parent=11 // pred_region
        _
      $region16: #{tpu_custom_call.1} parent=11 // pred_fallthru
        _
      // Predicated region
      $region17: #{tpu_custom_call.1} parent=11 // pred_check
        %p121 = pneg %p77
      $region18: #{tpu_custom_call.1} parent=11 // pred_check_branch
        %123 = sbr.rel (%p121) target = $region20
      $region19: #{tpu_custom_call.1} parent=11 // pred_region
        _
      $region20: #{tpu_custom_call.1} parent=11 // pred_fallthru
        _
    $region12: #{tpu_custom_call.1} parent=5 // pred_fallthru
      _
    %p124 = scmp.lt.s32.totalorder %s9, 2
    // Predicated region
    $region21: #{tpu_custom_call.1} parent=5 // pred_check
      %p125 = pneg %p124
    $region22: #{tpu_custom_call.1} parent=5 // pred_check_branch
      %127 = sbr.rel (%p125) target = $region24
    $region23: #{tpu_custom_call.1} parent=5 // pred_region
      // Predicated region
      $region25: #{tpu_custom_call.1} parent=23 // pred_check
        %p128 = pneg %p29
      $region26: #{tpu_custom_call.1} parent=23 // pred_check_branch
        %130 = sbr.rel (%p128) target = $region28
      $region27: #{tpu_custom_call.1} parent=23 // pred_region
        %p131 = scmp.lt.s32.totalorder %s9, 1
        %s132 = scalar_select %p131, %s9, 1
        %s133 = smul.addr %s132, 43
        %s134 = smul.addr %s133, 4
        %s135 = scalar_lea.vmem %s0, %s134
      $region28: #{tpu_custom_call.1} parent=23 // pred_fallthru
        _
    $region24: #{tpu_custom_call.1} parent=5 // pred_fallthru
      _
    %p136 = scmp.le.s32.totalorder 1, %s9
    %p137 = scmp.lt.s32.totalorder %s9, 3
    %p138 = pnand %p136, %p137
    %p139 = pneg %p138
    // Predicated region
    $region29: #{tpu_custom_call.1} parent=5 // pred_check
      _
    $region30: #{tpu_custom_call.1} parent=5 // pred_check_branch
      %141 = sbr.rel (%p138) target = $region32
    $region31: #{tpu_custom_call.1} parent=5 // pred_region
      %s142 = ssub.s32 %s9, 1
      %p143 = scmp.lt.s32.totalorder %s14, 1
      %s144 = scalar_select %p143, %s14, 1
      %s145 = smul.addr %s144, 43
      %s146 = smul.addr %s145, 4
      %s147 = scalar_lea.vmem %s0, %s146
      %p148 = pneg %p35
      %p149 = pneg %p32
      %p150 = pneg %p56
      %p151 = pneg %p53
      %p152 = pneg %p77
      %p153 = pneg %p74
      %p154 = pneg %p103
      %p155 = pneg %p100
      %p156 = scmp.lt.s32.totalorder %s14, 1
      %s157 = scalar_select %p156, %s14, 1
      %s158 = smul.addr %s157, 36
      %s159 = smul.addr %s158, 4
      %s160 = scalar_lea.vmem %s3, %s159
      %p161 = scmp.lt.s32.totalorder %s14, 1
      %s162 = scalar_select %p161, %s14, 1
      %s163 = smul.addr %s162, 43
      %s164 = smul.addr %s163, 4
      %s165 = scalar_lea.vmem %s0, %s164
      %p166 = scmp.lt.s32.totalorder %s14, 1
      %s167 = scalar_select %p166, %s14, 1
      %s168 = smul.addr %s167, 36
      %s169 = smul.addr %s168, 4
      %s170 = scalar_lea.vmem %s3, %s169
      %v172 = vld [vmem:[%s165] sm:$0xf]
      %v173 = vld [vmem:[%s165 + $0x4] sm:$0xf]
      %v174 = vld [vmem:[%s165 + $0x8] sm:$0xf]
      %v175 = vld [vmem:[%s165 + $0xc] sm:$0xf]
      %v176 = vld [vmem:[%s165 + $0x10] sm:$0xf]
      %v177 = vld [vmem:[%s165 + $0x14] sm:$0xf]
      %v178 = vld [vmem:[%s165 + $0x18] sm:$0xf]
      %v179 = vld [vmem:[%s165 + $0x1c] sm:$0xf]
      %v180 = vld [vmem:[%s165 + $0x20] sm:$0xf]
      %v181 = vld [vmem:[%s165 + $0x24] sm:$0xf]
      %v182 = vld [vmem:[%s165 + $0x28] sm:$0xf]
      %v183 = vld [vmem:[%s165 + $0x2c] sm:$0xf]
      %v184 = vld [vmem:[%s165 + $0x30] sm:$0xf]
      %v185 = vld [vmem:[%s165 + $0x34] sm:$0xf]
      %v186 = vld [vmem:[%s165 + $0x38] sm:$0xf]
      %v187 = vld [vmem:[%s165 + $0x3c] sm:$0xf]
      %v188 = vld [vmem:[%s165 + $0x40] sm:$0xf]
      %v189 = vld [vmem:[%s165 + $0x44] sm:$0xf]
      %v190 = vld [vmem:[%s165 + $0x48] sm:$0xf]
      %v191 = vld [vmem:[%s165 + $0x4c] sm:$0xf]
      %v192 = vld [vmem:[%s165 + $0x50] sm:$0xf]
      %v193 = vld [vmem:[%s165 + $0x54] sm:$0xf]
      %v194 = vld [vmem:[%s165 + $0x58] sm:$0xf]
      %v195 = vld [vmem:[%s165 + $0x5c] sm:$0xf]
      %v196 = vld [vmem:[%s165 + $0x60] sm:$0xf]
      %v197 = vld [vmem:[%s165 + $0x64] sm:$0xf]
      %v198 = vld [vmem:[%s165 + $0x68] sm:$0xf]
      %v199 = vld [vmem:[%s165 + $0x6c] sm:$0xf]
      %v200 = vld [vmem:[%s165 + $0x70] sm:$0xf]
      %v201 = vld [vmem:[%s165 + $0x74] sm:$0xf]
      %v202 = vld [vmem:[%s165 + $0x78] sm:$0xf]
      %v203 = vld [vmem:[%s165 + $0x7c] sm:$0xf]
      %v204 = vld [vmem:[%s165 + $0x80] sm:$0xf]
      %v205 = vld [vmem:[%s165 + $0x84] sm:$0xf]
      %v206 = vld [vmem:[%s165 + $0x88] sm:$0xf]
      %v207 = vld [vmem:[%s165 + $0x8c] sm:$0xf]
      %v208 = vld [vmem:[%s165 + $0x90] sm:$0xf]
      %v209 = vld [vmem:[%s165 + $0x94] sm:$0xf]
      %v210 = vld [vmem:[%s165 + $0x98] sm:$0xf]
      %v211 = vld [vmem:[%s165 + $0x9c] sm:$0xf]
      %v212 = vld [vmem:[%s165 + $0xa0] sm:$0xf]
      %v213 = vld [vmem:[%s1] sm:$0xf]
      %s214 = scalar_lea.vmem %s1, 4
      %v215 = vld [vmem:[%s214] sm:$0xf]
      %v253 = vunpack.c.l.b16 %v172
      %v254 = vunpack.c.l.b16 %v173
      %v255 = vunpack.c.l.b16 %v174
      %v256 = vunpack.c.l.b16 %v175
      %v257 = vunpack.c.l.b16 %v176
      %v258 = vunpack.c.l.b16 %v177
      %v259 = vunpack.c.l.b16 %v178
      %v260 = vunpack.c.l.b16 %v179
      %v261 = vunpack.c.l.b16 %v180
      %v262 = vunpack.c.l.b16 %v181
      %v263 = vunpack.c.l.b16 %v182
      %v264 = vunpack.c.l.b16 %v183
      %v265 = vunpack.c.l.b16 %v184
      %v266 = vunpack.c.l.b16 %v185
      %v267 = vunpack.c.l.b16 %v186
      %v268 = vunpack.c.l.b16 %v187
      %v269 = vunpack.c.l.b16 %v188
      %v270 = vunpack.c.l.b16 %v189
      %v271 = vunpack.c.l.b16 %v190
      %v272 = vunpack.c.l.b16 %v191
      %v273 = vunpack.c.l.b16 %v192
      %v274 = vunpack.c.l.b16 %v193
      %v275 = vunpack.c.l.b16 %v194
      %v276 = vunpack.c.l.b16 %v195
      %v277 = vunpack.c.l.b16 %v196
      %v278 = vunpack.c.l.b16 %v197
      %v279 = vunpack.c.l.b16 %v198
      %v280 = vunpack.c.l.b16 %v199
      %v281 = vunpack.c.l.b16 %v200
      %v282 = vunpack.c.l.b16 %v201
      %v283 = vunpack.c.l.b16 %v202
      %v284 = vunpack.c.l.b16 %v203
      %v285 = vunpack.c.l.b16 %v204
      %v286 = vunpack.c.l.b16 %v205
      %v287 = vunpack.c.l.b16 %v206
      %v288 = vunpack.c.l.b16 %v207
      %v289 = vunpack.c.l.b16 %v208
      %v290 = vpack.c.b16 %v254, %v253
      %v291 = vpack.c.b16 %v256, %v255
      %v292 = vpack.c.b16 %v258, %v257
      %v293 = vpack.c.b16 %v260, %v259
      %v294 = vpack.c.b16 %v262, %v261
      %v295 = vpack.c.b16 %v264, %v263
      %v296 = vpack.c.b16 %v266, %v265
      %v297 = vpack.c.b16 %v268, %v267
      %v298 = vpack.c.b16 %v270, %v269
      %v299 = vpack.c.b16 %v272, %v271
      %v300 = vpack.c.b16 %v274, %v273
      %v301 = vpack.c.b16 %v276, %v275
      %v302 = vpack.c.b16 %v278, %v277
      %v303 = vpack.c.b16 %v280, %v279
      %v304 = vpack.c.b16 %v282, %v281
      %v305 = vpack.c.b16 %v284, %v283
      %v306 = vpack.c.b16 %v286, %v285
      %v307 = vpack.c.b16 %v288, %v287
      %v308 = vpack.c.b16 %v289, %v289
      %vm309 = vsmask.f32 7424
      %v311 = vshrl.u32 %v290, 16
      %v313 = vshll.u32 %v290, 16
      %v315 = vrot.slane %v313, 1
      %v316 = vor.u32 %v311, %v315
      %v318 = vshll.u32 %v291, 16
      %v320 = vrot.slane %v318, 1
      %v321 = vsel %vm309, %v316, %v320
      %v322 = vshrl.u32 %v291, 16
      %v324 = vor.u32 %v322, %v320
      %v326 = vshll.u32 %v292, 16
      %v328 = vrot.slane %v326, 1
      %v329 = vsel %vm309, %v324, %v328
      %v330 = vshrl.u32 %v292, 16
      %v332 = vor.u32 %v330, %v328
      %v334 = vshll.u32 %v293, 16
      %v336 = vrot.slane %v334, 1
      %v337 = vsel %vm309, %v332, %v336
      %v338 = vshrl.u32 %v293, 16
      %v340 = vor.u32 %v338, %v336
      %v342 = vshll.u32 %v294, 16
      %v344 = vrot.slane %v342, 1
      %v345 = vsel %vm309, %v340, %v344
      %v346 = vshrl.u32 %v294, 16
      %v348 = vor.u32 %v346, %v344
      %v350 = vshll.u32 %v295, 16
      %v352 = vrot.slane %v350, 1
      %v353 = vsel %vm309, %v348, %v352
      %v354 = vshrl.u32 %v295, 16
      %v356 = vor.u32 %v354, %v352
      %v358 = vshll.u32 %v296, 16
      %v360 = vrot.slane %v358, 1
      %v361 = vsel %vm309, %v356, %v360
      %v362 = vshrl.u32 %v296, 16
      %v364 = vor.u32 %v362, %v360
      %v366 = vshll.u32 %v297, 16
      %v368 = vrot.slane %v366, 1
      %v369 = vsel %vm309, %v364, %v368
      %v370 = vshrl.u32 %v297, 16
      %v372 = vor.u32 %v370, %v368
      %v374 = vshll.u32 %v298, 16
      %v376 = vrot.slane %v374, 1
      %v377 = vsel %vm309, %v372, %v376
      %v378 = vshrl.u32 %v298, 16
      %v380 = vor.u32 %v378, %v376
      %v382 = vshll.u32 %v299, 16
      %v384 = vrot.slane %v382, 1
      %v385 = vsel %vm309, %v380, %v384
      %v386 = vshrl.u32 %v299, 16
      %v388 = vor.u32 %v386, %v384
      %v390 = vshll.u32 %v300, 16
      %v392 = vrot.slane %v390, 1
      %v393 = vsel %vm309, %v388, %v392
      %v394 = vshrl.u32 %v300, 16
      %v396 = vor.u32 %v394, %v392
      %v398 = vshll.u32 %v301, 16
      %v400 = vrot.slane %v398, 1
      %v401 = vsel %vm309, %v396, %v400
      %v402 = vshrl.u32 %v301, 16
      %v404 = vor.u32 %v402, %v400
      %v406 = vshll.u32 %v302, 16
      %v408 = vrot.slane %v406, 1
      %v409 = vsel %vm309, %v404, %v408
      %v410 = vshrl.u32 %v302, 16
      %v412 = vor.u32 %v410, %v408
      %v414 = vshll.u32 %v303, 16
      %v416 = vrot.slane %v414, 1
      %v417 = vsel %vm309, %v412, %v416
      %v418 = vshrl.u32 %v303, 16
      %v420 = vor.u32 %v418, %v416
      %v422 = vshll.u32 %v304, 16
      %v424 = vrot.slane %v422, 1
      %v425 = vsel %vm309, %v420, %v424
      %v426 = vshrl.u32 %v304, 16
      %v428 = vor.u32 %v426, %v424
      %v430 = vshll.u32 %v305, 16
      %v432 = vrot.slane %v430, 1
      %v433 = vsel %vm309, %v428, %v432
      %v434 = vshrl.u32 %v305, 16
      %v436 = vor.u32 %v434, %v432
      %v438 = vshll.u32 %v306, 16
      %v440 = vrot.slane %v438, 1
      %v441 = vsel %vm309, %v436, %v440
      %v442 = vshrl.u32 %v306, 16
      %v444 = vor.u32 %v442, %v440
      %v446 = vshll.u32 %v307, 16
      %v448 = vrot.slane %v446, 1
      %v449 = vsel %vm309, %v444, %v448
      %v450 = vshrl.u32 %v307, 16
      %v452 = vor.u32 %v450, %v448
      %v454 = vshll.u32 %v308, 16
      %v456 = vrot.slane %v454, 1
      %v457 = vsel %vm309, %v452, %v456
      %vm458 = vcmask 64512
      %v460 = vsel %vm458, %v321, 0
      %v463 = vsel %vm458, %v329, 0
      %v466 = vsel %vm458, %v337, 0
      %v469 = vsel %vm458, %v345, 0
      %v472 = vsel %vm458, %v353, 0
      %v475 = vsel %vm458, %v361, 0
      %v478 = vsel %vm458, %v369, 0
      %v481 = vsel %vm458, %v377, 0
      %v484 = vsel %vm458, %v385, 0
      %v487 = vsel %vm458, %v393, 0
      %v490 = vsel %vm458, %v401, 0
      %v493 = vsel %vm458, %v409, 0
      %v496 = vsel %vm458, %v417, 0
      %v499 = vsel %vm458, %v425, 0
      %v502 = vsel %vm458, %v433, 0
      %v505 = vsel %vm458, %v441, 0
      %v508 = vsel %vm458, %v449, 0
      %v511 = vsel %vm458, %v457, 0
      %vm513 = vcmask 1043456
      %v515 = vsel %vm513, %v215, 0
      %517 = vmatprep.subr.bf16.mxu0 0
      %518 = vmatpush1.bf16.msra.mxu0 0
      %519 = vmatprep.subr.bf16.mxu0 0
      %520 = vmatpush1.bf16.msra.mxu0 0
      %521 = vmatprep.subr.bf16.mxu0 0
      %522 = vmatpush1.bf16.msra.mxu0 0
      %523 = vmatprep.subr.bf16.mxu0 0
      %524 = vmatpush1.bf16.msra.mxu0 0
      %525 = vmatprep.subr.bf16.mxu0 0
      %526 = vmatpush1.bf16.msra.mxu0 0
      %527 = vmatprep.subr.bf16.mxu0 0
      %528 = vmatpush1.bf16.msra.mxu0 0
      %529 = vmatprep.subr.bf16.mxu0 0
      %530 = vmatpush1.bf16.msra.mxu0 0
      %531 = vmatprep.subr.bf16.mxu0 0
      %532 = vmatpush1.bf16.msra.mxu0 %v515
      %533 = vmatprep.subr.bf16.mxu0 0
      %534 = vmatpush2.bf16.msra.mxu0 0
      %535 = vmatprep.subr.bf16.mxu0 0
      %536 = vmatpush2.bf16.msra.mxu0 0
      %537 = vmatprep.subr.bf16.mxu0 0
      %538 = vmatpush2.bf16.msra.mxu0 0
      %539 = vmatprep.subr.bf16.mxu0 0
      %540 = vmatpush2.bf16.msra.mxu0 0
      %541 = vmatprep.subr.bf16.mxu0 0
      %542 = vmatpush2.bf16.msra.mxu0 0
      %543 = vmatprep.subr.bf16.mxu0 0
      %544 = vmatpush2.bf16.msra.mxu0 0
      %545 = vmatprep.subr.bf16.mxu0 0
      %546 = vmatpush2.bf16.msra.mxu0 0
      %547 = vmatprep.subr.bf16.mxu0 0
      %548 = vmatpush2.bf16.msra.mxu0 0
      %549 = vmatprep.mubr.bf16.mxu0 0
      %550 = vmatmul.mubr.bf16.gmra.mxu0 %v460
      %v551 = vpop.f32.mrf.mxu0
      %v552 = vadd.f32 0.0, %v551
      %v553 = vpop.f32.mrf.mxu0
      %v554 = vpop.f32.mrf.mxu0
      %v555 = vadd.f32 0.0, %v554
      %v556 = vpop.f32.mrf.mxu0
      %557 = vmatprep.mubr.bf16.mxu0 0
      %558 = vmatmul.mubr.bf16.gmra.mxu0 %v463
      %v559 = vpop.f32.mrf.mxu0
      %v560 = vadd.f32 0.0, %v559
      %v561 = vpop.f32.mrf.mxu0
      %v562 = vpop.f32.mrf.mxu0
      %v563 = vadd.f32 0.0, %v562
      %v564 = vpop.f32.mrf.mxu0
      %565 = vmatprep.mubr.bf16.mxu0 0
      %566 = vmatmul.mubr.bf16.gmra.mxu0 %v466
      %v567 = vpop.f32.mrf.mxu0
      %v568 = vadd.f32 0.0, %v567
      %v569 = vpop.f32.mrf.mxu0
      %v570 = vpop.f32.mrf.mxu0
      %v571 = vadd.f32 0.0, %v570
      %v572 = vpop.f32.mrf.mxu0
      %573 = vmatprep.mubr.bf16.mxu0 0
      %574 = vmatmul.mubr.bf16.gmra.mxu0 %v469
      %v575 = vpop.f32.mrf.mxu0
      %v576 = vadd.f32 0.0, %v575
      %v577 = vpop.f32.mrf.mxu0
      %v578 = vpop.f32.mrf.mxu0
      %v579 = vadd.f32 0.0, %v578
      %v580 = vpop.f32.mrf.mxu0
      %581 = vmatprep.mubr.bf16.mxu0 0
      %582 = vmatmul.mubr.bf16.gmra.mxu0 %v472
      %v583 = vpop.f32.mrf.mxu0
      %v584 = vadd.f32 0.0, %v583
      %v585 = vpop.f32.mrf.mxu0
      %v586 = vpop.f32.mrf.mxu0
      %v587 = vadd.f32 0.0, %v586
      %v588 = vpop.f32.mrf.mxu0
      %589 = vmatprep.mubr.bf16.mxu0 0
      %590 = vmatmul.mubr.bf16.gmra.mxu0 %v475
      %v591 = vpop.f32.mrf.mxu0
      %v592 = vadd.f32 0.0, %v591
      %v593 = vpop.f32.mrf.mxu0
      %v594 = vpop.f32.mrf.mxu0
      %v595 = vadd.f32 0.0, %v594
      %v596 = vpop.f32.mrf.mxu0
      %597 = vmatprep.mubr.bf16.mxu0 0
      %598 = vmatmul.mubr.bf16.gmra.mxu0 %v478
      %v599 = vpop.f32.mrf.mxu0
      %v600 = vadd.f32 0.0, %v599
      %v601 = vpop.f32.mrf.mxu0
      %v602 = vpop.f32.mrf.mxu0
      %v603 = vadd.f32 0.0, %v602
      %v604 = vpop.f32.mrf.mxu0
      %605 = vmatprep.mubr.bf16.mxu0 0
      %606 = vmatmul.mubr.bf16.gmra.mxu0 %v481
      %v607 = vpop.f32.mrf.mxu0
      %v608 = vadd.f32 0.0, %v607
      %v609 = vpop.f32.mrf.mxu0
      %v610 = vpop.f32.mrf.mxu0
      %v611 = vadd.f32 0.0, %v610
      %v612 = vpop.f32.mrf.mxu0
      %613 = vmatprep.mubr.bf16.mxu0 0
      %614 = vmatmul.mubr.bf16.gmra.mxu0 %v484
      %v615 = vpop.f32.mrf.mxu0
      %v616 = vadd.f32 0.0, %v615
      %v617 = vpop.f32.mrf.mxu0
      %v618 = vpop.f32.mrf.mxu0
      %v619 = vadd.f32 0.0, %v618
      %v620 = vpop.f32.mrf.mxu0
      %621 = vmatprep.mubr.bf16.mxu0 0
      %622 = vmatmul.mubr.bf16.gmra.mxu0 %v487
      %v623 = vpop.f32.mrf.mxu0
      %v624 = vadd.f32 0.0, %v623
      %v625 = vpop.f32.mrf.mxu0
      %v626 = vpop.f32.mrf.mxu0
      %v627 = vadd.f32 0.0, %v626
      %v628 = vpop.f32.mrf.mxu0
      %629 = vmatprep.mubr.bf16.mxu0 0
      %630 = vmatmul.mubr.bf16.gmra.mxu0 %v490
      %v631 = vpop.f32.mrf.mxu0
      %v632 = vadd.f32 0.0, %v631
      %v633 = vpop.f32.mrf.mxu0
      %v634 = vpop.f32.mrf.mxu0
      %v635 = vadd.f32 0.0, %v634
      %v636 = vpop.f32.mrf.mxu0
      %637 = vmatprep.mubr.bf16.mxu0 0
      %638 = vmatmul.mubr.bf16.gmra.mxu0 %v493
      %v639 = vpop.f32.mrf.mxu0
      %v640 = vadd.f32 0.0, %v639
      %v641 = vpop.f32.mrf.mxu0
      %v642 = vpop.f32.mrf.mxu0
      %v643 = vadd.f32 0.0, %v642
      %v644 = vpop.f32.mrf.mxu0
      %645 = vmatprep.mubr.bf16.mxu0 0
      %646 = vmatmul.mubr.bf16.gmra.mxu0 %v496
      %v647 = vpop.f32.mrf.mxu0
      %v648 = vadd.f32 0.0, %v647
      %v649 = vpop.f32.mrf.mxu0
      %v650 = vpop.f32.mrf.mxu0
      %v651 = vadd.f32 0.0, %v650
      %v652 = vpop.f32.mrf.mxu0
      %653 = vmatprep.mubr.bf16.mxu0 0
      %654 = vmatmul.mubr.bf16.gmra.mxu0 %v499
      %v655 = vpop.f32.mrf.mxu0
      %v656 = vadd.f32 0.0, %v655
      %v657 = vpop.f32.mrf.mxu0
      %v658 = vpop.f32.mrf.mxu0
      %v659 = vadd.f32 0.0, %v658
      %v660 = vpop.f32.mrf.mxu0
      %661 = vmatprep.mubr.bf16.mxu0 0
      %662 = vmatmul.mubr.bf16.gmra.mxu0 %v502
      %v663 = vpop.f32.mrf.mxu0
      %v664 = vadd.f32 0.0, %v663
      %v665 = vpop.f32.mrf.mxu0
      %v666 = vpop.f32.mrf.mxu0
      %v667 = vadd.f32 0.0, %v666
      %v668 = vpop.f32.mrf.mxu0
      %669 = vmatprep.mubr.bf16.mxu0 0
      %670 = vmatmul.mubr.bf16.gmra.mxu0 %v505
      %v671 = vpop.f32.mrf.mxu0
      %v672 = vadd.f32 0.0, %v671
      %v673 = vpop.f32.mrf.mxu0
      %v674 = vpop.f32.mrf.mxu0
      %v675 = vadd.f32 0.0, %v674
      %v676 = vpop.f32.mrf.mxu0
      %677 = vmatprep.mubr.bf16.mxu0 0
      %678 = vmatmul.mubr.bf16.gmra.mxu0 %v508
      %v679 = vpop.f32.mrf.mxu0
      %v680 = vadd.f32 0.0, %v679
      %v681 = vpop.f32.mrf.mxu0
      %v682 = vpop.f32.mrf.mxu0
      %v683 = vadd.f32 0.0, %v682
      %v684 = vpop.f32.mrf.mxu0
      %685 = vmatprep.mubr.bf16.mxu0 0
      %686 = vmatmul.mubr.bf16.gmra.mxu0 %v511
      %v687 = vpop.f32.mrf.mxu0
      %v688 = vadd.f32 0.0, %v687
      %v689 = vpop.f32.mrf.mxu0
      %v690 = vpop.f32.mrf.mxu0
      %v691 = vadd.f32 0.0, %v690
      %v692 = vpop.f32.mrf.mxu0
      %693 = vdwg.mxu0
      %v694 = vsel %vm458, %v290, 0
      %v696 = vsel %vm458, %v291, 0
      %v698 = vsel %vm458, %v292, 0
      %v700 = vsel %vm458, %v293, 0
      %v702 = vsel %vm458, %v294, 0
      %v704 = vsel %vm458, %v295, 0
      %v706 = vsel %vm458, %v296, 0
      %v708 = vsel %vm458, %v297, 0
      %v710 = vsel %vm458, %v298, 0
      %v712 = vsel %vm458, %v299, 0
      %v714 = vsel %vm458, %v300, 0
      %v716 = vsel %vm458, %v301, 0
      %v718 = vsel %vm458, %v302, 0
      %v720 = vsel %vm458, %v303, 0
      %v722 = vsel %vm458, %v304, 0
      %v724 = vsel %vm458, %v305, 0
      %v726 = vsel %vm458, %v306, 0
      %v728 = vsel %vm458, %v307, 0
      %v731 = vsel %vm513, %v213, 0
      %733 = vmatprep.subr.bf16.mxu0 0
      %734 = vmatpush1.bf16.msra.mxu0 0
      %735 = vmatprep.subr.bf16.mxu0 0
      %736 = vmatpush1.bf16.msra.mxu0 0
      %737 = vmatprep.subr.bf16.mxu0 0
      %738 = vmatpush1.bf16.msra.mxu0 0
      %739 = vmatprep.subr.bf16.mxu0 0
      %740 = vmatpush1.bf16.msra.mxu0 0
      %741 = vmatprep.subr.bf16.mxu0 0
      %742 = vmatpush1.bf16.msra.mxu0 0
      %743 = vmatprep.subr.bf16.mxu0 0
      %744 = vmatpush1.bf16.msra.mxu0 0
      %745 = vmatprep.subr.bf16.mxu0 0
      %746 = vmatpush1.bf16.msra.mxu0 0
      %747 = vmatprep.subr.bf16.mxu0 0
      %748 = vmatpush1.bf16.msra.mxu0 %v731
      %749 = vmatprep.subr.bf16.mxu0 0
      %750 = vmatpush2.bf16.msra.mxu0 0
      %751 = vmatprep.subr.bf16.mxu0 0
      %752 = vmatpush2.bf16.msra.mxu0 0
      %753 = vmatprep.subr.bf16.mxu0 0
      %754 = vmatpush2.bf16.msra.mxu0 0
      %755 = vmatprep.subr.bf16.mxu0 0
      %756 = vmatpush2.bf16.msra.mxu0 0
      %757 = vmatprep.subr.bf16.mxu0 0
      %758 = vmatpush2.bf16.msra.mxu0 0
      %759 = vmatprep.subr.bf16.mxu0 0
      %760 = vmatpush2.bf16.msra.mxu0 0
      %761 = vmatprep.subr.bf16.mxu0 0
      %762 = vmatpush2.bf16.msra.mxu0 0
      %763 = vmatprep.subr.bf16.mxu0 0
      %764 = vmatpush2.bf16.msra.mxu0 0
      %765 = vmatprep.mubr.bf16.mxu0 0
      %766 = vmatmul.mubr.bf16.gmra.mxu0 %v694
      %v767 = vpop.f32.mrf.mxu0
      %v768 = vadd.f32 %v552, %v767
      %v769 = vpop.f32.mrf.mxu0
      %v770 = vpop.f32.mrf.mxu0
      %v771 = vadd.f32 %v555, %v770
      %v772 = vpop.f32.mrf.mxu0
      %773 = vmatprep.mubr.bf16.mxu0 0
      %774 = vmatmul.mubr.bf16.gmra.mxu0 %v696
      %v775 = vpop.f32.mrf.mxu0
      %v776 = vadd.f32 %v560, %v775
      %v777 = vpop.f32.mrf.mxu0
      %v778 = vpop.f32.mrf.mxu0
      %v779 = vadd.f32 %v563, %v778
      %v780 = vpop.f32.mrf.mxu0
      %781 = vmatprep.mubr.bf16.mxu0 0
      %782 = vmatmul.mubr.bf16.gmra.mxu0 %v698
      %v783 = vpop.f32.mrf.mxu0
      %v784 = vadd.f32 %v568, %v783
      %v785 = vpop.f32.mrf.mxu0
      %v786 = vpop.f32.mrf.mxu0
      %v787 = vadd.f32 %v571, %v786
      %v788 = vpop.f32.mrf.mxu0
      %789 = vmatprep.mubr.bf16.mxu0 0
      %790 = vmatmul.mubr.bf16.gmra.mxu0 %v700
      %v791 = vpop.f32.mrf.mxu0
      %v792 = vadd.f32 %v576, %v791
      %v793 = vpop.f32.mrf.mxu0
      %v794 = vpop.f32.mrf.mxu0
      %v795 = vadd.f32 %v579, %v794
      %v796 = vpop.f32.mrf.mxu0
      %797 = vmatprep.mubr.bf16.mxu0 0
      %798 = vmatmul.mubr.bf16.gmra.mxu0 %v702
      %v799 = vpop.f32.mrf.mxu0
      %v800 = vadd.f32 %v584, %v799
      %v801 = vpop.f32.mrf.mxu0
      %v802 = vpop.f32.mrf.mxu0
      %v803 = vadd.f32 %v587, %v802
      %v804 = vpop.f32.mrf.mxu0
      %805 = vmatprep.mubr.bf16.mxu0 0
      %806 = vmatmul.mubr.bf16.gmra.mxu0 %v704
      %v807 = vpop.f32.mrf.mxu0
      %v808 = vadd.f32 %v592, %v807
      %v809 = vpop.f32.mrf.mxu0
      %v810 = vpop.f32.mrf.mxu0
      %v811 = vadd.f32 %v595, %v810
      %v812 = vpop.f32.mrf.mxu0
      %813 = vmatprep.mubr.bf16.mxu0 0
      %814 = vmatmul.mubr.bf16.gmra.mxu0 %v706
      %v815 = vpop.f32.mrf.mxu0
      %v816 = vadd.f32 %v600, %v815
      %v817 = vpop.f32.mrf.mxu0
      %v818 = vpop.f32.mrf.mxu0
      %v819 = vadd.f32 %v603, %v818
      %v820 = vpop.f32.mrf.mxu0
      %821 = vmatprep.mubr.bf16.mxu0 0
      %822 = vmatmul.mubr.bf16.gmra.mxu0 %v708
      %v823 = vpop.f32.mrf.mxu0
      %v824 = vadd.f32 %v608, %v823
      %v825 = vpop.f32.mrf.mxu0
      %v826 = vpop.f32.mrf.mxu0
      %v827 = vadd.f32 %v611, %v826
      %v828 = vpop.f32.mrf.mxu0
      %829 = vmatprep.mubr.bf16.mxu0 0
      %830 = vmatmul.mubr.bf16.gmra.mxu0 %v710
      %v831 = vpop.f32.mrf.mxu0
      %v832 = vadd.f32 %v616, %v831
      %v833 = vpop.f32.mrf.mxu0
      %v834 = vpop.f32.mrf.mxu0
      %v835 = vadd.f32 %v619, %v834
      %v836 = vpop.f32.mrf.mxu0
      %837 = vmatprep.mubr.bf16.mxu0 0
      %838 = vmatmul.mubr.bf16.gmra.mxu0 %v712
      %v839 = vpop.f32.mrf.mxu0
      %v840 = vadd.f32 %v624, %v839
      %v841 = vpop.f32.mrf.mxu0
      %v842 = vpop.f32.mrf.mxu0
      %v843 = vadd.f32 %v627, %v842
      %v844 = vpop.f32.mrf.mxu0
      %845 = vmatprep.mubr.bf16.mxu0 0
      %846 = vmatmul.mubr.bf16.gmra.mxu0 %v714
      %v847 = vpop.f32.mrf.mxu0
      %v848 = vadd.f32 %v632, %v847
      %v849 = vpop.f32.mrf.mxu0
      %v850 = vpop.f32.mrf.mxu0
      %v851 = vadd.f32 %v635, %v850
      %v852 = vpop.f32.mrf.mxu0
      %853 = vmatprep.mubr.bf16.mxu0 0
      %854 = vmatmul.mubr.bf16.gmra.mxu0 %v716
      %v855 = vpop.f32.mrf.mxu0
      %v856 = vadd.f32 %v640, %v855
      %v857 = vpop.f32.mrf.mxu0
      %v858 = vpop.f32.mrf.mxu0
      %v859 = vadd.f32 %v643, %v858
      %v860 = vpop.f32.mrf.mxu0
      %861 = vmatprep.mubr.bf16.mxu0 0
      %862 = vmatmul.mubr.bf16.gmra.mxu0 %v718
      %v863 = vpop.f32.mrf.mxu0
      %v864 = vadd.f32 %v648, %v863
      %v865 = vpop.f32.mrf.mxu0
      %v866 = vpop.f32.mrf.mxu0
      %v867 = vadd.f32 %v651, %v866
      %v868 = vpop.f32.mrf.mxu0
      %869 = vmatprep.mubr.bf16.mxu0 0
      %870 = vmatmul.mubr.bf16.gmra.mxu0 %v720
      %v871 = vpop.f32.mrf.mxu0
      %v872 = vadd.f32 %v656, %v871
      %v873 = vpop.f32.mrf.mxu0
      %v874 = vpop.f32.mrf.mxu0
      %v875 = vadd.f32 %v659, %v874
      %v876 = vpop.f32.mrf.mxu0
      %877 = vmatprep.mubr.bf16.mxu0 0
      %878 = vmatmul.mubr.bf16.gmra.mxu0 %v722
      %v879 = vpop.f32.mrf.mxu0
      %v880 = vadd.f32 %v664, %v879
      %v881 = vpop.f32.mrf.mxu0
      %v882 = vpop.f32.mrf.mxu0
      %v883 = vadd.f32 %v667, %v882
      %v884 = vpop.f32.mrf.mxu0
      %885 = vmatprep.mubr.bf16.mxu0 0
      %886 = vmatmul.mubr.bf16.gmra.mxu0 %v724
      %v887 = vpop.f32.mrf.mxu0
      %v888 = vadd.f32 %v672, %v887
      %v889 = vpop.f32.mrf.mxu0
      %v890 = vpop.f32.mrf.mxu0
      %v891 = vadd.f32 %v675, %v890
      %v892 = vpop.f32.mrf.mxu0
      %893 = vmatprep.mubr.bf16.mxu0 0
      %894 = vmatmul.mubr.bf16.gmra.mxu0 %v726
      %v895 = vpop.f32.mrf.mxu0
      %v896 = vadd.f32 %v680, %v895
      %v897 = vpop.f32.mrf.mxu0
      %v898 = vpop.f32.mrf.mxu0
      %v899 = vadd.f32 %v683, %v898
      %v900 = vpop.f32.mrf.mxu0
      %901 = vmatprep.mubr.bf16.mxu0 0
      %902 = vmatmul.mubr.bf16.gmra.mxu0 %v728
      %v903 = vpop.f32.mrf.mxu0
      %v904 = vadd.f32 %v688, %v903
      %v905 = vpop.f32.mrf.mxu0
      %v906 = vpop.f32.mrf.mxu0
      %v907 = vadd.f32 %v691, %v906
      %v908 = vpop.f32.mrf.mxu0
      %909 = vdwg.mxu0
      %s910 = scalar_lea.vmem %s1, 8
      %v911 = vld [vmem:[%s910] sm:$0xf]
      %vm912 = vcmask 1046528
      %v913 = vrot.slane %v290, 1
      %v914 = vrot.slane %v291, 1
      %v915 = vsel %vm912, %v913, %v914
      %v916 = vrot.slane %v292, 1
      %v917 = vsel %vm912, %v914, %v916
      %v918 = vrot.slane %v293, 1
      %v919 = vsel %vm912, %v916, %v918
      %v920 = vrot.slane %v294, 1
      %v921 = vsel %vm912, %v918, %v920
      %v922 = vrot.slane %v295, 1
      %v923 = vsel %vm912, %v920, %v922
      %v924 = vrot.slane %v296, 1
      %v925 = vsel %vm912, %v922, %v924
      %v926 = vrot.slane %v297, 1
      %v927 = vsel %vm912, %v924, %v926
      %v928 = vrot.slane %v298, 1
      %v929 = vsel %vm912, %v926, %v928
      %v930 = vrot.slane %v299, 1
      %v931 = vsel %vm912, %v928, %v930
      %v932 = vrot.slane %v300, 1
      %v933 = vsel %vm912, %v930, %v932
      %v934 = vrot.slane %v301, 1
      %v935 = vsel %vm912, %v932, %v934
      %v936 = vrot.slane %v302, 1
      %v937 = vsel %vm912, %v934, %v936
      %v938 = vrot.slane %v303, 1
      %v939 = vsel %vm912, %v936, %v938
      %v940 = vrot.slane %v304, 1
      %v941 = vsel %vm912, %v938, %v940
      %v942 = vrot.slane %v305, 1
      %v943 = vsel %vm912, %v940, %v942
      %v944 = vrot.slane %v306, 1
      %v945 = vsel %vm912, %v942, %v944
      %v946 = vrot.slane %v307, 1
      %v947 = vsel %vm912, %v944, %v946
      %v948 = vrot.slane %v308, 1
      %v949 = vsel %vm912, %v946, %v948
      %v951 = vsel %vm458, %v915, 0
      %v954 = vsel %vm458, %v917, 0
      %v957 = vsel %vm458, %v919, 0
      %v960 = vsel %vm458, %v921, 0
      %v963 = vsel %vm458, %v923, 0
      %v966 = vsel %vm458, %v925, 0
      %v969 = vsel %vm458, %v927, 0
      %v972 = vsel %vm458, %v929, 0
      %v975 = vsel %vm458, %v931, 0
      %v978 = vsel %vm458, %v933, 0
      %v981 = vsel %vm458, %v935, 0
      %v984 = vsel %vm458, %v937, 0
      %v987 = vsel %vm458, %v939, 0
      %v990 = vsel %vm458, %v941, 0
      %v993 = vsel %vm458, %v943, 0
      %v996 = vsel %vm458, %v945, 0
      %v999 = vsel %vm458, %v947, 0
      %v1002 = vsel %vm458, %v949, 0
      %v1005 = vsel %vm513, %v911, 0
      %1007 = vmatprep.subr.bf16.mxu0 0
      %1008 = vmatpush1.bf16.msra.mxu0 0
      %1009 = vmatprep.subr.bf16.mxu0 0
      %1010 = vmatpush1.bf16.msra.mxu0 0
      %1011 = vmatprep.subr.bf16.mxu0 0
      %1012 = vmatpush1.bf16.msra.mxu0 0
      %1013 = vmatprep.subr.bf16.mxu0 0
      %1014 = vmatpush1.bf16.msra.mxu0 0
      %1015 = vmatprep.subr.bf16.mxu0 0
      %1016 = vmatpush1.bf16.msra.mxu0 0
      %1017 = vmatprep.subr.bf16.mxu0 0
      %1018 = vmatpush1.bf16.msra.mxu0 0
      %1019 = vmatprep.subr.bf16.mxu0 0
      %1020 = vmatpush1.bf16.msra.mxu0 0
      %1021 = vmatprep.subr.bf16.mxu0 0
      %1022 = vmatpush1.bf16.msra.mxu0 %v1005
      %1023 = vmatprep.subr.bf16.mxu0 0
      %1024 = vmatpush2.bf16.msra.mxu0 0
      %1025 = vmatprep.subr.bf16.mxu0 0
      %1026 = vmatpush2.bf16.msra.mxu0 0
      %1027 = vmatprep.subr.bf16.mxu0 0
      %1028 = vmatpush2.bf16.msra.mxu0 0
      %1029 = vmatprep.subr.bf16.mxu0 0
      %1030 = vmatpush2.bf16.msra.mxu0 0
      %1031 = vmatprep.subr.bf16.mxu0 0
      %1032 = vmatpush2.bf16.msra.mxu0 0
      %1033 = vmatprep.subr.bf16.mxu0 0
      %1034 = vmatpush2.bf16.msra.mxu0 0
      %1035 = vmatprep.subr.bf16.mxu0 0
      %1036 = vmatpush2.bf16.msra.mxu0 0
      %1037 = vmatprep.subr.bf16.mxu0 0
      %1038 = vmatpush2.bf16.msra.mxu0 0
      %1039 = vmatprep.mubr.bf16.mxu0 0
      %1040 = vmatmul.mubr.bf16.gmra.mxu0 %v951
      %v1041 = vpop.f32.mrf.mxu0
      %v1042 = vadd.f32 0.0, %v1041
      %v1043 = vpop.f32.mrf.mxu0
      %v1044 = vpop.f32.mrf.mxu0
      %v1045 = vadd.f32 0.0, %v1044
      %v1046 = vpop.f32.mrf.mxu0
      %1047 = vmatprep.mubr.bf16.mxu0 0
      %1048 = vmatmul.mubr.bf16.gmra.mxu0 %v954
      %v1049 = vpop.f32.mrf.mxu0
      %v1050 = vadd.f32 0.0, %v1049
      %v1051 = vpop.f32.mrf.mxu0
      %v1052 = vpop.f32.mrf.mxu0
      %v1053 = vadd.f32 0.0, %v1052
      %v1054 = vpop.f32.mrf.mxu0
      %1055 = vmatprep.mubr.bf16.mxu0 0
      %1056 = vmatmul.mubr.bf16.gmra.mxu0 %v957
      %v1057 = vpop.f32.mrf.mxu0
      %v1058 = vadd.f32 0.0, %v1057
      %v1059 = vpop.f32.mrf.mxu0
      %v1060 = vpop.f32.mrf.mxu0
      %v1061 = vadd.f32 0.0, %v1060
      %v1062 = vpop.f32.mrf.mxu0
      %1063 = vmatprep.mubr.bf16.mxu0 0
      %1064 = vmatmul.mubr.bf16.gmra.mxu0 %v960
      %v1065 = vpop.f32.mrf.mxu0
      %v1066 = vadd.f32 0.0, %v1065
      %v1067 = vpop.f32.mrf.mxu0
      %v1068 = vpop.f32.mrf.mxu0
      %v1069 = vadd.f32 0.0, %v1068
      %v1070 = vpop.f32.mrf.mxu0
      %1071 = vmatprep.mubr.bf16.mxu0 0
      %1072 = vmatmul.mubr.bf16.gmra.mxu0 %v963
      %v1073 = vpop.f32.mrf.mxu0
      %v1074 = vadd.f32 0.0, %v1073
      %v1075 = vpop.f32.mrf.mxu0
      %v1076 = vpop.f32.mrf.mxu0
      %v1077 = vadd.f32 0.0, %v1076
      %v1078 = vpop.f32.mrf.mxu0
      %1079 = vmatprep.mubr.bf16.mxu0 0
      %1080 = vmatmul.mubr.bf16.gmra.mxu0 %v966
      %v1081 = vpop.f32.mrf.mxu0
      %v1082 = vadd.f32 0.0, %v1081
      %v1083 = vpop.f32.mrf.mxu0
      %v1084 = vpop.f32.mrf.mxu0
      %v1085 = vadd.f32 0.0, %v1084
      %v1086 = vpop.f32.mrf.mxu0
      %1087 = vmatprep.mubr.bf16.mxu0 0
      %1088 = vmatmul.mubr.bf16.gmra.mxu0 %v969
      %v1089 = vpop.f32.mrf.mxu0
      %v1090 = vadd.f32 0.0, %v1089
      %v1091 = vpop.f32.mrf.mxu0
      %v1092 = vpop.f32.mrf.mxu0
      %v1093 = vadd.f32 0.0, %v1092
      %v1094 = vpop.f32.mrf.mxu0
      %1095 = vmatprep.mubr.bf16.mxu0 0
      %1096 = vmatmul.mubr.bf16.gmra.mxu0 %v972
      %v1097 = vpop.f32.mrf.mxu0
      %v1098 = vadd.f32 0.0, %v1097
      %v1099 = vpop.f32.mrf.mxu0
      %v1100 = vpop.f32.mrf.mxu0
      %v1101 = vadd.f32 0.0, %v1100
      %v1102 = vpop.f32.mrf.mxu0
      %1103 = vmatprep.mubr.bf16.mxu0 0
      %1104 = vmatmul.mubr.bf16.gmra.mxu0 %v975
      %v1105 = vpop.f32.mrf.mxu0
      %v1106 = vadd.f32 0.0, %v1105
      %v1107 = vpop.f32.mrf.mxu0
      %v1108 = vpop.f32.mrf.mxu0
      %v1109 = vadd.f32 0.0, %v1108
      %v1110 = vpop.f32.mrf.mxu0
      %1111 = vmatprep.mubr.bf16.mxu0 0
      %1112 = vmatmul.mubr.bf16.gmra.mxu0 %v978
      %v1113 = vpop.f32.mrf.mxu0
      %v1114 = vadd.f32 0.0, %v1113
      %v1115 = vpop.f32.mrf.mxu0
      %v1116 = vpop.f32.mrf.mxu0
      %v1117 = vadd.f32 0.0, %v1116
      %v1118 = vpop.f32.mrf.mxu0
      %1119 = vmatprep.mubr.bf16.mxu0 0
      %1120 = vmatmul.mubr.bf16.gmra.mxu0 %v981
      %v1121 = vpop.f32.mrf.mxu0
      %v1122 = vadd.f32 0.0, %v1121
      %v1123 = vpop.f32.mrf.mxu0
      %v1124 = vpop.f32.mrf.mxu0
      %v1125 = vadd.f32 0.0, %v1124
      %v1126 = vpop.f32.mrf.mxu0
      %1127 = vmatprep.mubr.bf16.mxu0 0
      %1128 = vmatmul.mubr.bf16.gmra.mxu0 %v984
      %v1129 = vpop.f32.mrf.mxu0
      %v1130 = vadd.f32 0.0, %v1129
      %v1131 = vpop.f32.mrf.mxu0
      %v1132 = vpop.f32.mrf.mxu0
      %v1133 = vadd.f32 0.0, %v1132
      %v1134 = vpop.f32.mrf.mxu0
      %1135 = vmatprep.mubr.bf16.mxu0 0
      %1136 = vmatmul.mubr.bf16.gmra.mxu0 %v987
      %v1137 = vpop.f32.mrf.mxu0
      %v1138 = vadd.f32 0.0, %v1137
      %v1139 = vpop.f32.mrf.mxu0
      %v1140 = vpop.f32.mrf.mxu0
      %v1141 = vadd.f32 0.0, %v1140
      %v1142 = vpop.f32.mrf.mxu0
      %1143 = vmatprep.mubr.bf16.mxu0 0
      %1144 = vmatmul.mubr.bf16.gmra.mxu0 %v990
      %v1145 = vpop.f32.mrf.mxu0
      %v1146 = vadd.f32 0.0, %v1145
      %v1147 = vpop.f32.mrf.mxu0
      %v1148 = vpop.f32.mrf.mxu0
      %v1149 = vadd.f32 0.0, %v1148
      %v1150 = vpop.f32.mrf.mxu0
      %1151 = vmatprep.mubr.bf16.mxu0 0
      %1152 = vmatmul.mubr.bf16.gmra.mxu0 %v993
      %v1153 = vpop.f32.mrf.mxu0
      %v1154 = vadd.f32 0.0, %v1153
      %v1155 = vpop.f32.mrf.mxu0
      %v1156 = vpop.f32.mrf.mxu0
      %v1157 = vadd.f32 0.0, %v1156
      %v1158 = vpop.f32.mrf.mxu0
      %1159 = vmatprep.mubr.bf16.mxu0 0
      %1160 = vmatmul.mubr.bf16.gmra.mxu0 %v996
      %v1161 = vpop.f32.mrf.mxu0
      %v1162 = vadd.f32 0.0, %v1161
      %v1163 = vpop.f32.mrf.mxu0
      %v1164 = vpop.f32.mrf.mxu0
      %v1165 = vadd.f32 0.0, %v1164
      %v1166 = vpop.f32.mrf.mxu0
      %1167 = vmatprep.mubr.bf16.mxu0 0
      %1168 = vmatmul.mubr.bf16.gmra.mxu0 %v999
      %v1169 = vpop.f32.mrf.mxu0
      %v1170 = vadd.f32 0.0, %v1169
      %v1171 = vpop.f32.mrf.mxu0
      %v1172 = vpop.f32.mrf.mxu0
      %v1173 = vadd.f32 0.0, %v1172
      %v1174 = vpop.f32.mrf.mxu0
      %1175 = vmatprep.mubr.bf16.mxu0 0
      %1176 = vmatmul.mubr.bf16.gmra.mxu0 %v1002
      %v1177 = vpop.f32.mrf.mxu0
      %v1178 = vadd.f32 0.0, %v1177
      %v1179 = vpop.f32.mrf.mxu0
      %v1180 = vpop.f32.mrf.mxu0
      %v1181 = vadd.f32 0.0, %v1180
      %v1182 = vpop.f32.mrf.mxu0
      %1183 = vdwg.mxu0
      %v1184 = vadd.f32 %v768, %v1042
      %v1185 = vadd.f32 %v771, %v1045
      %v1186 = vadd.f32 %v776, %v1050
      %v1187 = vadd.f32 %v779, %v1053
      %v1188 = vadd.f32 %v784, %v1058
      %v1189 = vadd.f32 %v787, %v1061
      %v1190 = vadd.f32 %v792, %v1066
      %v1191 = vadd.f32 %v795, %v1069
      %v1192 = vadd.f32 %v800, %v1074
      %v1193 = vadd.f32 %v803, %v1077
      %v1194 = vadd.f32 %v808, %v1082
      %v1195 = vadd.f32 %v811, %v1085
      %v1196 = vadd.f32 %v816, %v1090
      %v1197 = vadd.f32 %v819, %v1093
      %v1198 = vadd.f32 %v824, %v1098
      %v1199 = vadd.f32 %v827, %v1101
      %v1200 = vadd.f32 %v832, %v1106
      %v1201 = vadd.f32 %v835, %v1109
      %v1202 = vadd.f32 %v840, %v1114
      %v1203 = vadd.f32 %v843, %v1117
      %v1204 = vadd.f32 %v848, %v1122
      %v1205 = vadd.f32 %v851, %v1125
      %v1206 = vadd.f32 %v856, %v1130
      %v1207 = vadd.f32 %v859, %v1133
      %v1208 = vadd.f32 %v864, %v1138
      %v1209 = vadd.f32 %v867, %v1141
      %v1210 = vadd.f32 %v872, %v1146
      %v1211 = vadd.f32 %v875, %v1149
      %v1212 = vadd.f32 %v880, %v1154
      %v1213 = vadd.f32 %v883, %v1157
      %v1214 = vadd.f32 %v888, %v1162
      %v1215 = vadd.f32 %v891, %v1165
      %v1216 = vadd.f32 %v896, %v1170
      %v1217 = vadd.f32 %v899, %v1173
      %v1218 = vadd.f32 %v904, %v1178
      %v1219 = vadd.f32 %v907, %v1181
      %s1220 = scalar_lea.vmem %s1, 12
      %v1221 = vld [vmem:[%s1220] sm:$0xf]
      %v1224 = vunpack.c.l.b16 %v209
      %v1225 = vunpack.c.l.b16 %v210
      %v1226 = vpack.c.b16 %v1224, %v289
      %v1227 = vpack.c.b16 %v1225, %v1225
      %v1228 = vrot.slane %v1226, 1
      %v1229 = vsel %vm912, %v946, %v1228
      %v1230 = vrot.slane %v1227, 1
      %v1231 = vsel %vm912, %v1228, %v1230
      %v1233 = vsel %vm458, %v1229, 0
      %v1236 = vsel %vm458, %v1231, 0
      %v1239 = vsel %vm513, %v1221, 0
      %1241 = vmatprep.subr.bf16.mxu0 0
      %1242 = vmatpush1.bf16.msra.mxu0 0
      %1243 = vmatprep.subr.bf16.mxu0 0
      %1244 = vmatpush1.bf16.msra.mxu0 0
      %1245 = vmatprep.subr.bf16.mxu0 0
      %1246 = vmatpush1.bf16.msra.mxu0 0
      %1247 = vmatprep.subr.bf16.mxu0 0
      %1248 = vmatpush1.bf16.msra.mxu0 0
      %1249 = vmatprep.subr.bf16.mxu0 0
      %1250 = vmatpush1.bf16.msra.mxu0 0
      %1251 = vmatprep.subr.bf16.mxu0 0
      %1252 = vmatpush1.bf16.msra.mxu0 0
      %1253 = vmatprep.subr.bf16.mxu0 0
      %1254 = vmatpush1.bf16.msra.mxu0 0
      %1255 = vmatprep.subr.bf16.mxu0 0
      %1256 = vmatpush1.bf16.msra.mxu0 %v1239
      %1257 = vmatprep.subr.bf16.mxu0 0
      %1258 = vmatpush2.bf16.msra.mxu0 0
      %1259 = vmatprep.subr.bf16.mxu0 0
      %1260 = vmatpush2.bf16.msra.mxu0 0
      %1261 = vmatprep.subr.bf16.mxu0 0
      %1262 = vmatpush2.bf16.msra.mxu0 0
      %1263 = vmatprep.subr.bf16.mxu0 0
      %1264 = vmatpush2.bf16.msra.mxu0 0
      %1265 = vmatprep.subr.bf16.mxu0 0
      %1266 = vmatpush2.bf16.msra.mxu0 0
      %1267 = vmatprep.subr.bf16.mxu0 0
      %1268 = vmatpush2.bf16.msra.mxu0 0
      %1269 = vmatprep.subr.bf16.mxu0 0
      %1270 = vmatpush2.bf16.msra.mxu0 0
      %1271 = vmatprep.subr.bf16.mxu0 0
      %1272 = vmatpush2.bf16.msra.mxu0 0
      %1273 = vmatprep.mubr.bf16.mxu0 0
      %1274 = vmatmul.mubr.bf16.gmra.mxu0 %v954
      %v1275 = vpop.f32.mrf.mxu0
      %v1276 = vadd.f32 0.0, %v1275
      %v1277 = vpop.f32.mrf.mxu0
      %v1278 = vpop.f32.mrf.mxu0
      %v1279 = vadd.f32 0.0, %v1278
      %v1280 = vpop.f32.mrf.mxu0
      %1281 = vmatprep.mubr.bf16.mxu0 0
      %1282 = vmatmul.mubr.bf16.gmra.mxu0 %v957
      %v1283 = vpop.f32.mrf.mxu0
      %v1284 = vadd.f32 0.0, %v1283
      %v1285 = vpop.f32.mrf.mxu0
      %v1286 = vpop.f32.mrf.mxu0
      %v1287 = vadd.f32 0.0, %v1286
      %v1288 = vpop.f32.mrf.mxu0
      %1289 = vmatprep.mubr.bf16.mxu0 0
      %1290 = vmatmul.mubr.bf16.gmra.mxu0 %v960
      %v1291 = vpop.f32.mrf.mxu0
      %v1292 = vadd.f32 0.0, %v1291
      %v1293 = vpop.f32.mrf.mxu0
      %v1294 = vpop.f32.mrf.mxu0
      %v1295 = vadd.f32 0.0, %v1294
      %v1296 = vpop.f32.mrf.mxu0
      %1297 = vmatprep.mubr.bf16.mxu0 0
      %1298 = vmatmul.mubr.bf16.gmra.mxu0 %v963
      %v1299 = vpop.f32.mrf.mxu0
      %v1300 = vadd.f32 0.0, %v1299
      %v1301 = vpop.f32.mrf.mxu0
      %v1302 = vpop.f32.mrf.mxu0
      %v1303 = vadd.f32 0.0, %v1302
      %v1304 = vpop.f32.mrf.mxu0
      %1305 = vmatprep.mubr.bf16.mxu0 0
      %1306 = vmatmul.mubr.bf16.gmra.mxu0 %v966
      %v1307 = vpop.f32.mrf.mxu0
      %v1308 = vadd.f32 0.0, %v1307
      %v1309 = vpop.f32.mrf.mxu0
      %v1310 = vpop.f32.mrf.mxu0
      %v1311 = vadd.f32 0.0, %v1310
      %v1312 = vpop.f32.mrf.mxu0
      %1313 = vmatprep.mubr.bf16.mxu0 0
      %1314 = vmatmul.mubr.bf16.gmra.mxu0 %v969
      %v1315 = vpop.f32.mrf.mxu0
      %v1316 = vadd.f32 0.0, %v1315
      %v1317 = vpop.f32.mrf.mxu0
      %v1318 = vpop.f32.mrf.mxu0
      %v1319 = vadd.f32 0.0, %v1318
      %v1320 = vpop.f32.mrf.mxu0
      %1321 = vmatprep.mubr.bf16.mxu0 0
      %1322 = vmatmul.mubr.bf16.gmra.mxu0 %v972
      %v1323 = vpop.f32.mrf.mxu0
      %v1324 = vadd.f32 0.0, %v1323
      %v1325 = vpop.f32.mrf.mxu0
      %v1326 = vpop.f32.mrf.mxu0
      %v1327 = vadd.f32 0.0, %v1326
      %v1328 = vpop.f32.mrf.mxu0
      %1329 = vmatprep.mubr.bf16.mxu0 0
      %1330 = vmatmul.mubr.bf16.gmra.mxu0 %v975
      %v1331 = vpop.f32.mrf.mxu0
      %v1332 = vadd.f32 0.0, %v1331
      %v1333 = vpop.f32.mrf.mxu0
      %v1334 = vpop.f32.mrf.mxu0
      %v1335 = vadd.f32 0.0, %v1334
      %v1336 = vpop.f32.mrf.mxu0
      %1337 = vmatprep.mubr.bf16.mxu0 0
      %1338 = vmatmul.mubr.bf16.gmra.mxu0 %v978
      %v1339 = vpop.f32.mrf.mxu0
      %v1340 = vadd.f32 0.0, %v1339
      %v1341 = vpop.f32.mrf.mxu0
      %v1342 = vpop.f32.mrf.mxu0
      %v1343 = vadd.f32 0.0, %v1342
      %v1344 = vpop.f32.mrf.mxu0
      %1345 = vmatprep.mubr.bf16.mxu0 0
      %1346 = vmatmul.mubr.bf16.gmra.mxu0 %v981
      %v1347 = vpop.f32.mrf.mxu0
      %v1348 = vadd.f32 0.0, %v1347
      %v1349 = vpop.f32.mrf.mxu0
      %v1350 = vpop.f32.mrf.mxu0
      %v1351 = vadd.f32 0.0, %v1350
      %v1352 = vpop.f32.mrf.mxu0
      %1353 = vmatprep.mubr.bf16.mxu0 0
      %1354 = vmatmul.mubr.bf16.gmra.mxu0 %v984
      %v1355 = vpop.f32.mrf.mxu0
      %v1356 = vadd.f32 0.0, %v1355
      %v1357 = vpop.f32.mrf.mxu0
      %v1358 = vpop.f32.mrf.mxu0
      %v1359 = vadd.f32 0.0, %v1358
      %v1360 = vpop.f32.mrf.mxu0
      %1361 = vmatprep.mubr.bf16.mxu0 0
      %1362 = vmatmul.mubr.bf16.gmra.mxu0 %v987
      %v1363 = vpop.f32.mrf.mxu0
      %v1364 = vadd.f32 0.0, %v1363
      %v1365 = vpop.f32.mrf.mxu0
      %v1366 = vpop.f32.mrf.mxu0
      %v1367 = vadd.f32 0.0, %v1366
      %v1368 = vpop.f32.mrf.mxu0
      %1369 = vmatprep.mubr.bf16.mxu0 0
      %1370 = vmatmul.mubr.bf16.gmra.mxu0 %v990
      %v1371 = vpop.f32.mrf.mxu0
      %v1372 = vadd.f32 0.0, %v1371
      %v1373 = vpop.f32.mrf.mxu0
      %v1374 = vpop.f32.mrf.mxu0
      %v1375 = vadd.f32 0.0, %v1374
      %v1376 = vpop.f32.mrf.mxu0
      %1377 = vmatprep.mubr.bf16.mxu0 0
      %1378 = vmatmul.mubr.bf16.gmra.mxu0 %v993
      %v1379 = vpop.f32.mrf.mxu0
      %v1380 = vadd.f32 0.0, %v1379
      %v1381 = vpop.f32.mrf.mxu0
      %v1382 = vpop.f32.mrf.mxu0
      %v1383 = vadd.f32 0.0, %v1382
      %v1384 = vpop.f32.mrf.mxu0
      %1385 = vmatprep.mubr.bf16.mxu0 0
      %1386 = vmatmul.mubr.bf16.gmra.mxu0 %v996
      %v1387 = vpop.f32.mrf.mxu0
      %v1388 = vadd.f32 0.0, %v1387
      %v1389 = vpop.f32.mrf.mxu0
      %v1390 = vpop.f32.mrf.mxu0
      %v1391 = vadd.f32 0.0, %v1390
      %v1392 = vpop.f32.mrf.mxu0
      %1393 = vmatprep.mubr.bf16.mxu0 0
      %1394 = vmatmul.mubr.bf16.gmra.mxu0 %v999
      %v1395 = vpop.f32.mrf.mxu0
      %v1396 = vadd.f32 0.0, %v1395
      %v1397 = vpop.f32.mrf.mxu0
      %v1398 = vpop.f32.mrf.mxu0
      %v1399 = vadd.f32 0.0, %v1398
      %v1400 = vpop.f32.mrf.mxu0
      %1401 = vmatprep.mubr.bf16.mxu0 0
      %1402 = vmatmul.mubr.bf16.gmra.mxu0 %v1233
      %v1403 = vpop.f32.mrf.mxu0
      %v1404 = vadd.f32 0.0, %v1403
      %v1405 = vpop.f32.mrf.mxu0
      %v1406 = vpop.f32.mrf.mxu0
      %v1407 = vadd.f32 0.0, %v1406
      %v1408 = vpop.f32.mrf.mxu0
      %1409 = vmatprep.mubr.bf16.mxu0 0
      %1410 = vmatmul.mubr.bf16.gmra.mxu0 %v1236
      %v1411 = vpop.f32.mrf.mxu0
      %v1412 = vadd.f32 0.0, %v1411
      %v1413 = vpop.f32.mrf.mxu0
      %v1414 = vpop.f32.mrf.mxu0
      %v1415 = vadd.f32 0.0, %v1414
      %v1416 = vpop.f32.mrf.mxu0
      %1417 = vdwg.mxu0
      %v1418 = vadd.f32 %v1184, %v1276
      %v1419 = vadd.f32 %v1185, %v1279
      %v1420 = vadd.f32 %v1186, %v1284
      %v1421 = vadd.f32 %v1187, %v1287
      %v1422 = vadd.f32 %v1188, %v1292
      %v1423 = vadd.f32 %v1189, %v1295
      %v1424 = vadd.f32 %v1190, %v1300
      %v1425 = vadd.f32 %v1191, %v1303
      %v1426 = vadd.f32 %v1192, %v1308
      %v1427 = vadd.f32 %v1193, %v1311
      %v1428 = vadd.f32 %v1194, %v1316
      %v1429 = vadd.f32 %v1195, %v1319
      %v1430 = vadd.f32 %v1196, %v1324
      %v1431 = vadd.f32 %v1197, %v1327
      %v1432 = vadd.f32 %v1198, %v1332
      %v1433 = vadd.f32 %v1199, %v1335
      %v1434 = vadd.f32 %v1200, %v1340
      %v1435 = vadd.f32 %v1201, %v1343
      %v1436 = vadd.f32 %v1202, %v1348
      %v1437 = vadd.f32 %v1203, %v1351
      %v1438 = vadd.f32 %v1204, %v1356
      %v1439 = vadd.f32 %v1205, %v1359
      %v1440 = vadd.f32 %v1206, %v1364
      %v1441 = vadd.f32 %v1207, %v1367
      %v1442 = vadd.f32 %v1208, %v1372
      %v1443 = vadd.f32 %v1209, %v1375
      %v1444 = vadd.f32 %v1210, %v1380
      %v1445 = vadd.f32 %v1211, %v1383
      %v1446 = vadd.f32 %v1212, %v1388
      %v1447 = vadd.f32 %v1213, %v1391
      %v1448 = vadd.f32 %v1214, %v1396
      %v1449 = vadd.f32 %v1215, %v1399
      %v1450 = vadd.f32 %v1216, %v1404
      %v1451 = vadd.f32 %v1217, %v1407
      %v1452 = vadd.f32 %v1218, %v1412
      %v1453 = vadd.f32 %v1219, %v1415
      %s1454 = scalar_lea.vmem %s1, 16
      %v1455 = vld [vmem:[%s1454] sm:$0xf]
      %vm1456 = vsmask.f32 6400
      %v1457 = vrot.slane %v322, 1
      %v1458 = vrot.slane %v318, 2
      %v1459 = vor.u32 %v1457, %v1458
      %v1460 = vrot.slane %v330, 1
      %v1461 = vrot.slane %v326, 2
      %v1462 = vor.u32 %v1460, %v1461
      %v1463 = vsel %vm1456, %v1459, %v1462
      %v1464 = vrot.slane %v338, 1
      %v1465 = vrot.slane %v334, 2
      %v1466 = vor.u32 %v1464, %v1465
      %v1467 = vsel %vm1456, %v1462, %v1466
      %v1468 = vrot.slane %v346, 1
      %v1469 = vrot.slane %v342, 2
      %v1470 = vor.u32 %v1468, %v1469
      %v1471 = vsel %vm1456, %v1466, %v1470
      %v1472 = vrot.slane %v354, 1
      %v1473 = vrot.slane %v350, 2
      %v1474 = vor.u32 %v1472, %v1473
      %v1475 = vsel %vm1456, %v1470, %v1474
      %v1476 = vrot.slane %v362, 1
      %v1477 = vrot.slane %v358, 2
      %v1478 = vor.u32 %v1476, %v1477
      %v1479 = vsel %vm1456, %v1474, %v1478
      %v1480 = vrot.slane %v370, 1
      %v1481 = vrot.slane %v366, 2
      %v1482 = vor.u32 %v1480, %v1481
      %v1483 = vsel %vm1456, %v1478, %v1482
      %v1484 = vrot.slane %v378, 1
      %v1485 = vrot.slane %v374, 2
      %v1486 = vor.u32 %v1484, %v1485
      %v1487 = vsel %vm1456, %v1482, %v1486
      %v1488 = vrot.slane %v386, 1
      %v1489 = vrot.slane %v382, 2
      %v1490 = vor.u32 %v1488, %v1489
      %v1491 = vsel %vm1456, %v1486, %v1490
      %v1492 = vrot.slane %v394, 1
      %v1493 = vrot.slane %v390, 2
      %v1494 = vor.u32 %v1492, %v1493
      %v1495 = vsel %vm1456, %v1490, %v1494
      %v1496 = vrot.slane %v402, 1
      %v1497 = vrot.slane %v398, 2
      %v1498 = vor.u32 %v1496, %v1497
      %v1499 = vsel %vm1456, %v1494, %v1498
      %v1500 = vrot.slane %v410, 1
      %v1501 = vrot.slane %v406, 2
      %v1502 = vor.u32 %v1500, %v1501
      %v1503 = vsel %vm1456, %v1498, %v1502
      %v1504 = vrot.slane %v418, 1
      %v1505 = vrot.slane %v414, 2
      %v1506 = vor.u32 %v1504, %v1505
      %v1507 = vsel %vm1456, %v1502, %v1506
      %v1508 = vrot.slane %v426, 1
      %v1509 = vrot.slane %v422, 2
      %v1510 = vor.u32 %v1508, %v1509
      %v1511 = vsel %vm1456, %v1506, %v1510
      %v1512 = vrot.slane %v434, 1
      %v1513 = vrot.slane %v430, 2
      %v1514 = vor.u32 %v1512, %v1513
      %v1515 = vsel %vm1456, %v1510, %v1514
      %v1516 = vrot.slane %v442, 1
      %v1517 = vrot.slane %v438, 2
      %v1518 = vor.u32 %v1516, %v1517
      %v1519 = vsel %vm1456, %v1514, %v1518
      %v1520 = vrot.slane %v450, 1
      %v1521 = vrot.slane %v446, 2
      %v1522 = vor.u32 %v1520, %v1521
      %v1523 = vsel %vm1456, %v1518, %v1522
      %v1525 = vshrl.u32 %v1226, 16
      %v1527 = vrot.slane %v1525, 1
      %v1528 = vshll.u32 %v1226, 16
      %v1530 = vrot.slane %v1528, 2
      %v1531 = vor.u32 %v1527, %v1530
      %v1532 = vsel %vm1456, %v1522, %v1531
      %v1534 = vshrl.u32 %v1227, 16
      %v1536 = vrot.slane %v1534, 1
      %v1537 = vshll.u32 %v1227, 16
      %v1539 = vrot.slane %v1537, 2
      %v1540 = vor.u32 %v1536, %v1539
      %v1541 = vsel %vm1456, %v1531, %v1540
      %v1543 = vsel %vm458, %v1463, 0
      %v1546 = vsel %vm458, %v1467, 0
      %v1549 = vsel %vm458, %v1471, 0
      %v1552 = vsel %vm458, %v1475, 0
      %v1555 = vsel %vm458, %v1479, 0
      %v1558 = vsel %vm458, %v1483, 0
      %v1561 = vsel %vm458, %v1487, 0
      %v1564 = vsel %vm458, %v1491, 0
      %v1567 = vsel %vm458, %v1495, 0
      %v1570 = vsel %vm458, %v1499, 0
      %v1573 = vsel %vm458, %v1503, 0
      %v1576 = vsel %vm458, %v1507, 0
      %v1579 = vsel %vm458, %v1511, 0
      %v1582 = vsel %vm458, %v1515, 0
      %v1585 = vsel %vm458, %v1519, 0
      %v1588 = vsel %vm458, %v1523, 0
      %v1591 = vsel %vm458, %v1532, 0
      %v1594 = vsel %vm458, %v1541, 0
      %v1597 = vsel %vm513, %v1455, 0
      %1599 = vmatprep.subr.bf16.mxu0 0
      %1600 = vmatpush1.bf16.msra.mxu0 0
      %1601 = vmatprep.subr.bf16.mxu0 0
      %1602 = vmatpush1.bf16.msra.mxu0 0
      %1603 = vmatprep.subr.bf16.mxu0 0
      %1604 = vmatpush1.bf16.msra.mxu0 0
      %1605 = vmatprep.subr.bf16.mxu0 0
      %1606 = vmatpush1.bf16.msra.mxu0 0
      %1607 = vmatprep.subr.bf16.mxu0 0
      %1608 = vmatpush1.bf16.msra.mxu0 0
      %1609 = vmatprep.subr.bf16.mxu0 0
      %1610 = vmatpush1.bf16.msra.mxu0 0
      %1611 = vmatprep.subr.bf16.mxu0 0
      %1612 = vmatpush1.bf16.msra.mxu0 0
      %1613 = vmatprep.subr.bf16.mxu0 0
      %1614 = vmatpush1.bf16.msra.mxu0 %v1597
      %1615 = vmatprep.subr.bf16.mxu0 0
      %1616 = vmatpush2.bf16.msra.mxu0 0
      %1617 = vmatprep.subr.bf16.mxu0 0
      %1618 = vmatpush2.bf16.msra.mxu0 0
      %1619 = vmatprep.subr.bf16.mxu0 0
      %1620 = vmatpush2.bf16.msra.mxu0 0
      %1621 = vmatprep.subr.bf16.mxu0 0
      %1622 = vmatpush2.bf16.msra.mxu0 0
      %1623 = vmatprep.subr.bf16.mxu0 0
      %1624 = vmatpush2.bf16.msra.mxu0 0
      %1625 = vmatprep.subr.bf16.mxu0 0
      %1626 = vmatpush2.bf16.msra.mxu0 0
      %1627 = vmatprep.subr.bf16.mxu0 0
      %1628 = vmatpush2.bf16.msra.mxu0 0
      %1629 = vmatprep.subr.bf16.mxu0 0
      %1630 = vmatpush2.bf16.msra.mxu0 0
      %1631 = vmatprep.mubr.bf16.mxu0 0
      %1632 = vmatmul.mubr.bf16.gmra.mxu0 %v1543
      %v1633 = vpop.f32.mrf.mxu0
      %v1634 = vadd.f32 0.0, %v1633
      %v1635 = vpop.f32.mrf.mxu0
      %v1636 = vpop.f32.mrf.mxu0
      %v1637 = vadd.f32 0.0, %v1636
      %v1638 = vpop.f32.mrf.mxu0
      %1639 = vmatprep.mubr.bf16.mxu0 0
      %1640 = vmatmul.mubr.bf16.gmra.mxu0 %v1546
      %v1641 = vpop.f32.mrf.mxu0
      %v1642 = vadd.f32 0.0, %v1641
      %v1643 = vpop.f32.mrf.mxu0
      %v1644 = vpop.f32.mrf.mxu0
      %v1645 = vadd.f32 0.0, %v1644
      %v1646 = vpop.f32.mrf.mxu0
      %1647 = vmatprep.mubr.bf16.mxu0 0
      %1648 = vmatmul.mubr.bf16.gmra.mxu0 %v1549
      %v1649 = vpop.f32.mrf.mxu0
      %v1650 = vadd.f32 0.0, %v1649
      %v1651 = vpop.f32.mrf.mxu0
      %v1652 = vpop.f32.mrf.mxu0
      %v1653 = vadd.f32 0.0, %v1652
      %v1654 = vpop.f32.mrf.mxu0
      %1655 = vmatprep.mubr.bf16.mxu0 0
      %1656 = vmatmul.mubr.bf16.gmra.mxu0 %v1552
      %v1657 = vpop.f32.mrf.mxu0
      %v1658 = vadd.f32 0.0, %v1657
      %v1659 = vpop.f32.mrf.mxu0
      %v1660 = vpop.f32.mrf.mxu0
      %v1661 = vadd.f32 0.0, %v1660
      %v1662 = vpop.f32.mrf.mxu0
      %1663 = vmatprep.mubr.bf16.mxu0 0
      %1664 = vmatmul.mubr.bf16.gmra.mxu0 %v1555
      %v1665 = vpop.f32.mrf.mxu0
      %v1666 = vadd.f32 0.0, %v1665
      %v1667 = vpop.f32.mrf.mxu0
      %v1668 = vpop.f32.mrf.mxu0
      %v1669 = vadd.f32 0.0, %v1668
      %v1670 = vpop.f32.mrf.mxu0
      %1671 = vmatprep.mubr.bf16.mxu0 0
      %1672 = vmatmul.mubr.bf16.gmra.mxu0 %v1558
      %v1673 = vpop.f32.mrf.mxu0
      %v1674 = vadd.f32 0.0, %v1673
      %v1675 = vpop.f32.mrf.mxu0
      %v1676 = vpop.f32.mrf.mxu0
      %v1677 = vadd.f32 0.0, %v1676
      %v1678 = vpop.f32.mrf.mxu0
      %1679 = vmatprep.mubr.bf16.mxu0 0
      %1680 = vmatmul.mubr.bf16.gmra.mxu0 %v1561
      %v1681 = vpop.f32.mrf.mxu0
      %v1682 = vadd.f32 0.0, %v1681
      %v1683 = vpop.f32.mrf.mxu0
      %v1684 = vpop.f32.mrf.mxu0
      %v1685 = vadd.f32 0.0, %v1684
      %v1686 = vpop.f32.mrf.mxu0
      %1687 = vmatprep.mubr.bf16.mxu0 0
      %1688 = vmatmul.mubr.bf16.gmra.mxu0 %v1564
      %v1689 = vpop.f32.mrf.mxu0
      %v1690 = vadd.f32 0.0, %v1689
      %v1691 = vpop.f32.mrf.mxu0
      %v1692 = vpop.f32.mrf.mxu0
      %v1693 = vadd.f32 0.0, %v1692
      %v1694 = vpop.f32.mrf.mxu0
      %1695 = vmatprep.mubr.bf16.mxu0 0
      %1696 = vmatmul.mubr.bf16.gmra.mxu0 %v1567
      %v1697 = vpop.f32.mrf.mxu0
      %v1698 = vadd.f32 0.0, %v1697
      %v1699 = vpop.f32.mrf.mxu0
      %v1700 = vpop.f32.mrf.mxu0
      %v1701 = vadd.f32 0.0, %v1700
      %v1702 = vpop.f32.mrf.mxu0
      %1703 = vmatprep.mubr.bf16.mxu0 0
      %1704 = vmatmul.mubr.bf16.gmra.mxu0 %v1570
      %v1705 = vpop.f32.mrf.mxu0
      %v1706 = vadd.f32 0.0, %v1705
      %v1707 = vpop.f32.mrf.mxu0
      %v1708 = vpop.f32.mrf.mxu0
      %v1709 = vadd.f32 0.0, %v1708
      %v1710 = vpop.f32.mrf.mxu0
      %1711 = vmatprep.mubr.bf16.mxu0 0
      %1712 = vmatmul.mubr.bf16.gmra.mxu0 %v1573
      %v1713 = vpop.f32.mrf.mxu0
      %v1714 = vadd.f32 0.0, %v1713
      %v1715 = vpop.f32.mrf.mxu0
      %v1716 = vpop.f32.mrf.mxu0
      %v1717 = vadd.f32 0.0, %v1716
      %v1718 = vpop.f32.mrf.mxu0
      %1719 = vmatprep.mubr.bf16.mxu0 0
      %1720 = vmatmul.mubr.bf16.gmra.mxu0 %v1576
      %v1721 = vpop.f32.mrf.mxu0
      %v1722 = vadd.f32 0.0, %v1721
      %v1723 = vpop.f32.mrf.mxu0
      %v1724 = vpop.f32.mrf.mxu0
      %v1725 = vadd.f32 0.0, %v1724
      %v1726 = vpop.f32.mrf.mxu0
      %1727 = vmatprep.mubr.bf16.mxu0 0
      %1728 = vmatmul.mubr.bf16.gmra.mxu0 %v1579
      %v1729 = vpop.f32.mrf.mxu0
      %v1730 = vadd.f32 0.0, %v1729
      %v1731 = vpop.f32.mrf.mxu0
      %v1732 = vpop.f32.mrf.mxu0
      %v1733 = vadd.f32 0.0, %v1732
      %v1734 = vpop.f32.mrf.mxu0
      %1735 = vmatprep.mubr.bf16.mxu0 0
      %1736 = vmatmul.mubr.bf16.gmra.mxu0 %v1582
      %v1737 = vpop.f32.mrf.mxu0
      %v1738 = vadd.f32 0.0, %v1737
      %v1739 = vpop.f32.mrf.mxu0
      %v1740 = vpop.f32.mrf.mxu0
      %v1741 = vadd.f32 0.0, %v1740
      %v1742 = vpop.f32.mrf.mxu0
      %1743 = vmatprep.mubr.bf16.mxu0 0
      %1744 = vmatmul.mubr.bf16.gmra.mxu0 %v1585
      %v1745 = vpop.f32.mrf.mxu0
      %v1746 = vadd.f32 0.0, %v1745
      %v1747 = vpop.f32.mrf.mxu0
      %v1748 = vpop.f32.mrf.mxu0
      %v1749 = vadd.f32 0.0, %v1748
      %v1750 = vpop.f32.mrf.mxu0
      %1751 = vmatprep.mubr.bf16.mxu0 0
      %1752 = vmatmul.mubr.bf16.gmra.mxu0 %v1588
      %v1753 = vpop.f32.mrf.mxu0
      %v1754 = vadd.f32 0.0, %v1753
      %v1755 = vpop.f32.mrf.mxu0
      %v1756 = vpop.f32.mrf.mxu0
      %v1757 = vadd.f32 0.0, %v1756
      %v1758 = vpop.f32.mrf.mxu0
      %1759 = vmatprep.mubr.bf16.mxu0 0
      %1760 = vmatmul.mubr.bf16.gmra.mxu0 %v1591
      %v1761 = vpop.f32.mrf.mxu0
      %v1762 = vadd.f32 0.0, %v1761
      %v1763 = vpop.f32.mrf.mxu0
      %v1764 = vpop.f32.mrf.mxu0
      %v1765 = vadd.f32 0.0, %v1764
      %v1766 = vpop.f32.mrf.mxu0
      %1767 = vmatprep.mubr.bf16.mxu0 0
      %1768 = vmatmul.mubr.bf16.gmra.mxu0 %v1594
      %v1769 = vpop.f32.mrf.mxu0
      %v1770 = vadd.f32 0.0, %v1769
      %v1771 = vpop.f32.mrf.mxu0
      %v1772 = vpop.f32.mrf.mxu0
      %v1773 = vadd.f32 0.0, %v1772
      %v1774 = vpop.f32.mrf.mxu0
      %1775 = vdwg.mxu0
      %v1776 = vadd.f32 %v1418, %v1634
      %v1777 = vadd.f32 %v1419, %v1637
      %v1778 = vadd.f32 %v1420, %v1642
      %v1779 = vadd.f32 %v1421, %v1645
      %v1780 = vadd.f32 %v1422, %v1650
      %v1781 = vadd.f32 %v1423, %v1653
      %v1782 = vadd.f32 %v1424, %v1658
      %v1783 = vadd.f32 %v1425, %v1661
      %v1784 = vadd.f32 %v1426, %v1666
      %v1785 = vadd.f32 %v1427, %v1669
      %v1786 = vadd.f32 %v1428, %v1674
      %v1787 = vadd.f32 %v1429, %v1677
      %v1788 = vadd.f32 %v1430, %v1682
      %v1789 = vadd.f32 %v1431, %v1685
      %v1790 = vadd.f32 %v1432, %v1690
      %v1791 = vadd.f32 %v1433, %v1693
      %v1792 = vadd.f32 %v1434, %v1698
      %v1793 = vadd.f32 %v1435, %v1701
      %v1794 = vadd.f32 %v1436, %v1706
      %v1795 = vadd.f32 %v1437, %v1709
      %v1796 = vadd.f32 %v1438, %v1714
      %v1797 = vadd.f32 %v1439, %v1717
      %v1798 = vadd.f32 %v1440, %v1722
      %v1799 = vadd.f32 %v1441, %v1725
      %v1800 = vadd.f32 %v1442, %v1730
      %v1801 = vadd.f32 %v1443, %v1733
      %v1802 = vadd.f32 %v1444, %v1738
      %v1803 = vadd.f32 %v1445, %v1741
      %v1804 = vadd.f32 %v1446, %v1746
      %v1805 = vadd.f32 %v1447, %v1749
      %v1806 = vadd.f32 %v1448, %v1754
      %v1807 = vadd.f32 %v1449, %v1757
      %v1808 = vadd.f32 %v1450, %v1762
      %v1809 = vadd.f32 %v1451, %v1765
      %v1810 = vadd.f32 %v1452, %v1770
      %v1811 = vadd.f32 %v1453, %v1773
      %s1812 = scalar_lea.vmem %s1, 20
      %v1813 = vld [vmem:[%s1812] sm:$0xf]
      %vm1814 = vcmask 1045504
      %v1815 = vrot.slane %v291, 2
      %v1816 = vrot.slane %v292, 2
      %v1817 = vsel %vm1814, %v1815, %v1816
      %v1818 = vrot.slane %v293, 2
      %v1819 = vsel %vm1814, %v1816, %v1818
      %v1820 = vrot.slane %v294, 2
      %v1821 = vsel %vm1814, %v1818, %v1820
      %v1822 = vrot.slane %v295, 2
      %v1823 = vsel %vm1814, %v1820, %v1822
      %v1824 = vrot.slane %v296, 2
      %v1825 = vsel %vm1814, %v1822, %v1824
      %v1826 = vrot.slane %v297, 2
      %v1827 = vsel %vm1814, %v1824, %v1826
      %v1828 = vrot.slane %v298, 2
      %v1829 = vsel %vm1814, %v1826, %v1828
      %v1830 = vrot.slane %v299, 2
      %v1831 = vsel %vm1814, %v1828, %v1830
      %v1832 = vrot.slane %v300, 2
      %v1833 = vsel %vm1814, %v1830, %v1832
      %v1834 = vrot.slane %v301, 2
      %v1835 = vsel %vm1814, %v1832, %v1834
      %v1836 = vrot.slane %v302, 2
      %v1837 = vsel %vm1814, %v1834, %v1836
      %v1838 = vrot.slane %v303, 2
      %v1839 = vsel %vm1814, %v1836, %v1838
      %v1840 = vrot.slane %v304, 2
      %v1841 = vsel %vm1814, %v1838, %v1840
      %v1842 = vrot.slane %v305, 2
      %v1843 = vsel %vm1814, %v1840, %v1842
      %v1844 = vrot.slane %v306, 2
      %v1845 = vsel %vm1814, %v1842, %v1844
      %v1846 = vrot.slane %v307, 2
      %v1847 = vsel %vm1814, %v1844, %v1846
      %v1848 = vrot.slane %v1226, 2
      %v1849 = vsel %vm1814, %v1846, %v1848
      %v1850 = vrot.slane %v1227, 2
      %v1851 = vsel %vm1814, %v1848, %v1850
      %v1853 = vsel %vm458, %v1817, 0
      %v1856 = vsel %vm458, %v1819, 0
      %v1859 = vsel %vm458, %v1821, 0
      %v1862 = vsel %vm458, %v1823, 0
      %v1865 = vsel %vm458, %v1825, 0
      %v1868 = vsel %vm458, %v1827, 0
      %v1871 = vsel %vm458, %v1829, 0
      %v1874 = vsel %vm458, %v1831, 0
      %v1877 = vsel %vm458, %v1833, 0
      %v1880 = vsel %vm458, %v1835, 0
      %v1883 = vsel %vm458, %v1837, 0
      %v1886 = vsel %vm458, %v1839, 0
      %v1889 = vsel %vm458, %v1841, 0
      %v1892 = vsel %vm458, %v1843, 0
      %v1895 = vsel %vm458, %v1845, 0
      %v1898 = vsel %vm458, %v1847, 0
      %v1901 = vsel %vm458, %v1849, 0
      %v1904 = vsel %vm458, %v1851, 0
      %v1907 = vsel %vm513, %v1813, 0
      %1909 = vmatprep.subr.bf16.mxu0 0
      %1910 = vmatpush1.bf16.msra.mxu0 0
      %1911 = vmatprep.subr.bf16.mxu0 0
      %1912 = vmatpush1.bf16.msra.mxu0 0
      %1913 = vmatprep.subr.bf16.mxu0 0
      %1914 = vmatpush1.bf16.msra.mxu0 0
      %1915 = vmatprep.subr.bf16.mxu0 0
      %1916 = vmatpush1.bf16.msra.mxu0 0
      %1917 = vmatprep.subr.bf16.mxu0 0
      %1918 = vmatpush1.bf16.msra.mxu0 0
      %1919 = vmatprep.subr.bf16.mxu0 0
      %1920 = vmatpush1.bf16.msra.mxu0 0
      %1921 = vmatprep.subr.bf16.mxu0 0
      %1922 = vmatpush1.bf16.msra.mxu0 0
      %1923 = vmatprep.subr.bf16.mxu0 0
      %1924 = vmatpush1.bf16.msra.mxu0 %v1907
      %1925 = vmatprep.subr.bf16.mxu0 0
      %1926 = vmatpush2.bf16.msra.mxu0 0
      %1927 = vmatprep.subr.bf16.mxu0 0
      %1928 = vmatpush2.bf16.msra.mxu0 0
      %1929 = vmatprep.subr.bf16.mxu0 0
      %1930 = vmatpush2.bf16.msra.mxu0 0
      %1931 = vmatprep.subr.bf16.mxu0 0
      %1932 = vmatpush2.bf16.msra.mxu0 0
      %1933 = vmatprep.subr.bf16.mxu0 0
      %1934 = vmatpush2.bf16.msra.mxu0 0
      %1935 = vmatprep.subr.bf16.mxu0 0
      %1936 = vmatpush2.bf16.msra.mxu0 0
      %1937 = vmatprep.subr.bf16.mxu0 0
      %1938 = vmatpush2.bf16.msra.mxu0 0
      %1939 = vmatprep.subr.bf16.mxu0 0
      %1940 = vmatpush2.bf16.msra.mxu0 0
      %1941 = vmatprep.mubr.bf16.mxu0 0
      %1942 = vmatmul.mubr.bf16.gmra.mxu0 %v1853
      %v1943 = vpop.f32.mrf.mxu0
      %v1944 = vadd.f32 0.0, %v1943
      %v1945 = vpop.f32.mrf.mxu0
      %v1946 = vpop.f32.mrf.mxu0
      %v1947 = vadd.f32 0.0, %v1946
      %v1948 = vpop.f32.mrf.mxu0
      %1949 = vmatprep.mubr.bf16.mxu0 0
      %1950 = vmatmul.mubr.bf16.gmra.mxu0 %v1856
      %v1951 = vpop.f32.mrf.mxu0
      %v1952 = vadd.f32 0.0, %v1951
      %v1953 = vpop.f32.mrf.mxu0
      %v1954 = vpop.f32.mrf.mxu0
      %v1955 = vadd.f32 0.0, %v1954
      %v1956 = vpop.f32.mrf.mxu0
      %1957 = vmatprep.mubr.bf16.mxu0 0
      %1958 = vmatmul.mubr.bf16.gmra.mxu0 %v1859
      %v1959 = vpop.f32.mrf.mxu0
      %v1960 = vadd.f32 0.0, %v1959
      %v1961 = vpop.f32.mrf.mxu0
      %v1962 = vpop.f32.mrf.mxu0
      %v1963 = vadd.f32 0.0, %v1962
      %v1964 = vpop.f32.mrf.mxu0
      %1965 = vmatprep.mubr.bf16.mxu0 0
      %1966 = vmatmul.mubr.bf16.gmra.mxu0 %v1862
      %v1967 = vpop.f32.mrf.mxu0
      %v1968 = vadd.f32 0.0, %v1967
      %v1969 = vpop.f32.mrf.mxu0
      %v1970 = vpop.f32.mrf.mxu0
      %v1971 = vadd.f32 0.0, %v1970
      %v1972 = vpop.f32.mrf.mxu0
      %1973 = vmatprep.mubr.bf16.mxu0 0
      %1974 = vmatmul.mubr.bf16.gmra.mxu0 %v1865
      %v1975 = vpop.f32.mrf.mxu0
      %v1976 = vadd.f32 0.0, %v1975
      %v1977 = vpop.f32.mrf.mxu0
      %v1978 = vpop.f32.mrf.mxu0
      %v1979 = vadd.f32 0.0, %v1978
      %v1980 = vpop.f32.mrf.mxu0
      %1981 = vmatprep.mubr.bf16.mxu0 0
      %1982 = vmatmul.mubr.bf16.gmra.mxu0 %v1868
      %v1983 = vpop.f32.mrf.mxu0
      %v1984 = vadd.f32 0.0, %v1983
      %v1985 = vpop.f32.mrf.mxu0
      %v1986 = vpop.f32.mrf.mxu0
      %v1987 = vadd.f32 0.0, %v1986
      %v1988 = vpop.f32.mrf.mxu0
      %1989 = vmatprep.mubr.bf16.mxu0 0
      %1990 = vmatmul.mubr.bf16.gmra.mxu0 %v1871
      %v1991 = vpop.f32.mrf.mxu0
      %v1992 = vadd.f32 0.0, %v1991
      %v1993 = vpop.f32.mrf.mxu0
      %v1994 = vpop.f32.mrf.mxu0
      %v1995 = vadd.f32 0.0, %v1994
      %v1996 = vpop.f32.mrf.mxu0
      %1997 = vmatprep.mubr.bf16.mxu0 0
      %1998 = vmatmul.mubr.bf16.gmra.mxu0 %v1874
      %v1999 = vpop.f32.mrf.mxu0
      %v2000 = vadd.f32 0.0, %v1999
      %v2001 = vpop.f32.mrf.mxu0
      %v2002 = vpop.f32.mrf.mxu0
      %v2003 = vadd.f32 0.0, %v2002
      %v2004 = vpop.f32.mrf.mxu0
      %2005 = vmatprep.mubr.bf16.mxu0 0
      %2006 = vmatmul.mubr.bf16.gmra.mxu0 %v1877
      %v2007 = vpop.f32.mrf.mxu0
      %v2008 = vadd.f32 0.0, %v2007
      %v2009 = vpop.f32.mrf.mxu0
      %v2010 = vpop.f32.mrf.mxu0
      %v2011 = vadd.f32 0.0, %v2010
      %v2012 = vpop.f32.mrf.mxu0
      %2013 = vmatprep.mubr.bf16.mxu0 0
      %2014 = vmatmul.mubr.bf16.gmra.mxu0 %v1880
      %v2015 = vpop.f32.mrf.mxu0
      %v2016 = vadd.f32 0.0, %v2015
      %v2017 = vpop.f32.mrf.mxu0
      %v2018 = vpop.f32.mrf.mxu0
      %v2019 = vadd.f32 0.0, %v2018
      %v2020 = vpop.f32.mrf.mxu0
      %2021 = vmatprep.mubr.bf16.mxu0 0
      %2022 = vmatmul.mubr.bf16.gmra.mxu0 %v1883
      %v2023 = vpop.f32.mrf.mxu0
      %v2024 = vadd.f32 0.0, %v2023
      %v2025 = vpop.f32.mrf.mxu0
      %v2026 = vpop.f32.mrf.mxu0
      %v2027 = vadd.f32 0.0, %v2026
      %v2028 = vpop.f32.mrf.mxu0
      %2029 = vmatprep.mubr.bf16.mxu0 0
      %2030 = vmatmul.mubr.bf16.gmra.mxu0 %v1886
      %v2031 = vpop.f32.mrf.mxu0
      %v2032 = vadd.f32 0.0, %v2031
      %v2033 = vpop.f32.mrf.mxu0
      %v2034 = vpop.f32.mrf.mxu0
      %v2035 = vadd.f32 0.0, %v2034
      %v2036 = vpop.f32.mrf.mxu0
      %2037 = vmatprep.mubr.bf16.mxu0 0
      %2038 = vmatmul.mubr.bf16.gmra.mxu0 %v1889
      %v2039 = vpop.f32.mrf.mxu0
      %v2040 = vadd.f32 0.0, %v2039
      %v2041 = vpop.f32.mrf.mxu0
      %v2042 = vpop.f32.mrf.mxu0
      %v2043 = vadd.f32 0.0, %v2042
      %v2044 = vpop.f32.mrf.mxu0
      %2045 = vmatprep.mubr.bf16.mxu0 0
      %2046 = vmatmul.mubr.bf16.gmra.mxu0 %v1892
      %v2047 = vpop.f32.mrf.mxu0
      %v2048 = vadd.f32 0.0, %v2047
      %v2049 = vpop.f32.mrf.mxu0
      %v2050 = vpop.f32.mrf.mxu0
      %v2051 = vadd.f32 0.0, %v2050
      %v2052 = vpop.f32.mrf.mxu0
      %2053 = vmatprep.mubr.bf16.mxu0 0
      %2054 = vmatmul.mubr.bf16.gmra.mxu0 %v1895
      %v2055 = vpop.f32.mrf.mxu0
      %v2056 = vadd.f32 0.0, %v2055
      %v2057 = vpop.f32.mrf.mxu0
      %v2058 = vpop.f32.mrf.mxu0
      %v2059 = vadd.f32 0.0, %v2058
      %v2060 = vpop.f32.mrf.mxu0
      %2061 = vmatprep.mubr.bf16.mxu0 0
      %2062 = vmatmul.mubr.bf16.gmra.mxu0 %v1898
      %v2063 = vpop.f32.mrf.mxu0
      %v2064 = vadd.f32 0.0, %v2063
      %v2065 = vpop.f32.mrf.mxu0
      %v2066 = vpop.f32.mrf.mxu0
      %v2067 = vadd.f32 0.0, %v2066
      %v2068 = vpop.f32.mrf.mxu0
      %2069 = vmatprep.mubr.bf16.mxu0 0
      %2070 = vmatmul.mubr.bf16.gmra.mxu0 %v1901
      %v2071 = vpop.f32.mrf.mxu0
      %v2072 = vadd.f32 0.0, %v2071
      %v2073 = vpop.f32.mrf.mxu0
      %v2074 = vpop.f32.mrf.mxu0
      %v2075 = vadd.f32 0.0, %v2074
      %v2076 = vpop.f32.mrf.mxu0
      %2077 = vmatprep.mubr.bf16.mxu0 0
      %2078 = vmatmul.mubr.bf16.gmra.mxu0 %v1904
      %v2079 = vpop.f32.mrf.mxu0
      %v2080 = vadd.f32 0.0, %v2079
      %v2081 = vpop.f32.mrf.mxu0
      %v2082 = vpop.f32.mrf.mxu0
      %v2083 = vadd.f32 0.0, %v2082
      %v2084 = vpop.f32.mrf.mxu0
      %2085 = vdwg.mxu0
      %v2086 = vadd.f32 %v1776, %v1944
      %v2087 = vadd.f32 %v1777, %v1947
      %v2088 = vadd.f32 %v1778, %v1952
      %v2089 = vadd.f32 %v1779, %v1955
      %v2090 = vadd.f32 %v1780, %v1960
      %v2091 = vadd.f32 %v1781, %v1963
      %v2092 = vadd.f32 %v1782, %v1968
      %v2093 = vadd.f32 %v1783, %v1971
      %v2094 = vadd.f32 %v1784, %v1976
      %v2095 = vadd.f32 %v1785, %v1979
      %v2096 = vadd.f32 %v1786, %v1984
      %v2097 = vadd.f32 %v1787, %v1987
      %v2098 = vadd.f32 %v1788, %v1992
      %v2099 = vadd.f32 %v1789, %v1995
      %v2100 = vadd.f32 %v1790, %v2000
      %v2101 = vadd.f32 %v1791, %v2003
      %v2102 = vadd.f32 %v1792, %v2008
      %v2103 = vadd.f32 %v1793, %v2011
      %v2104 = vadd.f32 %v1794, %v2016
      %v2105 = vadd.f32 %v1795, %v2019
      %v2106 = vadd.f32 %v1796, %v2024
      %v2107 = vadd.f32 %v1797, %v2027
      %v2108 = vadd.f32 %v1798, %v2032
      %v2109 = vadd.f32 %v1799, %v2035
      %v2110 = vadd.f32 %v1800, %v2040
      %v2111 = vadd.f32 %v1801, %v2043
      %v2112 = vadd.f32 %v1802, %v2048
      %v2113 = vadd.f32 %v1803, %v2051
      %v2114 = vadd.f32 %v1804, %v2056
      %v2115 = vadd.f32 %v1805, %v2059
      %v2116 = vadd.f32 %v1806, %v2064
      %v2117 = vadd.f32 %v1807, %v2067
      %v2118 = vadd.f32 %v1808, %v2072
      %v2119 = vadd.f32 %v1809, %v2075
      %v2120 = vadd.f32 %v1810, %v2080
      %v2121 = vadd.f32 %v1811, %v2083
      %s2122 = scalar_lea.vmem %s1, 24
      %v2123 = vld [vmem:[%s2122] sm:$0xf]
      %v2126 = vunpack.c.l.b16 %v211
      %v2127 = vunpack.c.l.b16 %v212
      %v2128 = vpack.c.b16 %v2126, %v1225
      %v2129 = vpack.c.b16 %v2127, %v2127
      %v2130 = vrot.slane %v2128, 2
      %v2131 = vsel %vm1814, %v1848, %v2130
      %v2132 = vrot.slane %v2129, 2
      %v2133 = vsel %vm1814, %v2130, %v2132
      %v2135 = vsel %vm458, %v2131, 0
      %v2138 = vsel %vm458, %v2133, 0
      %v2141 = vsel %vm513, %v2123, 0
      %2143 = vmatprep.subr.bf16.mxu0 0
      %2144 = vmatpush1.bf16.msra.mxu0 0
      %2145 = vmatprep.subr.bf16.mxu0 0
      %2146 = vmatpush1.bf16.msra.mxu0 0
      %2147 = vmatprep.subr.bf16.mxu0 0
      %2148 = vmatpush1.bf16.msra.mxu0 0
      %2149 = vmatprep.subr.bf16.mxu0 0
      %2150 = vmatpush1.bf16.msra.mxu0 0
      %2151 = vmatprep.subr.bf16.mxu0 0
      %2152 = vmatpush1.bf16.msra.mxu0 0
      %2153 = vmatprep.subr.bf16.mxu0 0
      %2154 = vmatpush1.bf16.msra.mxu0 0
      %2155 = vmatprep.subr.bf16.mxu0 0
      %2156 = vmatpush1.bf16.msra.mxu0 0
      %2157 = vmatprep.subr.bf16.mxu0 0
      %2158 = vmatpush1.bf16.msra.mxu0 %v2141
      %2159 = vmatprep.subr.bf16.mxu0 0
      %2160 = vmatpush2.bf16.msra.mxu0 0
      %2161 = vmatprep.subr.bf16.mxu0 0
      %2162 = vmatpush2.bf16.msra.mxu0 0
      %2163 = vmatprep.subr.bf16.mxu0 0
      %2164 = vmatpush2.bf16.msra.mxu0 0
      %2165 = vmatprep.subr.bf16.mxu0 0
      %2166 = vmatpush2.bf16.msra.mxu0 0
      %2167 = vmatprep.subr.bf16.mxu0 0
      %2168 = vmatpush2.bf16.msra.mxu0 0
      %2169 = vmatprep.subr.bf16.mxu0 0
      %2170 = vmatpush2.bf16.msra.mxu0 0
      %2171 = vmatprep.subr.bf16.mxu0 0
      %2172 = vmatpush2.bf16.msra.mxu0 0
      %2173 = vmatprep.subr.bf16.mxu0 0
      %2174 = vmatpush2.bf16.msra.mxu0 0
      %2175 = vmatprep.mubr.bf16.mxu0 0
      %2176 = vmatmul.mubr.bf16.gmra.mxu0 %v1856
      %v2177 = vpop.f32.mrf.mxu0
      %v2178 = vadd.f32 0.0, %v2177
      %v2179 = vpop.f32.mrf.mxu0
      %v2180 = vpop.f32.mrf.mxu0
      %v2181 = vadd.f32 0.0, %v2180
      %v2182 = vpop.f32.mrf.mxu0
      %2183 = vmatprep.mubr.bf16.mxu0 0
      %2184 = vmatmul.mubr.bf16.gmra.mxu0 %v1859
      %v2185 = vpop.f32.mrf.mxu0
      %v2186 = vadd.f32 0.0, %v2185
      %v2187 = vpop.f32.mrf.mxu0
      %v2188 = vpop.f32.mrf.mxu0
      %v2189 = vadd.f32 0.0, %v2188
      %v2190 = vpop.f32.mrf.mxu0
      %2191 = vmatprep.mubr.bf16.mxu0 0
      %2192 = vmatmul.mubr.bf16.gmra.mxu0 %v1862
      %v2193 = vpop.f32.mrf.mxu0
      %v2194 = vadd.f32 0.0, %v2193
      %v2195 = vpop.f32.mrf.mxu0
      %v2196 = vpop.f32.mrf.mxu0
      %v2197 = vadd.f32 0.0, %v2196
      %v2198 = vpop.f32.mrf.mxu0
      %2199 = vmatprep.mubr.bf16.mxu0 0
      %2200 = vmatmul.mubr.bf16.gmra.mxu0 %v1865
      %v2201 = vpop.f32.mrf.mxu0
      %v2202 = vadd.f32 0.0, %v2201
      %v2203 = vpop.f32.mrf.mxu0
      %v2204 = vpop.f32.mrf.mxu0
      %v2205 = vadd.f32 0.0, %v2204
      %v2206 = vpop.f32.mrf.mxu0
      %2207 = vmatprep.mubr.bf16.mxu0 0
      %2208 = vmatmul.mubr.bf16.gmra.mxu0 %v1868
      %v2209 = vpop.f32.mrf.mxu0
      %v2210 = vadd.f32 0.0, %v2209
      %v2211 = vpop.f32.mrf.mxu0
      %v2212 = vpop.f32.mrf.mxu0
      %v2213 = vadd.f32 0.0, %v2212
      %v2214 = vpop.f32.mrf.mxu0
      %2215 = vmatprep.mubr.bf16.mxu0 0
      %2216 = vmatmul.mubr.bf16.gmra.mxu0 %v1871
      %v2217 = vpop.f32.mrf.mxu0
      %v2218 = vadd.f32 0.0, %v2217
      %v2219 = vpop.f32.mrf.mxu0
      %v2220 = vpop.f32.mrf.mxu0
      %v2221 = vadd.f32 0.0, %v2220
      %v2222 = vpop.f32.mrf.mxu0
      %2223 = vmatprep.mubr.bf16.mxu0 0
      %2224 = vmatmul.mubr.bf16.gmra.mxu0 %v1874
      %v2225 = vpop.f32.mrf.mxu0
      %v2226 = vadd.f32 0.0, %v2225
      %v2227 = vpop.f32.mrf.mxu0
      %v2228 = vpop.f32.mrf.mxu0
      %v2229 = vadd.f32 0.0, %v2228
      %v2230 = vpop.f32.mrf.mxu0
      %2231 = vmatprep.mubr.bf16.mxu0 0
      %2232 = vmatmul.mubr.bf16.gmra.mxu0 %v1877
      %v2233 = vpop.f32.mrf.mxu0
      %v2234 = vadd.f32 0.0, %v2233
      %v2235 = vpop.f32.mrf.mxu0
      %v2236 = vpop.f32.mrf.mxu0
      %v2237 = vadd.f32 0.0, %v2236
      %v2238 = vpop.f32.mrf.mxu0
      %2239 = vmatprep.mubr.bf16.mxu0 0
      %2240 = vmatmul.mubr.bf16.gmra.mxu0 %v1880
      %v2241 = vpop.f32.mrf.mxu0
      %v2242 = vadd.f32 0.0, %v2241
      %v2243 = vpop.f32.mrf.mxu0
      %v2244 = vpop.f32.mrf.mxu0
      %v2245 = vadd.f32 0.0, %v2244
      %v2246 = vpop.f32.mrf.mxu0
      %2247 = vmatprep.mubr.bf16.mxu0 0
      %2248 = vmatmul.mubr.bf16.gmra.mxu0 %v1883
      %v2249 = vpop.f32.mrf.mxu0
      %v2250 = vadd.f32 0.0, %v2249
      %v2251 = vpop.f32.mrf.mxu0
      %v2252 = vpop.f32.mrf.mxu0
      %v2253 = vadd.f32 0.0, %v2252
      %v2254 = vpop.f32.mrf.mxu0
      %2255 = vmatprep.mubr.bf16.mxu0 0
      %2256 = vmatmul.mubr.bf16.gmra.mxu0 %v1886
      %v2257 = vpop.f32.mrf.mxu0
      %v2258 = vadd.f32 0.0, %v2257
      %v2259 = vpop.f32.mrf.mxu0
      %v2260 = vpop.f32.mrf.mxu0
      %v2261 = vadd.f32 0.0, %v2260
      %v2262 = vpop.f32.mrf.mxu0
      %2263 = vmatprep.mubr.bf16.mxu0 0
      %2264 = vmatmul.mubr.bf16.gmra.mxu0 %v1889
      %v2265 = vpop.f32.mrf.mxu0
      %v2266 = vadd.f32 0.0, %v2265
      %v2267 = vpop.f32.mrf.mxu0
      %v2268 = vpop.f32.mrf.mxu0
      %v2269 = vadd.f32 0.0, %v2268
      %v2270 = vpop.f32.mrf.mxu0
      %2271 = vmatprep.mubr.bf16.mxu0 0
      %2272 = vmatmul.mubr.bf16.gmra.mxu0 %v1892
      %v2273 = vpop.f32.mrf.mxu0
      %v2274 = vadd.f32 0.0, %v2273
      %v2275 = vpop.f32.mrf.mxu0
      %v2276 = vpop.f32.mrf.mxu0
      %v2277 = vadd.f32 0.0, %v2276
      %v2278 = vpop.f32.mrf.mxu0
      %2279 = vmatprep.mubr.bf16.mxu0 0
      %2280 = vmatmul.mubr.bf16.gmra.mxu0 %v1895
      %v2281 = vpop.f32.mrf.mxu0
      %v2282 = vadd.f32 0.0, %v2281
      %v2283 = vpop.f32.mrf.mxu0
      %v2284 = vpop.f32.mrf.mxu0
      %v2285 = vadd.f32 0.0, %v2284
      %v2286 = vpop.f32.mrf.mxu0
      %2287 = vmatprep.mubr.bf16.mxu0 0
      %2288 = vmatmul.mubr.bf16.gmra.mxu0 %v1898
      %v2289 = vpop.f32.mrf.mxu0
      %v2290 = vadd.f32 0.0, %v2289
      %v2291 = vpop.f32.mrf.mxu0
      %v2292 = vpop.f32.mrf.mxu0
      %v2293 = vadd.f32 0.0, %v2292
      %v2294 = vpop.f32.mrf.mxu0
      %2295 = vmatprep.mubr.bf16.mxu0 0
      %2296 = vmatmul.mubr.bf16.gmra.mxu0 %v1901
      %v2297 = vpop.f32.mrf.mxu0
      %v2298 = vadd.f32 0.0, %v2297
      %v2299 = vpop.f32.mrf.mxu0
      %v2300 = vpop.f32.mrf.mxu0
      %v2301 = vadd.f32 0.0, %v2300
      %v2302 = vpop.f32.mrf.mxu0
      %2303 = vmatprep.mubr.bf16.mxu0 0
      %2304 = vmatmul.mubr.bf16.gmra.mxu0 %v2135
      %v2305 = vpop.f32.mrf.mxu0
      %v2306 = vadd.f32 0.0, %v2305
      %v2307 = vpop.f32.mrf.mxu0
      %v2308 = vpop.f32.mrf.mxu0
      %v2309 = vadd.f32 0.0, %v2308
      %v2310 = vpop.f32.mrf.mxu0
      %2311 = vmatprep.mubr.bf16.mxu0 0
      %2312 = vmatmul.mubr.bf16.gmra.mxu0 %v2138
      %v2313 = vpop.f32.mrf.mxu0
      %v2314 = vadd.f32 0.0, %v2313
      %v2315 = vpop.f32.mrf.mxu0
      %v2316 = vpop.f32.mrf.mxu0
      %v2317 = vadd.f32 0.0, %v2316
      %v2318 = vpop.f32.mrf.mxu0
      %2319 = vdwg.mxu0
      %v2320 = vadd.f32 %v2086, %v2178
      %v2321 = vadd.f32 %v2087, %v2181
      %v2322 = vadd.f32 %v2088, %v2186
      %v2323 = vadd.f32 %v2089, %v2189
      %v2324 = vadd.f32 %v2090, %v2194
      %v2325 = vadd.f32 %v2091, %v2197
      %v2326 = vadd.f32 %v2092, %v2202
      %v2327 = vadd.f32 %v2093, %v2205
      %v2328 = vadd.f32 %v2094, %v2210
      %v2329 = vadd.f32 %v2095, %v2213
      %v2330 = vadd.f32 %v2096, %v2218
      %v2331 = vadd.f32 %v2097, %v2221
      %v2332 = vadd.f32 %v2098, %v2226
      %v2333 = vadd.f32 %v2099, %v2229
      %v2334 = vadd.f32 %v2100, %v2234
      %v2335 = vadd.f32 %v2101, %v2237
      %v2336 = vadd.f32 %v2102, %v2242
      %v2337 = vadd.f32 %v2103, %v2245
      %v2338 = vadd.f32 %v2104, %v2250
      %v2339 = vadd.f32 %v2105, %v2253
      %v2340 = vadd.f32 %v2106, %v2258
      %v2341 = vadd.f32 %v2107, %v2261
      %v2342 = vadd.f32 %v2108, %v2266
      %v2343 = vadd.f32 %v2109, %v2269
      %v2344 = vadd.f32 %v2110, %v2274
      %v2345 = vadd.f32 %v2111, %v2277
      %v2346 = vadd.f32 %v2112, %v2282
      %v2347 = vadd.f32 %v2113, %v2285
      %v2348 = vadd.f32 %v2114, %v2290
      %v2349 = vadd.f32 %v2115, %v2293
      %v2350 = vadd.f32 %v2116, %v2298
      %v2351 = vadd.f32 %v2117, %v2301
      %v2352 = vadd.f32 %v2118, %v2306
      %v2353 = vadd.f32 %v2119, %v2309
      %v2354 = vadd.f32 %v2120, %v2314
      %v2355 = vadd.f32 %v2121, %v2317
      %s2356 = scalar_lea.vmem %s1, 28
      %v2357 = vld [vmem:[%s2356] sm:$0xf]
      %vm2358 = vsmask.f32 5376
      %v2359 = vrot.slane %v330, 2
      %v2360 = vrot.slane %v326, 3
      %v2361 = vor.u32 %v2359, %v2360
      %v2362 = vrot.slane %v338, 2
      %v2363 = vrot.slane %v334, 3
      %v2364 = vor.u32 %v2362, %v2363
      %v2365 = vsel %vm2358, %v2361, %v2364
      %v2366 = vrot.slane %v346, 2
      %v2367 = vrot.slane %v342, 3
      %v2368 = vor.u32 %v2366, %v2367
      %v2369 = vsel %vm2358, %v2364, %v2368
      %v2370 = vrot.slane %v354, 2
      %v2371 = vrot.slane %v350, 3
      %v2372 = vor.u32 %v2370, %v2371
      %v2373 = vsel %vm2358, %v2368, %v2372
      %v2374 = vrot.slane %v362, 2
      %v2375 = vrot.slane %v358, 3
      %v2376 = vor.u32 %v2374, %v2375
      %v2377 = vsel %vm2358, %v2372, %v2376
      %v2378 = vrot.slane %v370, 2
      %v2379 = vrot.slane %v366, 3
      %v2380 = vor.u32 %v2378, %v2379
      %v2381 = vsel %vm2358, %v2376, %v2380
      %v2382 = vrot.slane %v378, 2
      %v2383 = vrot.slane %v374, 3
      %v2384 = vor.u32 %v2382, %v2383
      %v2385 = vsel %vm2358, %v2380, %v2384
      %v2386 = vrot.slane %v386, 2
      %v2387 = vrot.slane %v382, 3
      %v2388 = vor.u32 %v2386, %v2387
      %v2389 = vsel %vm2358, %v2384, %v2388
      %v2390 = vrot.slane %v394, 2
      %v2391 = vrot.slane %v390, 3
      %v2392 = vor.u32 %v2390, %v2391
      %v2393 = vsel %vm2358, %v2388, %v2392
      %v2394 = vrot.slane %v402, 2
      %v2395 = vrot.slane %v398, 3
      %v2396 = vor.u32 %v2394, %v2395
      %v2397 = vsel %vm2358, %v2392, %v2396
      %v2398 = vrot.slane %v410, 2
      %v2399 = vrot.slane %v406, 3
      %v2400 = vor.u32 %v2398, %v2399
      %v2401 = vsel %vm2358, %v2396, %v2400
      %v2402 = vrot.slane %v418, 2
      %v2403 = vrot.slane %v414, 3
      %v2404 = vor.u32 %v2402, %v2403
      %v2405 = vsel %vm2358, %v2400, %v2404
      %v2406 = vrot.slane %v426, 2
      %v2407 = vrot.slane %v422, 3
      %v2408 = vor.u32 %v2406, %v2407
      %v2409 = vsel %vm2358, %v2404, %v2408
      %v2410 = vrot.slane %v434, 2
      %v2411 = vrot.slane %v430, 3
      %v2412 = vor.u32 %v2410, %v2411
      %v2413 = vsel %vm2358, %v2408, %v2412
      %v2414 = vrot.slane %v442, 2
      %v2415 = vrot.slane %v438, 3
      %v2416 = vor.u32 %v2414, %v2415
      %v2417 = vsel %vm2358, %v2412, %v2416
      %v2418 = vrot.slane %v450, 2
      %v2419 = vrot.slane %v446, 3
      %v2420 = vor.u32 %v2418, %v2419
      %v2421 = vsel %vm2358, %v2416, %v2420
      %v2422 = vrot.slane %v1525, 2
      %v2423 = vrot.slane %v1528, 3
      %v2424 = vor.u32 %v2422, %v2423
      %v2425 = vsel %vm2358, %v2420, %v2424
      %v2427 = vshrl.u32 %v2128, 16
      %v2429 = vrot.slane %v2427, 2
      %v2430 = vshll.u32 %v2128, 16
      %v2432 = vrot.slane %v2430, 3
      %v2433 = vor.u32 %v2429, %v2432
      %v2434 = vsel %vm2358, %v2424, %v2433
      %v2436 = vshrl.u32 %v2129, 16
      %v2438 = vrot.slane %v2436, 2
      %v2439 = vshll.u32 %v2129, 16
      %v2441 = vrot.slane %v2439, 3
      %v2442 = vor.u32 %v2438, %v2441
      %v2443 = vsel %vm2358, %v2433, %v2442
      %v2445 = vsel %vm458, %v2365, 0
      %v2448 = vsel %vm458, %v2369, 0
      %v2451 = vsel %vm458, %v2373, 0
      %v2454 = vsel %vm458, %v2377, 0
      %v2457 = vsel %vm458, %v2381, 0
      %v2460 = vsel %vm458, %v2385, 0
      %v2463 = vsel %vm458, %v2389, 0
      %v2466 = vsel %vm458, %v2393, 0
      %v2469 = vsel %vm458, %v2397, 0
      %v2472 = vsel %vm458, %v2401, 0
      %v2475 = vsel %vm458, %v2405, 0
      %v2478 = vsel %vm458, %v2409, 0
      %v2481 = vsel %vm458, %v2413, 0
      %v2484 = vsel %vm458, %v2417, 0
      %v2487 = vsel %vm458, %v2421, 0
      %v2490 = vsel %vm458, %v2425, 0
      %v2493 = vsel %vm458, %v2434, 0
      %v2496 = vsel %vm458, %v2443, 0
      %v2499 = vsel %vm513, %v2357, 0
      %2501 = vmatprep.subr.bf16.mxu0 0
      %2502 = vmatpush1.bf16.msra.mxu0 0
      %2503 = vmatprep.subr.bf16.mxu0 0
      %2504 = vmatpush1.bf16.msra.mxu0 0
      %2505 = vmatprep.subr.bf16.mxu0 0
      %2506 = vmatpush1.bf16.msra.mxu0 0
      %2507 = vmatprep.subr.bf16.mxu0 0
      %2508 = vmatpush1.bf16.msra.mxu0 0
      %2509 = vmatprep.subr.bf16.mxu0 0
      %2510 = vmatpush1.bf16.msra.mxu0 0
      %2511 = vmatprep.subr.bf16.mxu0 0
      %2512 = vmatpush1.bf16.msra.mxu0 0
      %2513 = vmatprep.subr.bf16.mxu0 0
      %2514 = vmatpush1.bf16.msra.mxu0 0
      %2515 = vmatprep.subr.bf16.mxu0 0
      %2516 = vmatpush1.bf16.msra.mxu0 %v2499
      %2517 = vmatprep.subr.bf16.mxu0 0
      %2518 = vmatpush2.bf16.msra.mxu0 0
      %2519 = vmatprep.subr.bf16.mxu0 0
      %2520 = vmatpush2.bf16.msra.mxu0 0
      %2521 = vmatprep.subr.bf16.mxu0 0
      %2522 = vmatpush2.bf16.msra.mxu0 0
      %2523 = vmatprep.subr.bf16.mxu0 0
      %2524 = vmatpush2.bf16.msra.mxu0 0
      %2525 = vmatprep.subr.bf16.mxu0 0
      %2526 = vmatpush2.bf16.msra.mxu0 0
      %2527 = vmatprep.subr.bf16.mxu0 0
      %2528 = vmatpush2.bf16.msra.mxu0 0
      %2529 = vmatprep.subr.bf16.mxu0 0
      %2530 = vmatpush2.bf16.msra.mxu0 0
      %2531 = vmatprep.subr.bf16.mxu0 0
      %2532 = vmatpush2.bf16.msra.mxu0 0
      %2533 = vmatprep.mubr.bf16.mxu0 0
      %2534 = vmatmul.mubr.bf16.gmra.mxu0 %v2445
      %v2535 = vpop.f32.mrf.mxu0
      %v2536 = vadd.f32 0.0, %v2535
      %v2537 = vpop.f32.mrf.mxu0
      %v2538 = vpop.f32.mrf.mxu0
      %v2539 = vadd.f32 0.0, %v2538
      %v2540 = vpop.f32.mrf.mxu0
      %2541 = vmatprep.mubr.bf16.mxu0 0
      %2542 = vmatmul.mubr.bf16.gmra.mxu0 %v2448
      %v2543 = vpop.f32.mrf.mxu0
      %v2544 = vadd.f32 0.0, %v2543
      %v2545 = vpop.f32.mrf.mxu0
      %v2546 = vpop.f32.mrf.mxu0
      %v2547 = vadd.f32 0.0, %v2546
      %v2548 = vpop.f32.mrf.mxu0
      %2549 = vmatprep.mubr.bf16.mxu0 0
      %2550 = vmatmul.mubr.bf16.gmra.mxu0 %v2451
      %v2551 = vpop.f32.mrf.mxu0
      %v2552 = vadd.f32 0.0, %v2551
      %v2553 = vpop.f32.mrf.mxu0
      %v2554 = vpop.f32.mrf.mxu0
      %v2555 = vadd.f32 0.0, %v2554
      %v2556 = vpop.f32.mrf.mxu0
      %2557 = vmatprep.mubr.bf16.mxu0 0
      %2558 = vmatmul.mubr.bf16.gmra.mxu0 %v2454
      %v2559 = vpop.f32.mrf.mxu0
      %v2560 = vadd.f32 0.0, %v2559
      %v2561 = vpop.f32.mrf.mxu0
      %v2562 = vpop.f32.mrf.mxu0
      %v2563 = vadd.f32 0.0, %v2562
      %v2564 = vpop.f32.mrf.mxu0
      %2565 = vmatprep.mubr.bf16.mxu0 0
      %2566 = vmatmul.mubr.bf16.gmra.mxu0 %v2457
      %v2567 = vpop.f32.mrf.mxu0
      %v2568 = vadd.f32 0.0, %v2567
      %v2569 = vpop.f32.mrf.mxu0
      %v2570 = vpop.f32.mrf.mxu0
      %v2571 = vadd.f32 0.0, %v2570
      %v2572 = vpop.f32.mrf.mxu0
      %2573 = vmatprep.mubr.bf16.mxu0 0
      %2574 = vmatmul.mubr.bf16.gmra.mxu0 %v2460
      %v2575 = vpop.f32.mrf.mxu0
      %v2576 = vadd.f32 0.0, %v2575
      %v2577 = vpop.f32.mrf.mxu0
      %v2578 = vpop.f32.mrf.mxu0
      %v2579 = vadd.f32 0.0, %v2578
      %v2580 = vpop.f32.mrf.mxu0
      %2581 = vmatprep.mubr.bf16.mxu0 0
      %2582 = vmatmul.mubr.bf16.gmra.mxu0 %v2463
      %v2583 = vpop.f32.mrf.mxu0
      %v2584 = vadd.f32 0.0, %v2583
      %v2585 = vpop.f32.mrf.mxu0
      %v2586 = vpop.f32.mrf.mxu0
      %v2587 = vadd.f32 0.0, %v2586
      %v2588 = vpop.f32.mrf.mxu0
      %2589 = vmatprep.mubr.bf16.mxu0 0
      %2590 = vmatmul.mubr.bf16.gmra.mxu0 %v2466
      %v2591 = vpop.f32.mrf.mxu0
      %v2592 = vadd.f32 0.0, %v2591
      %v2593 = vpop.f32.mrf.mxu0
      %v2594 = vpop.f32.mrf.mxu0
      %v2595 = vadd.f32 0.0, %v2594
      %v2596 = vpop.f32.mrf.mxu0
      %2597 = vmatprep.mubr.bf16.mxu0 0
      %2598 = vmatmul.mubr.bf16.gmra.mxu0 %v2469
      %v2599 = vpop.f32.mrf.mxu0
      %v2600 = vadd.f32 0.0, %v2599
      %v2601 = vpop.f32.mrf.mxu0
      %v2602 = vpop.f32.mrf.mxu0
      %v2603 = vadd.f32 0.0, %v2602
      %v2604 = vpop.f32.mrf.mxu0
      %2605 = vmatprep.mubr.bf16.mxu0 0
      %2606 = vmatmul.mubr.bf16.gmra.mxu0 %v2472
      %v2607 = vpop.f32.mrf.mxu0
      %v2608 = vadd.f32 0.0, %v2607
      %v2609 = vpop.f32.mrf.mxu0
      %v2610 = vpop.f32.mrf.mxu0
      %v2611 = vadd.f32 0.0, %v2610
      %v2612 = vpop.f32.mrf.mxu0
      %2613 = vmatprep.mubr.bf16.mxu0 0
      %2614 = vmatmul.mubr.bf16.gmra.mxu0 %v2475
      %v2615 = vpop.f32.mrf.mxu0
      %v2616 = vadd.f32 0.0, %v2615
      %v2617 = vpop.f32.mrf.mxu0
      %v2618 = vpop.f32.mrf.mxu0
      %v2619 = vadd.f32 0.0, %v2618
      %v2620 = vpop.f32.mrf.mxu0
      %2621 = vmatprep.mubr.bf16.mxu0 0
      %2622 = vmatmul.mubr.bf16.gmra.mxu0 %v2478
      %v2623 = vpop.f32.mrf.mxu0
      %v2624 = vadd.f32 0.0, %v2623
      %v2625 = vpop.f32.mrf.mxu0
      %v2626 = vpop.f32.mrf.mxu0
      %v2627 = vadd.f32 0.0, %v2626
      %v2628 = vpop.f32.mrf.mxu0
      %2629 = vmatprep.mubr.bf16.mxu0 0
      %2630 = vmatmul.mubr.bf16.gmra.mxu0 %v2481
      %v2631 = vpop.f32.mrf.mxu0
      %v2632 = vadd.f32 0.0, %v2631
      %v2633 = vpop.f32.mrf.mxu0
      %v2634 = vpop.f32.mrf.mxu0
      %v2635 = vadd.f32 0.0, %v2634
      %v2636 = vpop.f32.mrf.mxu0
      %2637 = vmatprep.mubr.bf16.mxu0 0
      %2638 = vmatmul.mubr.bf16.gmra.mxu0 %v2484
      %v2639 = vpop.f32.mrf.mxu0
      %v2640 = vadd.f32 0.0, %v2639
      %v2641 = vpop.f32.mrf.mxu0
      %v2642 = vpop.f32.mrf.mxu0
      %v2643 = vadd.f32 0.0, %v2642
      %v2644 = vpop.f32.mrf.mxu0
      %2645 = vmatprep.mubr.bf16.mxu0 0
      %2646 = vmatmul.mubr.bf16.gmra.mxu0 %v2487
      %v2647 = vpop.f32.mrf.mxu0
      %v2648 = vadd.f32 0.0, %v2647
      %v2649 = vpop.f32.mrf.mxu0
      %v2650 = vpop.f32.mrf.mxu0
      %v2651 = vadd.f32 0.0, %v2650
      %v2652 = vpop.f32.mrf.mxu0
      %2653 = vmatprep.mubr.bf16.mxu0 0
      %2654 = vmatmul.mubr.bf16.gmra.mxu0 %v2490
      %v2655 = vpop.f32.mrf.mxu0
      %v2656 = vadd.f32 0.0, %v2655
      %v2657 = vpop.f32.mrf.mxu0
      %v2658 = vpop.f32.mrf.mxu0
      %v2659 = vadd.f32 0.0, %v2658
      %v2660 = vpop.f32.mrf.mxu0
      %2661 = vmatprep.mubr.bf16.mxu0 0
      %2662 = vmatmul.mubr.bf16.gmra.mxu0 %v2493
      %v2663 = vpop.f32.mrf.mxu0
      %v2664 = vadd.f32 0.0, %v2663
      %v2665 = vpop.f32.mrf.mxu0
      %v2666 = vpop.f32.mrf.mxu0
      %v2667 = vadd.f32 0.0, %v2666
      %v2668 = vpop.f32.mrf.mxu0
      %2669 = vmatprep.mubr.bf16.mxu0 0
      %2670 = vmatmul.mubr.bf16.gmra.mxu0 %v2496
      %v2671 = vpop.f32.mrf.mxu0
      %v2672 = vadd.f32 0.0, %v2671
      %v2673 = vpop.f32.mrf.mxu0
      %v2674 = vpop.f32.mrf.mxu0
      %v2675 = vadd.f32 0.0, %v2674
      %v2676 = vpop.f32.mrf.mxu0
      %2677 = vdwg.mxu0
      %v2678 = vadd.f32 %v2320, %v2536
      %v2679 = vadd.f32 %v2321, %v2539
      %v2680 = vadd.f32 %v2322, %v2544
      %v2681 = vadd.f32 %v2323, %v2547
      %v2682 = vadd.f32 %v2324, %v2552
      %v2683 = vadd.f32 %v2325, %v2555
      %v2684 = vadd.f32 %v2326, %v2560
      %v2685 = vadd.f32 %v2327, %v2563
      %v2686 = vadd.f32 %v2328, %v2568
      %v2687 = vadd.f32 %v2329, %v2571
      %v2688 = vadd.f32 %v2330, %v2576
      %v2689 = vadd.f32 %v2331, %v2579
      %v2690 = vadd.f32 %v2332, %v2584
      %v2691 = vadd.f32 %v2333, %v2587
      %v2692 = vadd.f32 %v2334, %v2592
      %v2693 = vadd.f32 %v2335, %v2595
      %v2694 = vadd.f32 %v2336, %v2600
      %v2695 = vadd.f32 %v2337, %v2603
      %v2696 = vadd.f32 %v2338, %v2608
      %v2697 = vadd.f32 %v2339, %v2611
      %v2698 = vadd.f32 %v2340, %v2616
      %v2699 = vadd.f32 %v2341, %v2619
      %v2700 = vadd.f32 %v2342, %v2624
      %v2701 = vadd.f32 %v2343, %v2627
      %v2702 = vadd.f32 %v2344, %v2632
      %v2703 = vadd.f32 %v2345, %v2635
      %v2704 = vadd.f32 %v2346, %v2640
      %v2705 = vadd.f32 %v2347, %v2643
      %v2706 = vadd.f32 %v2348, %v2648
      %v2707 = vadd.f32 %v2349, %v2651
      %v2708 = vadd.f32 %v2350, %v2656
      %v2709 = vadd.f32 %v2351, %v2659
      %v2710 = vadd.f32 %v2352, %v2664
      %v2711 = vadd.f32 %v2353, %v2667
      %v2712 = vadd.f32 %v2354, %v2672
      %v2713 = vadd.f32 %v2355, %v2675
      %s2714 = scalar_lea.vmem %s1, 32
      %v2715 = vld [vmem:[%s2714] sm:$0xf]
      %vm2716 = vcmask 1044480
      %v2717 = vrot.slane %v292, 3
      %v2718 = vrot.slane %v293, 3
      %v2719 = vsel %vm2716, %v2717, %v2718
      %v2720 = vrot.slane %v294, 3
      %v2721 = vsel %vm2716, %v2718, %v2720
      %v2722 = vrot.slane %v295, 3
      %v2723 = vsel %vm2716, %v2720, %v2722
      %v2724 = vrot.slane %v296, 3
      %v2725 = vsel %vm2716, %v2722, %v2724
      %v2726 = vrot.slane %v297, 3
      %v2727 = vsel %vm2716, %v2724, %v2726
      %v2728 = vrot.slane %v298, 3
      %v2729 = vsel %vm2716, %v2726, %v2728
      %v2730 = vrot.slane %v299, 3
      %v2731 = vsel %vm2716, %v2728, %v2730
      %v2732 = vrot.slane %v300, 3
      %v2733 = vsel %vm2716, %v2730, %v2732
      %v2734 = vrot.slane %v301, 3
      %v2735 = vsel %vm2716, %v2732, %v2734
      %v2736 = vrot.slane %v302, 3
      %v2737 = vsel %vm2716, %v2734, %v2736
      %v2738 = vrot.slane %v303, 3
      %v2739 = vsel %vm2716, %v2736, %v2738
      %v2740 = vrot.slane %v304, 3
      %v2741 = vsel %vm2716, %v2738, %v2740
      %v2742 = vrot.slane %v305, 3
      %v2743 = vsel %vm2716, %v2740, %v2742
      %v2744 = vrot.slane %v306, 3
      %v2745 = vsel %vm2716, %v2742, %v2744
      %v2746 = vrot.slane %v307, 3
      %v2747 = vsel %vm2716, %v2744, %v2746
      %v2748 = vrot.slane %v1226, 3
      %v2749 = vsel %vm2716, %v2746, %v2748
      %v2750 = vrot.slane %v2128, 3
      %v2751 = vsel %vm2716, %v2748, %v2750
      %v2752 = vrot.slane %v2129, 3
      %v2753 = vsel %vm2716, %v2750, %v2752
      %v2755 = vsel %vm458, %v2719, 0
      %v2758 = vsel %vm458, %v2721, 0
      %v2761 = vsel %vm458, %v2723, 0
      %v2764 = vsel %vm458, %v2725, 0
      %v2767 = vsel %vm458, %v2727, 0
      %v2770 = vsel %vm458, %v2729, 0
      %v2773 = vsel %vm458, %v2731, 0
      %v2776 = vsel %vm458, %v2733, 0
      %v2779 = vsel %vm458, %v2735, 0
      %v2782 = vsel %vm458, %v2737, 0
      %v2785 = vsel %vm458, %v2739, 0
      %v2788 = vsel %vm458, %v2741, 0
      %v2791 = vsel %vm458, %v2743, 0
      %v2794 = vsel %vm458, %v2745, 0
      %v2797 = vsel %vm458, %v2747, 0
      %v2800 = vsel %vm458, %v2749, 0
      %v2803 = vsel %vm458, %v2751, 0
      %v2806 = vsel %vm458, %v2753, 0
      %v2809 = vsel %vm513, %v2715, 0
      %2811 = vmatprep.subr.bf16.mxu0 0
      %2812 = vmatpush1.bf16.msra.mxu0 0
      %2813 = vmatprep.subr.bf16.mxu0 0
      %2814 = vmatpush1.bf16.msra.mxu0 0
      %2815 = vmatprep.subr.bf16.mxu0 0
      %2816 = vmatpush1.bf16.msra.mxu0 0
      %2817 = vmatprep.subr.bf16.mxu0 0
      %2818 = vmatpush1.bf16.msra.mxu0 0
      %2819 = vmatprep.subr.bf16.mxu0 0
      %2820 = vmatpush1.bf16.msra.mxu0 0
      %2821 = vmatprep.subr.bf16.mxu0 0
      %2822 = vmatpush1.bf16.msra.mxu0 0
      %2823 = vmatprep.subr.bf16.mxu0 0
      %2824 = vmatpush1.bf16.msra.mxu0 0
      %2825 = vmatprep.subr.bf16.mxu0 0
      %2826 = vmatpush1.bf16.msra.mxu0 %v2809
      %2827 = vmatprep.subr.bf16.mxu0 0
      %2828 = vmatpush2.bf16.msra.mxu0 0
      %2829 = vmatprep.subr.bf16.mxu0 0
      %2830 = vmatpush2.bf16.msra.mxu0 0
      %2831 = vmatprep.subr.bf16.mxu0 0
      %2832 = vmatpush2.bf16.msra.mxu0 0
      %2833 = vmatprep.subr.bf16.mxu0 0
      %2834 = vmatpush2.bf16.msra.mxu0 0
      %2835 = vmatprep.subr.bf16.mxu0 0
      %2836 = vmatpush2.bf16.msra.mxu0 0
      %2837 = vmatprep.subr.bf16.mxu0 0
      %2838 = vmatpush2.bf16.msra.mxu0 0
      %2839 = vmatprep.subr.bf16.mxu0 0
      %2840 = vmatpush2.bf16.msra.mxu0 0
      %2841 = vmatprep.subr.bf16.mxu0 0
      %2842 = vmatpush2.bf16.msra.mxu0 0
      %2843 = vmatprep.mubr.bf16.mxu0 0
      %2844 = vmatmul.mubr.bf16.gmra.mxu0 %v2755
      %v2845 = vpop.f32.mrf.mxu0
      %v2846 = vadd.f32 0.0, %v2845
      %v2847 = vpop.f32.mrf.mxu0
      %v2848 = vpop.f32.mrf.mxu0
      %v2849 = vadd.f32 0.0, %v2848
      %v2850 = vpop.f32.mrf.mxu0
      %2851 = vmatprep.mubr.bf16.mxu0 0
      %2852 = vmatmul.mubr.bf16.gmra.mxu0 %v2758
      %v2853 = vpop.f32.mrf.mxu0
      %v2854 = vadd.f32 0.0, %v2853
      %v2855 = vpop.f32.mrf.mxu0
      %v2856 = vpop.f32.mrf.mxu0
      %v2857 = vadd.f32 0.0, %v2856
      %v2858 = vpop.f32.mrf.mxu0
      %2859 = vmatprep.mubr.bf16.mxu0 0
      %2860 = vmatmul.mubr.bf16.gmra.mxu0 %v2761
      %v2861 = vpop.f32.mrf.mxu0
      %v2862 = vadd.f32 0.0, %v2861
      %v2863 = vpop.f32.mrf.mxu0
      %v2864 = vpop.f32.mrf.mxu0
      %v2865 = vadd.f32 0.0, %v2864
      %v2866 = vpop.f32.mrf.mxu0
      %2867 = vmatprep.mubr.bf16.mxu0 0
      %2868 = vmatmul.mubr.bf16.gmra.mxu0 %v2764
      %v2869 = vpop.f32.mrf.mxu0
      %v2870 = vadd.f32 0.0, %v2869
      %v2871 = vpop.f32.mrf.mxu0
      %v2872 = vpop.f32.mrf.mxu0
      %v2873 = vadd.f32 0.0, %v2872
      %v2874 = vpop.f32.mrf.mxu0
      %2875 = vmatprep.mubr.bf16.mxu0 0
      %2876 = vmatmul.mubr.bf16.gmra.mxu0 %v2767
      %v2877 = vpop.f32.mrf.mxu0
      %v2878 = vadd.f32 0.0, %v2877
      %v2879 = vpop.f32.mrf.mxu0
      %v2880 = vpop.f32.mrf.mxu0
      %v2881 = vadd.f32 0.0, %v2880
      %v2882 = vpop.f32.mrf.mxu0
      %2883 = vmatprep.mubr.bf16.mxu0 0
      %2884 = vmatmul.mubr.bf16.gmra.mxu0 %v2770
      %v2885 = vpop.f32.mrf.mxu0
      %v2886 = vadd.f32 0.0, %v2885
      %v2887 = vpop.f32.mrf.mxu0
      %v2888 = vpop.f32.mrf.mxu0
      %v2889 = vadd.f32 0.0, %v2888
      %v2890 = vpop.f32.mrf.mxu0
      %2891 = vmatprep.mubr.bf16.mxu0 0
      %2892 = vmatmul.mubr.bf16.gmra.mxu0 %v2773
      %v2893 = vpop.f32.mrf.mxu0
      %v2894 = vadd.f32 0.0, %v2893
      %v2895 = vpop.f32.mrf.mxu0
      %v2896 = vpop.f32.mrf.mxu0
      %v2897 = vadd.f32 0.0, %v2896
      %v2898 = vpop.f32.mrf.mxu0
      %2899 = vmatprep.mubr.bf16.mxu0 0
      %2900 = vmatmul.mubr.bf16.gmra.mxu0 %v2776
      %v2901 = vpop.f32.mrf.mxu0
      %v2902 = vadd.f32 0.0, %v2901
      %v2903 = vpop.f32.mrf.mxu0
      %v2904 = vpop.f32.mrf.mxu0
      %v2905 = vadd.f32 0.0, %v2904
      %v2906 = vpop.f32.mrf.mxu0
      %2907 = vmatprep.mubr.bf16.mxu0 0
      %2908 = vmatmul.mubr.bf16.gmra.mxu0 %v2779
      %v2909 = vpop.f32.mrf.mxu0
      %v2910 = vadd.f32 0.0, %v2909
      %v2911 = vpop.f32.mrf.mxu0
      %v2912 = vpop.f32.mrf.mxu0
      %v2913 = vadd.f32 0.0, %v2912
      %v2914 = vpop.f32.mrf.mxu0
      %2915 = vmatprep.mubr.bf16.mxu0 0
      %2916 = vmatmul.mubr.bf16.gmra.mxu0 %v2782
      %v2917 = vpop.f32.mrf.mxu0
      %v2918 = vadd.f32 0.0, %v2917
      %v2919 = vpop.f32.mrf.mxu0
      %v2920 = vpop.f32.mrf.mxu0
      %v2921 = vadd.f32 0.0, %v2920
      %v2922 = vpop.f32.mrf.mxu0
      %2923 = vmatprep.mubr.bf16.mxu0 0
      %2924 = vmatmul.mubr.bf16.gmra.mxu0 %v2785
      %v2925 = vpop.f32.mrf.mxu0
      %v2926 = vadd.f32 0.0, %v2925
      %v2927 = vpop.f32.mrf.mxu0
      %v2928 = vpop.f32.mrf.mxu0
      %v2929 = vadd.f32 0.0, %v2928
      %v2930 = vpop.f32.mrf.mxu0
      %2931 = vmatprep.mubr.bf16.mxu0 0
      %2932 = vmatmul.mubr.bf16.gmra.mxu0 %v2788
      %v2933 = vpop.f32.mrf.mxu0
      %v2934 = vadd.f32 0.0, %v2933
      %v2935 = vpop.f32.mrf.mxu0
      %v2936 = vpop.f32.mrf.mxu0
      %v2937 = vadd.f32 0.0, %v2936
      %v2938 = vpop.f32.mrf.mxu0
      %2939 = vmatprep.mubr.bf16.mxu0 0
      %2940 = vmatmul.mubr.bf16.gmra.mxu0 %v2791
      %v2941 = vpop.f32.mrf.mxu0
      %v2942 = vadd.f32 0.0, %v2941
      %v2943 = vpop.f32.mrf.mxu0
      %v2944 = vpop.f32.mrf.mxu0
      %v2945 = vadd.f32 0.0, %v2944
      %v2946 = vpop.f32.mrf.mxu0
      %2947 = vmatprep.mubr.bf16.mxu0 0
      %2948 = vmatmul.mubr.bf16.gmra.mxu0 %v2794
      %v2949 = vpop.f32.mrf.mxu0
      %v2950 = vadd.f32 0.0, %v2949
      %v2951 = vpop.f32.mrf.mxu0
      %v2952 = vpop.f32.mrf.mxu0
      %v2953 = vadd.f32 0.0, %v2952
      %v2954 = vpop.f32.mrf.mxu0
      %2955 = vmatprep.mubr.bf16.mxu0 0
      %2956 = vmatmul.mubr.bf16.gmra.mxu0 %v2797
      %v2957 = vpop.f32.mrf.mxu0
      %v2958 = vadd.f32 0.0, %v2957
      %v2959 = vpop.f32.mrf.mxu0
      %v2960 = vpop.f32.mrf.mxu0
      %v2961 = vadd.f32 0.0, %v2960
      %v2962 = vpop.f32.mrf.mxu0
      %2963 = vmatprep.mubr.bf16.mxu0 0
      %2964 = vmatmul.mubr.bf16.gmra.mxu0 %v2800
      %v2965 = vpop.f32.mrf.mxu0
      %v2966 = vadd.f32 0.0, %v2965
      %v2967 = vpop.f32.mrf.mxu0
      %v2968 = vpop.f32.mrf.mxu0
      %v2969 = vadd.f32 0.0, %v2968
      %v2970 = vpop.f32.mrf.mxu0
      %2971 = vmatprep.mubr.bf16.mxu0 0
      %2972 = vmatmul.mubr.bf16.gmra.mxu0 %v2803
      %v2973 = vpop.f32.mrf.mxu0
      %v2974 = vadd.f32 0.0, %v2973
      %v2975 = vpop.f32.mrf.mxu0
      %v2976 = vpop.f32.mrf.mxu0
      %v2977 = vadd.f32 0.0, %v2976
      %v2978 = vpop.f32.mrf.mxu0
      %2979 = vmatprep.mubr.bf16.mxu0 0
      %2980 = vmatmul.mubr.bf16.gmra.mxu0 %v2806
      %v2981 = vpop.f32.mrf.mxu0
      %v2982 = vadd.f32 0.0, %v2981
      %v2983 = vpop.f32.mrf.mxu0
      %v2984 = vpop.f32.mrf.mxu0
      %v2985 = vadd.f32 0.0, %v2984
      %v2986 = vpop.f32.mrf.mxu0
      %2987 = vdwg.mxu0
      %v2988 = vadd.f32 %v2678, %v2846
      %v2989 = vadd.f32 %v2679, %v2849
      %v2990 = vadd.f32 %v2680, %v2854
      %v2991 = vadd.f32 %v2681, %v2857
      %v2992 = vadd.f32 %v2682, %v2862
      %v2993 = vadd.f32 %v2683, %v2865
      %v2994 = vadd.f32 %v2684, %v2870
      %v2995 = vadd.f32 %v2685, %v2873
      %v2996 = vadd.f32 %v2686, %v2878
      %v2997 = vadd.f32 %v2687, %v2881
      %v2998 = vadd.f32 %v2688, %v2886
      %v2999 = vadd.f32 %v2689, %v2889
      %v3000 = vadd.f32 %v2690, %v2894
      %v3001 = vadd.f32 %v2691, %v2897
      %v3002 = vadd.f32 %v2692, %v2902
      %v3003 = vadd.f32 %v2693, %v2905
      %v3004 = vadd.f32 %v2694, %v2910
      %v3005 = vadd.f32 %v2695, %v2913
      %v3006 = vadd.f32 %v2696, %v2918
      %v3007 = vadd.f32 %v2697, %v2921
      %v3008 = vadd.f32 %v2698, %v2926
      %v3009 = vadd.f32 %v2699, %v2929
      %v3010 = vadd.f32 %v2700, %v2934
      %v3011 = vadd.f32 %v2701, %v2937
      %v3012 = vadd.f32 %v2702, %v2942
      %v3013 = vadd.f32 %v2703, %v2945
      %v3014 = vadd.f32 %v2704, %v2950
      %v3015 = vadd.f32 %v2705, %v2953
      %v3016 = vadd.f32 %v2706, %v2958
      %v3017 = vadd.f32 %v2707, %v2961
      %v3018 = vadd.f32 %v2708, %v2966
      %v3019 = vadd.f32 %v2709, %v2969
      %v3020 = vadd.f32 %v2710, %v2974
      %v3021 = vadd.f32 %v2711, %v2977
      %v3022 = vadd.f32 %v2712, %v2982
      %v3023 = vadd.f32 %v2713, %v2985
      %v3024 = vld [vmem:[%s2] sm:$0x1]
      %v3026 = vlaneseq
      %v3027 = vshrl.u32 %v3026, 7
      %v3028 = vsub.s32 0, %v3027
      %v3029 = vrot.slane %v3024, %v3028
      %v3031 = vadd.f32 %v2988, %v3029
      %v3032 = vadd.f32 %v2989, %v3029
      %v3033 = vadd.f32 %v2990, %v3029
      %v3034 = vadd.f32 %v2991, %v3029
      %v3035 = vadd.f32 %v2992, %v3029
      %v3036 = vadd.f32 %v2993, %v3029
      %v3037 = vadd.f32 %v2994, %v3029
      %v3038 = vadd.f32 %v2995, %v3029
      %v3039 = vadd.f32 %v2996, %v3029
      %v3040 = vadd.f32 %v2997, %v3029
      %v3041 = vadd.f32 %v2998, %v3029
      %v3042 = vadd.f32 %v2999, %v3029
      %v3043 = vadd.f32 %v3000, %v3029
      %v3044 = vadd.f32 %v3001, %v3029
      %v3045 = vadd.f32 %v3002, %v3029
      %v3046 = vadd.f32 %v3003, %v3029
      %v3047 = vadd.f32 %v3004, %v3029
      %v3048 = vadd.f32 %v3005, %v3029
      %v3049 = vadd.f32 %v3006, %v3029
      %v3050 = vadd.f32 %v3007, %v3029
      %v3051 = vadd.f32 %v3008, %v3029
      %v3052 = vadd.f32 %v3009, %v3029
      %v3053 = vadd.f32 %v3010, %v3029
      %v3054 = vadd.f32 %v3011, %v3029
      %v3055 = vadd.f32 %v3012, %v3029
      %v3056 = vadd.f32 %v3013, %v3029
      %v3057 = vadd.f32 %v3014, %v3029
      %v3058 = vadd.f32 %v3015, %v3029
      %v3059 = vadd.f32 %v3016, %v3029
      %v3060 = vadd.f32 %v3017, %v3029
      %v3061 = vadd.f32 %v3018, %v3029
      %v3062 = vadd.f32 %v3019, %v3029
      %v3063 = vadd.f32 %v3020, %v3029
      %v3064 = vadd.f32 %v3021, %v3029
      %v3065 = vadd.f32 %v3022, %v3029
      %v3066 = vadd.f32 %v3023, %v3029
      %v3067 = vmax.f32 %v3031, 0.0
      %v3068 = vmax.f32 %v3032, 0.0
      %v3069 = vmax.f32 %v3033, 0.0
      %v3070 = vmax.f32 %v3034, 0.0
      %v3071 = vmax.f32 %v3035, 0.0
      %v3072 = vmax.f32 %v3036, 0.0
      %v3073 = vmax.f32 %v3037, 0.0
      %v3074 = vmax.f32 %v3038, 0.0
      %v3075 = vmax.f32 %v3039, 0.0
      %v3076 = vmax.f32 %v3040, 0.0
      %v3077 = vmax.f32 %v3041, 0.0
      %v3078 = vmax.f32 %v3042, 0.0
      %v3079 = vmax.f32 %v3043, 0.0
      %v3080 = vmax.f32 %v3044, 0.0
      %v3081 = vmax.f32 %v3045, 0.0
      %v3082 = vmax.f32 %v3046, 0.0
      %v3083 = vmax.f32 %v3047, 0.0
      %v3084 = vmax.f32 %v3048, 0.0
      %v3085 = vmax.f32 %v3049, 0.0
      %v3086 = vmax.f32 %v3050, 0.0
      %v3087 = vmax.f32 %v3051, 0.0
      %v3088 = vmax.f32 %v3052, 0.0
      %v3089 = vmax.f32 %v3053, 0.0
      %v3090 = vmax.f32 %v3054, 0.0
      %v3091 = vmax.f32 %v3055, 0.0
      %v3092 = vmax.f32 %v3056, 0.0
      %v3093 = vmax.f32 %v3057, 0.0
      %v3094 = vmax.f32 %v3058, 0.0
      %v3095 = vmax.f32 %v3059, 0.0
      %v3096 = vmax.f32 %v3060, 0.0
      %v3097 = vmax.f32 %v3061, 0.0
      %v3098 = vmax.f32 %v3062, 0.0
      %v3099 = vmax.f32 %v3063, 0.0
      %v3100 = vmax.f32 %v3064, 0.0
      %v3101 = vmax.f32 %v3065, 0.0
      %v3102 = vmax.f32 %v3066, 0.0
      %v3103 = vpack.c.bf16 %v3068, %v3067
      %v3104 = vpack.c.bf16 %v3070, %v3069
      %v3105 = vpack.c.bf16 %v3072, %v3071
      %v3106 = vpack.c.bf16 %v3074, %v3073
      %v3107 = vpack.c.bf16 %v3076, %v3075
      %v3108 = vpack.c.bf16 %v3078, %v3077
      %v3109 = vpack.c.bf16 %v3080, %v3079
      %v3110 = vpack.c.bf16 %v3082, %v3081
      %v3111 = vpack.c.bf16 %v3084, %v3083
      %v3112 = vpack.c.bf16 %v3086, %v3085
      %v3113 = vpack.c.bf16 %v3088, %v3087
      %v3114 = vpack.c.bf16 %v3090, %v3089
      %v3115 = vpack.c.bf16 %v3092, %v3091
      %v3116 = vpack.c.bf16 %v3094, %v3093
      %v3117 = vpack.c.bf16 %v3096, %v3095
      %v3118 = vpack.c.bf16 %v3098, %v3097
      %v3119 = vpack.c.bf16 %v3100, %v3099
      %v3120 = vpack.c.bf16 %v3102, %v3101
      %v3139 = vunpack.c.l.b16 %v3103
      %v3140 = vunpack.c.h.b16 %v3103
      %v3141 = vunpack.c.l.b16 %v3104
      %v3142 = vunpack.c.h.b16 %v3104
      %v3143 = vunpack.c.l.b16 %v3105
      %v3144 = vunpack.c.h.b16 %v3105
      %v3145 = vunpack.c.l.b16 %v3106
      %v3146 = vunpack.c.h.b16 %v3106
      %v3147 = vunpack.c.l.b16 %v3107
      %v3148 = vunpack.c.h.b16 %v3107
      %v3149 = vunpack.c.l.b16 %v3108
      %v3150 = vunpack.c.h.b16 %v3108
      %v3151 = vunpack.c.l.b16 %v3109
      %v3152 = vunpack.c.h.b16 %v3109
      %v3153 = vunpack.c.l.b16 %v3110
      %v3154 = vunpack.c.h.b16 %v3110
      %v3155 = vunpack.c.l.b16 %v3111
      %v3156 = vunpack.c.h.b16 %v3111
      %v3157 = vunpack.c.l.b16 %v3112
      %v3158 = vunpack.c.h.b16 %v3112
      %v3159 = vunpack.c.l.b16 %v3113
      %v3160 = vunpack.c.h.b16 %v3113
      %v3161 = vunpack.c.l.b16 %v3114
      %v3162 = vunpack.c.h.b16 %v3114
      %v3163 = vunpack.c.l.b16 %v3115
      %v3164 = vunpack.c.h.b16 %v3115
      %v3165 = vunpack.c.l.b16 %v3116
      %v3166 = vunpack.c.h.b16 %v3116
      %v3167 = vunpack.c.l.b16 %v3117
      %v3168 = vunpack.c.h.b16 %v3117
      %v3169 = vunpack.c.l.b16 %v3118
      %v3170 = vunpack.c.h.b16 %v3118
      %v3171 = vunpack.c.l.b16 %v3119
      %v3172 = vunpack.c.h.b16 %v3119
      %v3173 = vunpack.c.l.b16 %v3120
      %v3174 = vunpack.c.h.b16 %v3120
      %v3175 = vpack.c.b16 %v3139, %v3139
      %v3176 = vpack.c.b16 %v3140, %v3140
      %v3177 = vpack.c.b16 %v3141, %v3141
      %v3178 = vpack.c.b16 %v3142, %v3142
      %v3179 = vpack.c.b16 %v3143, %v3143
      %v3180 = vpack.c.b16 %v3144, %v3144
      %v3181 = vpack.c.b16 %v3145, %v3145
      %v3182 = vpack.c.b16 %v3146, %v3146
      %v3183 = vpack.c.b16 %v3147, %v3147
      %v3184 = vpack.c.b16 %v3148, %v3148
      %v3185 = vpack.c.b16 %v3149, %v3149
      %v3186 = vpack.c.b16 %v3150, %v3150
      %v3187 = vpack.c.b16 %v3151, %v3151
      %v3188 = vpack.c.b16 %v3152, %v3152
      %v3189 = vpack.c.b16 %v3153, %v3153
      %v3190 = vpack.c.b16 %v3154, %v3154
      %v3191 = vpack.c.b16 %v3155, %v3155
      %v3192 = vpack.c.b16 %v3156, %v3156
      %v3193 = vpack.c.b16 %v3157, %v3157
      %v3194 = vpack.c.b16 %v3158, %v3158
      %v3195 = vpack.c.b16 %v3159, %v3159
      %v3196 = vpack.c.b16 %v3160, %v3160
      %v3197 = vpack.c.b16 %v3161, %v3161
      %v3198 = vpack.c.b16 %v3162, %v3162
      %v3199 = vpack.c.b16 %v3163, %v3163
      %v3200 = vpack.c.b16 %v3164, %v3164
      %v3201 = vpack.c.b16 %v3165, %v3165
      %v3202 = vpack.c.b16 %v3166, %v3166
      %v3203 = vpack.c.b16 %v3167, %v3167
      %v3204 = vpack.c.b16 %v3168, %v3168
      %v3205 = vpack.c.b16 %v3169, %v3169
      %v3206 = vpack.c.b16 %v3170, %v3170
      %v3207 = vpack.c.b16 %v3171, %v3171
      %v3208 = vpack.c.b16 %v3172, %v3172
      %v3209 = vpack.c.b16 %v3173, %v3173
      %v3210 = vpack.c.b16 %v3174, %v3174
      %vm3247 = vcmask 60416
      %3248 = vst.msk [vmem:[%s170] sm:$0xf] %vm3247, %v3175
      %3249 = vst.msk [vmem:[%s170 + $0x4] sm:$0xf] %vm3247, %v3176
      %3250 = vst.msk [vmem:[%s170 + $0x8] sm:$0xf] %vm3247, %v3177
      %3251 = vst.msk [vmem:[%s170 + $0xc] sm:$0xf] %vm3247, %v3178
      %3252 = vst.msk [vmem:[%s170 + $0x10] sm:$0xf] %vm3247, %v3179
      %3253 = vst.msk [vmem:[%s170 + $0x14] sm:$0xf] %vm3247, %v3180
      %3254 = vst.msk [vmem:[%s170 + $0x18] sm:$0xf] %vm3247, %v3181
      %3255 = vst.msk [vmem:[%s170 + $0x1c] sm:$0xf] %vm3247, %v3182
      %3256 = vst.msk [vmem:[%s170 + $0x20] sm:$0xf] %vm3247, %v3183
      %3257 = vst.msk [vmem:[%s170 + $0x24] sm:$0xf] %vm3247, %v3184
      %3258 = vst.msk [vmem:[%s170 + $0x28] sm:$0xf] %vm3247, %v3185
      %3259 = vst.msk [vmem:[%s170 + $0x2c] sm:$0xf] %vm3247, %v3186
      %3260 = vst.msk [vmem:[%s170 + $0x30] sm:$0xf] %vm3247, %v3187
      %3261 = vst.msk [vmem:[%s170 + $0x34] sm:$0xf] %vm3247, %v3188
      %3262 = vst.msk [vmem:[%s170 + $0x38] sm:$0xf] %vm3247, %v3189
      %3263 = vst.msk [vmem:[%s170 + $0x3c] sm:$0xf] %vm3247, %v3190
      %3264 = vst.msk [vmem:[%s170 + $0x40] sm:$0xf] %vm3247, %v3191
      %3265 = vst.msk [vmem:[%s170 + $0x44] sm:$0xf] %vm3247, %v3192
      %3266 = vst.msk [vmem:[%s170 + $0x48] sm:$0xf] %vm3247, %v3193
      %3267 = vst.msk [vmem:[%s170 + $0x4c] sm:$0xf] %vm3247, %v3194
      %3268 = vst.msk [vmem:[%s170 + $0x50] sm:$0xf] %vm3247, %v3195
      %3269 = vst.msk [vmem:[%s170 + $0x54] sm:$0xf] %vm3247, %v3196
      %3270 = vst.msk [vmem:[%s170 + $0x58] sm:$0xf] %vm3247, %v3197
      %3271 = vst.msk [vmem:[%s170 + $0x5c] sm:$0xf] %vm3247, %v3198
      %3272 = vst.msk [vmem:[%s170 + $0x60] sm:$0xf] %vm3247, %v3199
      %3273 = vst.msk [vmem:[%s170 + $0x64] sm:$0xf] %vm3247, %v3200
      %3274 = vst.msk [vmem:[%s170 + $0x68] sm:$0xf] %vm3247, %v3201
      %3275 = vst.msk [vmem:[%s170 + $0x6c] sm:$0xf] %vm3247, %v3202
      %3276 = vst.msk [vmem:[%s170 + $0x70] sm:$0xf] %vm3247, %v3203
      %3277 = vst.msk [vmem:[%s170 + $0x74] sm:$0xf] %vm3247, %v3204
      %3278 = vst.msk [vmem:[%s170 + $0x78] sm:$0xf] %vm3247, %v3205
      %3279 = vst.msk [vmem:[%s170 + $0x7c] sm:$0xf] %vm3247, %v3206
      %3280 = vst.msk [vmem:[%s170 + $0x80] sm:$0xf] %vm3247, %v3207
      %3281 = vst.msk [vmem:[%s170 + $0x84] sm:$0xf] %vm3247, %v3208
      %3282 = vst.msk [vmem:[%s170 + $0x88] sm:$0xf] %vm3247, %v3209
      %3283 = vst.msk [vmem:[%s170 + $0x8c] sm:$0xf] %vm3247, %v3210
      %p3284 = scmp.lt.s32.totalorder %s14, 1
      %s3285 = scalar_select %p3284, %s14, 1
      %s3286 = smul.addr %s3285, 36
      %s3287 = smul.addr %s3286, 4
      %s3288 = scalar_lea.vmem %s3, %s3287
      // Predicated region
      $region33: #{tpu_custom_call.1} parent=31 // pred_check
        %p3289 = pneg %p100
      $region34: #{tpu_custom_call.1} parent=31 // pred_check_branch
        %3291 = sbr.rel (%p3289) target = $region36
      $region35: #{tpu_custom_call.1} parent=31 // pred_region
        _
      $region36: #{tpu_custom_call.1} parent=31 // pred_fallthru
        _
    $region32: #{tpu_custom_call.1} parent=5 // pred_fallthru
      _
    %p3292 = scmp.le.s32.totalorder 2, %s9
    // Predicated region
    $region37: #{tpu_custom_call.1} parent=5 // pred_check
      %p3293 = pneg %p3292
    $region38: #{tpu_custom_call.1} parent=5 // pred_check_branch
      %3295 = sbr.rel (%p3293) target = $region40
    $region39: #{tpu_custom_call.1} parent=5 // pred_region
      %s3296 = ssub.s32 %s9, 2
      // Predicated region
      $region41: #{tpu_custom_call.1} parent=39 // pred_check
        %p3297 = pneg %p106
      $region42: #{tpu_custom_call.1} parent=39 // pred_check_branch
        %3299 = sbr.rel (%p3297) target = $region44
      $region43: #{tpu_custom_call.1} parent=39 // pred_region
        %p3300 = scmp.lt.s32.totalorder %s15, 1
        %s3301 = scalar_select %p3300, %s15, 1
        %s3302 = smul.addr %s3301, 36
        %s3303 = smul.addr %s3302, 4
        %s3304 = scalar_lea.vmem %s3, %s3303
      $region44: #{tpu_custom_call.1} parent=39 // pred_fallthru
        _
    $region40: #{tpu_custom_call.1} parent=5 // pred_fallthru
      _
  $region6: #{tpu_custom_call.1} parent=0 // loop_footer
    %s13 = sadd.s32 1, %s9
  $region7: #{tpu_custom_call.1} parent=0 // loop_footer_branch
    %8 = sbr.rel target = $region3
  $region8: #{tpu_custom_call.1} parent=0 // loop_exit
    _

</llo_original>
